<compile_context>
chip_gen: v7x
topology: tpu7x:2x2x1
jax: 0.10.0
libtpu: 0.0.40
codegen_flags: <defaults>
</compile_context>

<pallas_src>
import functools
import random
from typing import List, Tuple

import numpy as np

import jax
import jax.numpy as jnp
from jax.experimental import pallas as pl
from jax.experimental.pallas import tpu as pltpu


# --------------------------------------------------------------------------
# Pallas kernel: resize TC planes per grid step with bf16 MXU matmuls.
# --------------------------------------------------------------------------
def _resize_planes_kernel(x_ref, wy_ref, wxt_ref, o_ref, *, tc, h_first, fuse,
                          w_tmp_bf16, direct_bf16):
    # x_ref  : (TC, H_in, W_in)   image planes (input dtype)
    # wy_ref : (H_out, H_in)      bf16 row-interp matrix (resident)
    # wxt_ref: (W_in, W_out)      bf16 col-interp matrix, pre-transposed on host
    # o_ref  : (TC, H_out, W_out)
    h_in, w_in = x_ref.shape[1], x_ref.shape[2]
    h_out, w_out = o_ref.shape[1], o_ref.shape[2]
    wy = wy_ref[...]
    wxt = wxt_ref[...]

    def bf(a):
        return a if a.dtype == jnp.bfloat16 else a.astype(jnp.bfloat16)

    def mm(a, b, out_dtype):
        # MXU matmul, f32 accumulation, result emitted in out_dtype.
        if direct_bf16 or out_dtype == jnp.float32:
            return jnp.dot(a, b, preferred_element_type=out_dtype)
        return jnp.dot(a, b, preferred_element_type=jnp.float32).astype(out_dtype)

    if h_first:
        if fuse and tc > 1:
            # Per-plane height pass (bf16 results) stacked into one tall operand,
            # then ONE big (TC*H_out, W_in) @ (W_in, W_out) width matmul.
            rows = [mm(wy, bf(x_ref[t]), jnp.bfloat16) for t in range(tc)]
            tmp = jnp.concatenate(rows, axis=0)                       # (TC*H_out, W_in)
            out = mm(tmp, wxt, jnp.float32)                           # (TC*H_out, W_out)
            o_ref[...] = out.reshape(tc, h_out, w_out).astype(o_ref.dtype)
        else:
            for t in range(tc):
                tmp = mm(wy, bf(x_ref[t]), jnp.bfloat16)              # (H_out, W_in)
                o_ref[t] = mm(tmp, wxt, jnp.float32).astype(o_ref.dtype)
    else:
        if fuse and tc > 1:
            # Width pass over all TC planes as ONE big matmul.  The reshape is
            # done while x is still in its input dtype (layout-free for
            # H_in % 8 == 0 at f32), then cast to bf16.
            tmp_dt = jnp.bfloat16 if w_tmp_bf16 else jnp.float32
            x2d = bf(x_ref[...].reshape(tc * h_in, w_in))
            tmp = mm(x2d, wxt, tmp_dt).reshape(tc, h_in, w_out)       # (TC, H_in, W_out)
            for t in range(tc):
                o_ref[t] = mm(wy, bf(tmp[t]), jnp.float32).astype(o_ref.dtype)
        else:
            for t in range(tc):
                tmp = mm(bf(x_ref[t]), wxt, jnp.bfloat16)             # (H_in, W_out)
                o_ref[t] = mm(wy, tmp, jnp.float32).astype(o_ref.dtype)


# --------------------------------------------------------------------------
# Host glue
# --------------------------------------------------------------------------
@functools.lru_cache(maxsize=None)
def _bilinear_matrix_np(out_size: int, in_size: int) -> np.ndarray:
    """1-D bilinear matrix matching F.interpolate(mode='bilinear', align_corners=False)."""
    scale = in_size / out_size
    dst = np.arange(out_size, dtype=np.float64)
    src = np.clip((dst + 0.5) * scale - 0.5, 0.0, in_size - 1)
    lo = np.floor(src).astype(np.int64)
    hi = np.minimum(lo + 1, in_size - 1)
    w_hi = src - lo
    w_lo = 1.0 - w_hi
    m = np.zeros((out_size, in_size), np.float64)
    rows = np.arange(out_size)
    np.add.at(m, (rows, lo), w_lo)
    np.add.at(m, (rows, hi), w_hi)
    return m.astype(np.float32)


@functools.lru_cache(maxsize=None)
def _interp_weights_bf16(h_out, h_in, w_out, w_in):
    """Device-resident bf16 interpolation matrices (Wy, Wx^T), built once per size.
    NOTE: bf16 weights+pixels can deviate from PyTorch's f32 bilinear by up to
    ~1 intensity level on 0-255 data; acceptable for training-time augmentation."""
    wy = jax.device_put(_bilinear_matrix_np(h_out, h_in)).astype(jnp.bfloat16)
    wxt = jax.device_put(
        np.ascontiguousarray(_bilinear_matrix_np(w_out, w_in).T)).astype(jnp.bfloat16)
    return wy, wxt


def _sublane_multiple(dtype) -> int:
    """Rows per sublane tile for this dtype (8 for f32, 16 for bf16, 32 for int8)."""
    return 8 * max(1, 4 // jnp.dtype(dtype).itemsize)


def _choose_h_first(h_in: int, w_in: int, h_out: int, w_out: int) -> bool:
    """Pick which separable pass runs first (smaller intermediate / fewer FLOPs)."""
    cost_w_first = h_in * w_out * (w_in + h_out)
    cost_h_first = h_out * w_in * (h_in + w_out)
    return cost_h_first < cost_w_first


def _plane_batch_and_vmem(n_planes, h_in, w_in, h_out, w_out, itemsize):
    """Choose planes-per-grid-step (TC) against this generation's VMEM."""
    try:
        vmem_cap = int(pltpu.get_tpu_info().vmem_capacity_bytes)
    except Exception:  # noqa: BLE001
        vmem_cap = 64 * 1024 * 1024          # v7x per-TC physical; safe lower bound
    # Single headroom factor (review: 0.85*0.80 threw away ~1/3 of VMEM).
    vmem_limit = int(min(vmem_cap, 128 * 1024 * 1024) * 0.9)

    weight_bytes = 2 * (h_out * h_in + w_in * w_out)       # bf16, single-buffered

    def fits(tc):
        x_bytes = 2 * tc * h_in * w_in * itemsize          # double-buffered input block
        xb_bytes = tc * h_in * w_in * 2                    # in-kernel bf16 copy of x
        o_bytes = 2 * tc * h_out * w_out * itemsize        # double-buffered output block
        tmp_bytes = tc * max(h_in * w_out, h_out * w_in) * 2   # bf16 intermediate
        return weight_bytes + x_bytes + xb_bytes + o_bytes + tmp_bytes <= vmem_limit

    options = []
    for tc in range(1, n_planes + 1):
        if fits(tc):
            options.append((-(-n_planes // tc), tc))       # (grid_len, tc)
    if not options:
        # TODO(synk): second grid axis tiling H_out (x resident, Wy row-blocked) for
        # single planes that exceed VMEM (very large frames on v7x's 64 MiB).
        return 1, vmem_limit

    def rank(opt):
        g, tc = opt
        # even grid (v7x megacore balance) > any multi-step grid (pipelining)
        # > fewest grid steps > least tail padding.
        cat = 0 if (g >= 2 and g % 2 == 0) else (1 if g >= 2 else 2)
        return (cat, g, g * tc - n_planes)

    _, tc = min(options, key=rank)
    return tc, vmem_limit


@functools.lru_cache(maxsize=None)
def _make_resize_call(n_planes, tc, h_in, w_in, h_out, w_out, dtype,
                      h_first, fuse, w_tmp_bf16, direct_bf16, single_buffer,
                      vmem_limit):
    kernel = functools.partial(_resize_planes_kernel, tc=tc, h_first=h_first,
                               fuse=fuse, w_tmp_bf16=w_tmp_bf16,
                               direct_bf16=direct_bf16)
    wkw = dict(pipeline_mode=pl.Buffered(1)) if single_buffer else {}
    call = pl.pallas_call(
        kernel,
        out_shape=jax.ShapeDtypeStruct((n_planes, h_out, w_out), dtype),
        grid_spec=pltpu.PrefetchScalarGridSpec(
            num_scalar_prefetch=0,
            grid=(pl.cdiv(n_planes, tc),),     # partial last block handled by Pallas
            in_specs=[
                pl.BlockSpec((tc, h_in, w_in), lambda i: (i, 0, 0)),
                pl.BlockSpec((h_out, h_in), lambda i: (0, 0), **wkw),
                pl.BlockSpec((w_in, w_out), lambda i: (0, 0), **wkw),
            ],
            out_specs=pl.BlockSpec((tc, h_out, w_out), lambda i: (i, 0, 0)),
        ),
        compiler_params=pltpu.CompilerParams(
            dimension_semantics=("parallel",),
            vmem_limit_bytes=int(vmem_limit),
        ),
    )
    return jax.jit(call)


_CONFIG_CACHE = {}   # (n_planes, H_in, W_in, H_out, W_out, dtype) -> (tc, direct, single)


def bilinear_resize_pallas(x: jax.Array, out_hw: Tuple[int, int]) -> jax.Array:
    """x: (B, C, H, W) float -> (B, C, H_out, W_out), bilinear, align_corners=False.
    Output dtype matches the input dtype, so bf16 inputs get bf16 I/O (halves the
    HBM traffic that dominates on v6e)."""
    B, C, H_in, W_in = x.shape
    H_out, W_out = int(out_hw[0]), int(out_hw[1])
    if (H_out, W_out) == (H_in, W_in):
        return x

    n_planes = B * C
    wy, wxt = _interp_weights_bf16(H_out, H_in, W_out, W_in)

    h_first = _choose_h_first(H_in, W_in, H_out, W_out)
    if h_first:
        # Fused output reshape (TC*H_out, W_out) -> (TC, H_out, W_out) must be layout-free.
        fuse = (H_out % max(16, _sublane_multiple(x.dtype)) == 0)
        w_tmp_bf16 = True   # unused in this branch
    else:
        # x reshape done while still in input dtype: only H_in % 8 needed for f32.
        fuse = (H_in % max(8, _sublane_multiple(x.dtype)) == 0)
        w_tmp_bf16 = (H_in % 16 == 0)   # bf16 tmp reshape needs 16-row alignment

    tc0, vmem_limit = _plane_batch_and_vmem(
        n_planes, H_in, W_in, H_out, W_out, x.dtype.itemsize)

    x_flat = x.reshape(n_planes, H_in, W_in)

    sig = (n_planes, H_in, W_in, H_out, W_out, str(x.dtype))
    cached = _CONFIG_CACHE.get(sig)
    if cached is not None:
        tc, direct_bf16, single_buf = cached
        call = _make_resize_call(n_planes, tc, H_in, W_in, H_out, W_out, x.dtype,
                                 h_first, fuse, w_tmp_bf16, direct_bf16,
                                 single_buf, vmem_limit)
        return call(x_flat, wy, wxt).reshape(B, C, H_out, W_out)

    last_err, out_flat, tc = None, None, tc0
    while out_flat is None and tc >= 1:
        for direct_bf16 in (True, False):      # bf16 matmul result, else f32 + cast
            for single_buf in (True, False):   # Buffered(1) weight residency
                try:
                    call = _make_resize_call(n_planes, tc, H_in, W_in, H_out, W_out,
                                             x.dtype, h_first, fuse, w_tmp_bf16,
                                             direct_bf16, single_buf, vmem_limit)
                    out_flat = call(x_flat, wy, wxt)
                    _CONFIG_CACHE[sig] = (tc, direct_bf16, single_buf)
                    break
                except Exception as e:  # noqa: BLE001 - retry with safer config
                    last_err = e
            if out_flat is not None:
                break
        if out_flat is None:
            tc //= 2                            # shrink block under VMEM pressure
    if out_flat is None:
        raise last_err

    return out_flat.reshape(B, C, H_out, W_out)


def scale_bboxes(bboxes: jax.Array, scale_x: float, scale_y: float) -> jax.Array:
    """(.., 4) xyxy boxes scaled by [sx, sy, sx, sy].

    Plain XLA on purpose: lane width 4 + one launch per data_sample makes a
    Pallas kernel strictly slower than a fused jnp multiply."""
    s = jnp.asarray([scale_x, scale_y, scale_x, scale_y], dtype=bboxes.dtype)
    return bboxes * s


# --------------------------------------------------------------------------
# Module port
# --------------------------------------------------------------------------
class BatchSyncRandomResizePallas:
    """JAX/Pallas port of mmdet BatchSyncRandomResize (single-rank)."""

    def __init__(self, random_size_range: Tuple[int, int], interval: int = 10,
                 size_divisor: int = 32) -> None:
        # TODO(synk): get_dist_info()/barrier()/broadcast() (multi-rank size sync)
        # have no Pallas equivalent here; single-rank behaviour only.
        self.rank, self.world_size = 0, 1
        self._input_size = None
        self._random_size_range = (round(random_size_range[0] / size_divisor),
                                   round(random_size_range[1] / size_divisor))
        self._interval = interval
        self._size_divisor = size_divisor

    def forward(self, inputs: jax.Array, data_samples: List[dict],
                cur_iter: int) -> Tuple[jax.Array, List[dict]]:
        h, w = inputs.shape[-2:]
        if self._input_size is None:
            self._input_size = (h, w)
        scale_y = self._input_size[0] / h
        scale_x = self._input_size[1] / w
        if scale_x != 1 or scale_y != 1:
            inputs = bilinear_resize_pallas(inputs, self._input_size)
            for data_sample in data_samples:
                img_shape = (int(data_sample['img_shape'][0] * scale_y),
                             int(data_sample['img_shape'][1] * scale_x))
                pad_shape = (int(data_sample['pad_shape'][0] * scale_y),
                             int(data_sample['pad_shape'][1] * scale_x))
                data_sample['img_shape'] = img_shape
                data_sample['pad_shape'] = pad_shape
                data_sample['batch_input_shape'] = self._input_size
                data_sample['bboxes'] = scale_bboxes(
                    data_sample['bboxes'], scale_x, scale_y)
                if 'ignored_bboxes' in data_sample:
                    data_sample['ignored_bboxes'] = scale_bboxes(
                        data_sample['ignored_bboxes'], scale_x, scale_y)
        # MessageHub iteration counter passed explicitly as `cur_iter`.
        if (cur_iter + 1) % self._interval == 0:
            self._input_size = self._get_random_size(aspect_ratio=float(w / h))
        return inputs, data_samples

    def _get_random_size(self, aspect_ratio: float) -> Tuple[int, int]:
        size = random.randint(*self._random_size_range)
        return (self._size_divisor * size,
                self._size_divisor * int(aspect_ratio * size))


# --------------------------------------------------------------------------
# Demo / sanity check
# --------------------------------------------------------------------------
def _reference_resize(x, h_out, w_out, h_first):
    """Pure-JAX reference replaying the kernel's bf16 rounding and pass order."""
    wy = jnp.asarray(_bilinear_matrix_np(h_out, x.shape[-2]))
    wx = jnp.asarray(_bilinear_matrix_np(w_out, x.shape[-1]))
    bf = lambda a: a.astype(jnp.bfloat16).astype(jnp.float32)
    xb, wyb, wxb = bf(x.astype(jnp.float32)), bf(wy), bf(wx)
    if h_first:
        tmp = bf(jnp.einsum("oh,bchw->bcow", wyb, xb))
        return jnp.einsum("bcow,pw->bcop", tmp, wxb)
    tmp = bf(jnp.einsum("bchw,pw->bchp", xb, wxb))
    return jnp.einsum("oh,bchp->bcop", wyb, tmp)


if __name__ == "__main__":
    random.seed(0)
    key = jax.random.PRNGKey(0)
    k_img, k_box = jax.random.split(key)

    B, C, H, W = 2, 4, 16, 16
    x = jax.random.normal(k_img, (B, C, H, W), dtype=jnp.float32)
    data_samples = [
        {
            "img_shape": (H, W),
            "pad_shape": (H, W),
            "bboxes": jax.random.uniform(k_box, (8, 4), dtype=jnp.float32) * H,
        }
        for _ in range(B)
    ]

    model = BatchSyncRandomResizePallas(random_size_range=(64, 96),
                                        interval=1, size_divisor=8)

    # Call 1: _input_size == input size -> passthrough; new random size drawn.
    out1, data_samples = model.forward(x, data_samples, cur_iter=0)
    # Call 2: resizes to the drawn _input_size via the Pallas kernel (w-first path).
    out2, data_samples = model.forward(out1, data_samples, cur_iter=1)
    out2 = jax.block_until_ready(out2)

    Ht, Wt = out2.shape[-2:]
    assert out2.shape == (B, C, Ht, Wt)

    # Tight check vs. a reference with matching bf16 rounding / pass order.
    ref_bf = _reference_resize(x, Ht, Wt, _choose_h_first(H, W, Ht, Wt))
    assert jnp.allclose(out2, ref_bf, atol=2e-3, rtol=2e-3), \
        float(jnp.max(jnp.abs(out2 - ref_bf)))

    # Loose sanity check vs. the exact f32 bilinear result.
    wy_f = jnp.asarray(_bilinear_matrix_np(Ht, H))
    wx_f = jnp.asarray(_bilinear_matrix_np(Wt, W))
    ref_f32 = jnp.einsum("oh,bchw,pw->bcop", wy_f, x, wx_f)
    assert jnp.allclose(out2, ref_f32, atol=0.15, rtol=0.05), \
        float(jnp.max(jnp.abs(out2 - ref_f32)))

    # Exercise the h-first fused branch too (width-dominant upscale).
    Ht3, Wt3 = 32, 96
    assert _choose_h_first(H, W, Ht3, Wt3)
    out3 = jax.block_until_ready(bilinear_resize_pallas(x, (Ht3, Wt3)))
    ref3 = _reference_resize(x, Ht3, Wt3, True)
    assert jnp.allclose(out3, ref3, atol=2e-3, rtol=2e-3), \
        float(jnp.max(jnp.abs(out3 - ref3)))

    assert bool(jnp.all(jnp.isfinite(data_samples[0]["bboxes"])))

    print("KERNEL_OK")
</pallas_src>

<mosaic_0001>
module attributes {stable_mosaic.version = 11 : i64} {
  func.func @_resize_planes_kernel(%arg0: i32, %arg1: memref<4x16x16xf32, #tpu.memory_space<vmem>>, %arg2: memref<88x16xbf16, #tpu.memory_space<vmem>>, %arg3: memref<16x88xbf16, #tpu.memory_space<vmem>>, %arg4: memref<4x88x88xf32, #tpu.memory_space<vmem>>) attributes {dimension_semantics = [#tpu.dimension_semantics<parallel>], iteration_bounds = array<i64: 2>, scalar_prefetch = 0 : i64, scratch_operands = 0 : i64, tpu.core_type = #tpu.core_type<tc>, window_params = [{transform_indices = @transform_0, window_bounds = array<i64: 4, 16, 16>}, {pipeline_mode = #tpu.pipeline_mode<synchronous>, transform_indices = @transform_1, window_bounds = array<i64: 88, 16>}, {pipeline_mode = #tpu.pipeline_mode<synchronous>, transform_indices = @transform_2, window_bounds = array<i64: 16, 88>}, {transform_indices = @transform_3, window_bounds = array<i64: 4, 88, 88>}]} {
    %c0 = arith.constant 0 : index
    %c0_0 = arith.constant 0 : index
    %0 = vector.load %arg2[%c0, %c0_0] : memref<88x16xbf16, #tpu.memory_space<vmem>>, vector<88x16xbf16>
    %c0_1 = arith.constant 0 : index
    %c0_2 = arith.constant 0 : index
    %1 = vector.load %arg3[%c0_1, %c0_2] : memref<16x88xbf16, #tpu.memory_space<vmem>>, vector<16x88xbf16>
    %c0_3 = arith.constant 0 : index
    %c0_4 = arith.constant 0 : index
    %c0_5 = arith.constant 0 : index
    %2 = vector.load %arg1[%c0_3, %c0_4, %c0_5] : memref<4x16x16xf32, #tpu.memory_space<vmem>>, vector<4x16x16xf32>
    %3 = vector.shape_cast %2 : vector<4x16x16xf32> to vector<64x16xf32>
    %4 = arith.truncf %3 : vector<64x16xf32> to vector<64x16xbf16>
    %cst = arith.constant dense<0.000000e+00> : vector<64x88xf32>
    %5 = tpu.matmul %4, %1, %cst {dimension_numbers = #tpu.dot_dimension_numbers<[1], [0], [0], [1], [0, 0, 1, 1], [], []>} : vector<64x16xbf16>, vector<16x88xbf16>, vector<64x88xf32> -> vector<64x88xf32>
    %6 = arith.truncf %5 : vector<64x88xf32> to vector<64x88xbf16>
    %7 = vector.shape_cast %6 : vector<64x88xbf16> to vector<4x16x88xbf16>
    %8 = vector.extract_strided_slice %7 {offsets = [0, 0, 0], sizes = [1, 16, 88], strides = [1, 1, 1]} : vector<4x16x88xbf16> to vector<1x16x88xbf16>
    %9 = vector.shape_cast %8 : vector<1x16x88xbf16> to vector<16x88xbf16>
    %cst_6 = arith.constant dense<0.000000e+00> : vector<88x88xf32>
    %10 = tpu.matmul %0, %9, %cst_6 {dimension_numbers = #tpu.dot_dimension_numbers<[1], [0], [0], [1], [0, 0, 1, 1], [], []>} : vector<88x16xbf16>, vector<16x88xbf16>, vector<88x88xf32> -> vector<88x88xf32>
    %c0_7 = arith.constant 0 : index
    %c0_8 = arith.constant 0 : index
    %c0_9 = arith.constant 0 : index
    %11 = vector.load %arg4[%c0_7, %c0_8, %c0_9] : memref<4x88x88xf32, #tpu.memory_space<vmem>>, vector<1x88x88xf32>
    %12 = vector.shape_cast %11 : vector<1x88x88xf32> to vector<88x88xf32>
    %13 = vector.shape_cast %10 : vector<88x88xf32> to vector<1x88x88xf32>
    tpu.vector_store %arg4[%c0_7, %c0_8, %c0_9], %13 {strides = array<i32>} : memref<4x88x88xf32, #tpu.memory_space<vmem>>, vector<1x88x88xf32>,
    %14 = vector.extract_strided_slice %7 {offsets = [1, 0, 0], sizes = [1, 16, 88], strides = [1, 1, 1]} : vector<4x16x88xbf16> to vector<1x16x88xbf16>
    %15 = vector.shape_cast %14 : vector<1x16x88xbf16> to vector<16x88xbf16>
    %cst_10 = arith.constant dense<0.000000e+00> : vector<88x88xf32>
    %16 = tpu.matmul %0, %15, %cst_10 {dimension_numbers = #tpu.dot_dimension_numbers<[1], [0], [0], [1], [0, 0, 1, 1], [], []>} : vector<88x16xbf16>, vector<16x88xbf16>, vector<88x88xf32> -> vector<88x88xf32>
    %c1 = arith.constant 1 : index
    %c0_11 = arith.constant 0 : index
    %c0_12 = arith.constant 0 : index
    %17 = vector.load %arg4[%c1, %c0_11, %c0_12] : memref<4x88x88xf32, #tpu.memory_space<vmem>>, vector<1x88x88xf32>
    %18 = vector.shape_cast %17 : vector<1x88x88xf32> to vector<88x88xf32>
    %19 = vector.shape_cast %16 : vector<88x88xf32> to vector<1x88x88xf32>
    tpu.vector_store %arg4[%c1, %c0_11, %c0_12], %19 {strides = array<i32>} : memref<4x88x88xf32, #tpu.memory_space<vmem>>, vector<1x88x88xf32>,
    %20 = vector.extract_strided_slice %7 {offsets = [2, 0, 0], sizes = [1, 16, 88], strides = [1, 1, 1]} : vector<4x16x88xbf16> to vector<1x16x88xbf16>
    %21 = vector.shape_cast %20 : vector<1x16x88xbf16> to vector<16x88xbf16>
    %cst_13 = arith.constant dense<0.000000e+00> : vector<88x88xf32>
    %22 = tpu.matmul %0, %21, %cst_13 {dimension_numbers = #tpu.dot_dimension_numbers<[1], [0], [0], [1], [0, 0, 1, 1], [], []>} : vector<88x16xbf16>, vector<16x88xbf16>, vector<88x88xf32> -> vector<88x88xf32>
    %c2 = arith.constant 2 : index
    %c0_14 = arith.constant 0 : index
    %c0_15 = arith.constant 0 : index
    %23 = vector.load %arg4[%c2, %c0_14, %c0_15] : memref<4x88x88xf32, #tpu.memory_space<vmem>>, vector<1x88x88xf32>
    %24 = vector.shape_cast %23 : vector<1x88x88xf32> to vector<88x88xf32>
    %25 = vector.shape_cast %22 : vector<88x88xf32> to vector<1x88x88xf32>
    tpu.vector_store %arg4[%c2, %c0_14, %c0_15], %25 {strides = array<i32>} : memref<4x88x88xf32, #tpu.memory_space<vmem>>, vector<1x88x88xf32>,
    %26 = vector.extract_strided_slice %7 {offsets = [3, 0, 0], sizes = [1, 16, 88], strides = [1, 1, 1]} : vector<4x16x88xbf16> to vector<1x16x88xbf16>
    %27 = vector.shape_cast %26 : vector<1x16x88xbf16> to vector<16x88xbf16>
    %cst_16 = arith.constant dense<0.000000e+00> : vector<88x88xf32>
    %28 = tpu.matmul %0, %27, %cst_16 {dimension_numbers = #tpu.dot_dimension_numbers<[1], [0], [0], [1], [0, 0, 1, 1], [], []>} : vector<88x16xbf16>, vector<16x88xbf16>, vector<88x88xf32> -> vector<88x88xf32>
    %c3 = arith.constant 3 : index
    %c0_17 = arith.constant 0 : index
    %c0_18 = arith.constant 0 : index
    %29 = vector.load %arg4[%c3, %c0_17, %c0_18] : memref<4x88x88xf32, #tpu.memory_space<vmem>>, vector<1x88x88xf32>
    %30 = vector.shape_cast %29 : vector<1x88x88xf32> to vector<88x88xf32>
    %31 = vector.shape_cast %28 : vector<88x88xf32> to vector<1x88x88xf32>
    tpu.vector_store %arg4[%c3, %c0_17, %c0_18], %31 {strides = array<i32>} : memref<4x88x88xf32, #tpu.memory_space<vmem>>, vector<1x88x88xf32>,
    return
  }
  func.func @transform_0(%arg0: i32) -> (i32, i32, i32) {
    %c0_i32 = arith.constant 0 : i32
    %c0_i32_0 = arith.constant 0 : i32
    %c0_i32_1 = arith.constant 0 : i32
    return %arg0, %c0_i32, %c0_i32_0 : i32, i32, i32
  }
  func.func @transform_1(%arg0: i32) -> (i32, i32) {
    %c0_i32 = arith.constant 0 : i32
    %c0_i32_0 = arith.constant 0 : i32
    %c0_i32_1 = arith.constant 0 : i32
    return %c0_i32, %c0_i32_0 : i32, i32
  }
  func.func @transform_2(%arg0: i32) -> (i32, i32) {
    %c0_i32 = arith.constant 0 : i32
    %c0_i32_0 = arith.constant 0 : i32
    %c0_i32_1 = arith.constant 0 : i32
    return %c0_i32, %c0_i32_0 : i32, i32
  }
  func.func @transform_3(%arg0: i32) -> (i32, i32, i32) {
    %c0_i32 = arith.constant 0 : i32
    %c0_i32_0 = arith.constant 0 : i32
    %c0_i32_1 = arith.constant 0 : i32
    return %arg0, %c0_i32, %c0_i32_0 : i32, i32, i32
  }
}

module attributes {stable_mosaic.version = 11 : i64} {
  func.func @_resize_planes_kernel(%arg0: i32, %arg1: memref<4x16x16xf32, #tpu.memory_space<vmem>>, %arg2: memref<88x16xbf16, #tpu.memory_space<vmem>>, %arg3: memref<16x88xbf16, #tpu.memory_space<vmem>>, %arg4: memref<4x88x88xf32, #tpu.memory_space<vmem>>) attributes {dimension_semantics = [#tpu.dimension_semantics<parallel>], iteration_bounds = array<i64: 2>, scalar_prefetch = 0 : i64, scratch_operands = 0 : i64, tpu.core_type = #tpu.core_type<tc>, window_params = [{transform_indices = @transform_0, window_bounds = array<i64: 4, 16, 16>}, {pipeline_mode = #tpu.pipeline_mode<synchronous>, transform_indices = @transform_1, window_bounds = array<i64: 88, 16>}, {pipeline_mode = #tpu.pipeline_mode<synchronous>, transform_indices = @transform_2, window_bounds = array<i64: 16, 88>}, {transform_indices = @transform_3, window_bounds = array<i64: 4, 88, 88>}]} {
    %c0 = arith.constant 0 : index
    %c0_0 = arith.constant 0 : index
    %0 = vector.load %arg2[%c0, %c0_0] : memref<88x16xbf16, #tpu.memory_space<vmem>>, vector<88x16xbf16>
    %c0_1 = arith.constant 0 : index
    %c0_2 = arith.constant 0 : index
    %1 = vector.load %arg3[%c0_1, %c0_2] : memref<16x88xbf16, #tpu.memory_space<vmem>>, vector<16x88xbf16>
    %c0_3 = arith.constant 0 : index
    %c0_4 = arith.constant 0 : index
    %c0_5 = arith.constant 0 : index
    %2 = vector.load %arg1[%c0_3, %c0_4, %c0_5] : memref<4x16x16xf32, #tpu.memory_space<vmem>>, vector<4x16x16xf32>
    %3 = vector.shape_cast %2 : vector<4x16x16xf32> to vector<64x16xf32>
    %4 = arith.truncf %3 : vector<64x16xf32> to vector<64x16xbf16>
    %cst = arith.constant dense<0.000000e+00> : vector<64x88xf32>
    %5 = tpu.matmul %4, %1, %cst {dimension_numbers = #tpu.dot_dimension_numbers<[1], [0], [0], [1], [0, 0, 1, 1], [], []>} : vector<64x16xbf16>, vector<16x88xbf16>, vector<64x88xf32> -> vector<64x88xf32>
    %6 = arith.truncf %5 : vector<64x88xf32> to vector<64x88xbf16>
    %7 = vector.shape_cast %6 : vector<64x88xbf16> to vector<4x16x88xbf16>
    %8 = vector.extract_strided_slice %7 {offsets = [0, 0, 0], sizes = [1, 16, 88], strides = [1, 1, 1]} : vector<4x16x88xbf16> to vector<1x16x88xbf16>
    %9 = vector.shape_cast %8 : vector<1x16x88xbf16> to vector<16x88xbf16>
    %cst_6 = arith.constant dense<0.000000e+00> : vector<88x88xf32>
    %10 = tpu.matmul %0, %9, %cst_6 {dimension_numbers = #tpu.dot_dimension_numbers<[1], [0], [0], [1], [0, 0, 1, 1], [], []>} : vector<88x16xbf16>, vector<16x88xbf16>, vector<88x88xf32> -> vector<88x88xf32>
    %c0_7 = arith.constant 0 : index
    %c0_8 = arith.constant 0 : index
    %c0_9 = arith.constant 0 : index
    %11 = vector.load %arg4[%c0_7, %c0_8, %c0_9] : memref<4x88x88xf32, #tpu.memory_space<vmem>>, vector<1x88x88xf32>
    %12 = vector.shape_cast %11 : vector<1x88x88xf32> to vector<88x88xf32>
    %13 = vector.shape_cast %10 : vector<88x88xf32> to vector<1x88x88xf32>
    tpu.vector_store %arg4[%c0_7, %c0_8, %c0_9], %13 {strides = array<i32>} : memref<4x88x88xf32, #tpu.memory_space<vmem>>, vector<1x88x88xf32>,
    %14 = vector.extract_strided_slice %7 {offsets = [1, 0, 0], sizes = [1, 16, 88], strides = [1, 1, 1]} : vector<4x16x88xbf16> to vector<1x16x88xbf16>
    %15 = vector.shape_cast %14 : vector<1x16x88xbf16> to vector<16x88xbf16>
    %cst_10 = arith.constant dense<0.000000e+00> : vector<88x88xf32>
    %16 = tpu.matmul %0, %15, %cst_10 {dimension_numbers = #tpu.dot_dimension_numbers<[1], [0], [0], [1], [0, 0, 1, 1], [], []>} : vector<88x16xbf16>, vector<16x88xbf16>, vector<88x88xf32> -> vector<88x88xf32>
    %c1 = arith.constant 1 : index
    %c0_11 = arith.constant 0 : index
    %c0_12 = arith.constant 0 : index
    %17 = vector.load %arg4[%c1, %c0_11, %c0_12] : memref<4x88x88xf32, #tpu.memory_space<vmem>>, vector<1x88x88xf32>
    %18 = vector.shape_cast %17 : vector<1x88x88xf32> to vector<88x88xf32>
    %19 = vector.shape_cast %16 : vector<88x88xf32> to vector<1x88x88xf32>
    tpu.vector_store %arg4[%c1, %c0_11, %c0_12], %19 {strides = array<i32>} : memref<4x88x88xf32, #tpu.memory_space<vmem>>, vector<1x88x88xf32>,
    %20 = vector.extract_strided_slice %7 {offsets = [2, 0, 0], sizes = [1, 16, 88], strides = [1, 1, 1]} : vector<4x16x88xbf16> to vector<1x16x88xbf16>
    %21 = vector.shape_cast %20 : vector<1x16x88xbf16> to vector<16x88xbf16>
    %cst_13 = arith.constant dense<0.000000e+00> : vector<88x88xf32>
    %22 = tpu.matmul %0, %21, %cst_13 {dimension_numbers = #tpu.dot_dimension_numbers<[1], [0], [0], [1], [0, 0, 1, 1], [], []>} : vector<88x16xbf16>, vector<16x88xbf16>, vector<88x88xf32> -> vector<88x88xf32>
    %c2 = arith.constant 2 : index
    %c0_14 = arith.constant 0 : index
    %c0_15 = arith.constant 0 : index
    %23 = vector.load %arg4[%c2, %c0_14, %c0_15] : memref<4x88x88xf32, #tpu.memory_space<vmem>>, vector<1x88x88xf32>
    %24 = vector.shape_cast %23 : vector<1x88x88xf32> to vector<88x88xf32>
    %25 = vector.shape_cast %22 : vector<88x88xf32> to vector<1x88x88xf32>
    tpu.vector_store %arg4[%c2, %c0_14, %c0_15], %25 {strides = array<i32>} : memref<4x88x88xf32, #tpu.memory_space<vmem>>, vector<1x88x88xf32>,
    %26 = vector.extract_strided_slice %7 {offsets = [3, 0, 0], sizes = [1, 16, 88], strides = [1, 1, 1]} : vector<4x16x88xbf16> to vector<1x16x88xbf16>
    %27 = vector.shape_cast %26 : vector<1x16x88xbf16> to vector<16x88xbf16>
    %cst_16 = arith.constant dense<0.000000e+00> : vector<88x88xf32>
    %28 = tpu.matmul %0, %27, %cst_16 {dimension_numbers = #tpu.dot_dimension_numbers<[1], [0], [0], [1], [0, 0, 1, 1], [], []>} : vector<88x16xbf16>, vector<16x88xbf16>, vector<88x88xf32> -> vector<88x88xf32>
    %c3 = arith.constant 3 : index
    %c0_17 = arith.constant 0 : index
    %c0_18 = arith.constant 0 : index
    %29 = vector.load %arg4[%c3, %c0_17, %c0_18] : memref<4x88x88xf32, #tpu.memory_space<vmem>>, vector<1x88x88xf32>
    %30 = vector.shape_cast %29 : vector<1x88x88xf32> to vector<88x88xf32>
    %31 = vector.shape_cast %28 : vector<88x88xf32> to vector<1x88x88xf32>
    tpu.vector_store %arg4[%c3, %c0_17, %c0_18], %31 {strides = array<i32>} : memref<4x88x88xf32, #tpu.memory_space<vmem>>, vector<1x88x88xf32>,
    return
  }
  func.func @transform_0(%arg0: i32) -> (i32, i32, i32) {
    %c0_i32 = arith.constant 0 : i32
    %c0_i32_0 = arith.constant 0 : i32
    %c0_i32_1 = arith.constant 0 : i32
    return %arg0, %c0_i32, %c0_i32_0 : i32, i32, i32
  }
  func.func @transform_1(%arg0: i32) -> (i32, i32) {
    %c0_i32 = arith.constant 0 : i32
    %c0_i32_0 = arith.constant 0 : i32
    %c0_i32_1 = arith.constant 0 : i32
    return %c0_i32, %c0_i32_0 : i32, i32
  }
  func.func @transform_2(%arg0: i32) -> (i32, i32) {
    %c0_i32 = arith.constant 0 : i32
    %c0_i32_0 = arith.constant 0 : i32
    %c0_i32_1 = arith.constant 0 : i32
    return %c0_i32, %c0_i32_0 : i32, i32
  }
  func.func @transform_3(%arg0: i32) -> (i32, i32, i32) {
    %c0_i32 = arith.constant 0 : i32
    %c0_i32_0 = arith.constant 0 : i32
    %c0_i32_1 = arith.constant 0 : i32
    return %arg0, %c0_i32, %c0_i32_0 : i32, i32, i32
  }
}

module attributes {stable_mosaic.version = 11 : i64} {
  func.func @_resize_planes_kernel(%arg0: i32, %arg1: memref<2x16x16xf32, #tpu.memory_space<vmem>>, %arg2: memref<88x16xbf16, #tpu.memory_space<vmem>>, %arg3: memref<16x88xbf16, #tpu.memory_space<vmem>>, %arg4: memref<2x88x88xf32, #tpu.memory_space<vmem>>) attributes {dimension_semantics = [#tpu.dimension_semantics<parallel>], iteration_bounds = array<i64: 4>, scalar_prefetch = 0 : i64, scratch_operands = 0 : i64, tpu.core_type = #tpu.core_type<tc>, window_params = [{transform_indices = @transform_0, window_bounds = array<i64: 2, 16, 16>}, {pipeline_mode = #tpu.pipeline_mode<synchronous>, transform_indices = @transform_1, window_bounds = array<i64: 88, 16>}, {pipeline_mode = #tpu.pipeline_mode<synchronous>, transform_indices = @transform_2, window_bounds = array<i64: 16, 88>}, {transform_indices = @transform_3, window_bounds = array<i64: 2, 88, 88>}]} {
    %c0 = arith.constant 0 : index
    %c0_0 = arith.constant 0 : index
    %0 = vector.load %arg2[%c0, %c0_0] : memref<88x16xbf16, #tpu.memory_space<vmem>>, vector<88x16xbf16>
    %c0_1 = arith.constant 0 : index
    %c0_2 = arith.constant 0 : index
    %1 = vector.load %arg3[%c0_1, %c0_2] : memref<16x88xbf16, #tpu.memory_space<vmem>>, vector<16x88xbf16>
    %c0_3 = arith.constant 0 : index
    %c0_4 = arith.constant 0 : index
    %c0_5 = arith.constant 0 : index
    %2 = vector.load %arg1[%c0_3, %c0_4, %c0_5] : memref<2x16x16xf32, #tpu.memory_space<vmem>>, vector<2x16x16xf32>
    %3 = vector.shape_cast %2 : vector<2x16x16xf32> to vector<32x16xf32>
    %4 = arith.truncf %3 : vector<32x16xf32> to vector<32x16xbf16>
    %cst = arith.constant dense<0.000000e+00> : vector<32x88xf32>
    %5 = tpu.matmul %4, %1, %cst {dimension_numbers = #tpu.dot_dimension_numbers<[1], [0], [0], [1], [0, 0, 1, 1], [], []>} : vector<32x16xbf16>, vector<16x88xbf16>, vector<32x88xf32> -> vector<32x88xf32>
    %6 = arith.truncf %5 : vector<32x88xf32> to vector<32x88xbf16>
    %7 = vector.shape_cast %6 : vector<32x88xbf16> to vector<2x16x88xbf16>
    %8 = vector.extract_strided_slice %7 {offsets = [0, 0, 0], sizes = [1, 16, 88], strides = [1, 1, 1]} : vector<2x16x88xbf16> to vector<1x16x88xbf16>
    %9 = vector.shape_cast %8 : vector<1x16x88xbf16> to vector<16x88xbf16>
    %cst_6 = arith.constant dense<0.000000e+00> : vector<88x88xf32>
    %10 = tpu.matmul %0, %9, %cst_6 {dimension_numbers = #tpu.dot_dimension_numbers<[1], [0], [0], [1], [0, 0, 1, 1], [], []>} : vector<88x16xbf16>, vector<16x88xbf16>, vector<88x88xf32> -> vector<88x88xf32>
    %c0_7 = arith.constant 0 : index
    %c0_8 = arith.constant 0 : index
    %c0_9 = arith.constant 0 : index
    %11 = vector.load %arg4[%c0_7, %c0_8, %c0_9] : memref<2x88x88xf32, #tpu.memory_space<vmem>>, vector<1x88x88xf32>
    %12 = vector.shape_cast %11 : vector<1x88x88xf32> to vector<88x88xf32>
    %13 = vector.shape_cast %10 : vector<88x88xf32> to vector<1x88x88xf32>
    tpu.vector_store %arg4[%c0_7, %c0_8, %c0_9], %13 {strides = array<i32>} : memref<2x88x88xf32, #tpu.memory_space<vmem>>, vector<1x88x88xf32>,
    %14 = vector.extract_strided_slice %7 {offsets = [1, 0, 0], sizes = [1, 16, 88], strides = [1, 1, 1]} : vector<2x16x88xbf16> to vector<1x16x88xbf16>
    %15 = vector.shape_cast %14 : vector<1x16x88xbf16> to vector<16x88xbf16>
    %cst_10 = arith.constant dense<0.000000e+00> : vector<88x88xf32>
    %16 = tpu.matmul %0, %15, %cst_10 {dimension_numbers = #tpu.dot_dimension_numbers<[1], [0], [0], [1], [0, 0, 1, 1], [], []>} : vector<88x16xbf16>, vector<16x88xbf16>, vector<88x88xf32> -> vector<88x88xf32>
    %c1 = arith.constant 1 : index
    %c0_11 = arith.constant 0 : index
    %c0_12 = arith.constant 0 : index
    %17 = vector.load %arg4[%c1, %c0_11, %c0_12] : memref<2x88x88xf32, #tpu.memory_space<vmem>>, vector<1x88x88xf32>
    %18 = vector.shape_cast %17 : vector<1x88x88xf32> to vector<88x88xf32>
    %19 = vector.shape_cast %16 : vector<88x88xf32> to vector<1x88x88xf32>
    tpu.vector_store %arg4[%c1, %c0_11, %c0_12], %19 {strides = array<i32>} : memref<2x88x88xf32, #tpu.memory_space<vmem>>, vector<1x88x88xf32>,
    return
  }
  func.func @transform_0(%arg0: i32) -> (i32, i32, i32) {
    %c0_i32 = arith.constant 0 : i32
    %c0_i32_0 = arith.constant 0 : i32
    %c0_i32_1 = arith.constant 0 : i32
    return %arg0, %c0_i32, %c0_i32_0 : i32, i32, i32
  }
  func.func @transform_1(%arg0: i32) -> (i32, i32) {
    %c0_i32 = arith.constant 0 : i32
    %c0_i32_0 = arith.constant 0 : i32
    %c0_i32_1 = arith.constant 0 : i32
    return %c0_i32, %c0_i32_0 : i32, i32
  }
  func.func @transform_2(%arg0: i32) -> (i32, i32) {
    %c0_i32 = arith.constant 0 : i32
    %c0_i32_0 = arith.constant 0 : i32
    %c0_i32_1 = arith.constant 0 : i32
    return %c0_i32, %c0_i32_0 : i32, i32
  }
  func.func @transform_3(%arg0: i32) -> (i32, i32, i32) {
    %c0_i32 = arith.constant 0 : i32
    %c0_i32_0 = arith.constant 0 : i32
    %c0_i32_1 = arith.constant 0 : i32
    return %arg0, %c0_i32, %c0_i32_0 : i32, i32, i32
  }
}

module attributes {stable_mosaic.version = 11 : i64} {
  func.func @_resize_planes_kernel(%arg0: i32, %arg1: memref<2x16x16xf32, #tpu.memory_space<vmem>>, %arg2: memref<88x16xbf16, #tpu.memory_space<vmem>>, %arg3: memref<16x88xbf16, #tpu.memory_space<vmem>>, %arg4: memref<2x88x88xf32, #tpu.memory_space<vmem>>) attributes {dimension_semantics = [#tpu.dimension_semantics<parallel>], iteration_bounds = array<i64: 4>, scalar_prefetch = 0 : i64, scratch_operands = 0 : i64, tpu.core_type = #tpu.core_type<tc>, window_params = [{transform_indices = @transform_0, window_bounds = array<i64: 2, 16, 16>}, {pipeline_mode = #tpu.pipeline_mode<synchronous>, transform_indices = @transform_1, window_bounds = array<i64: 88, 16>}, {pipeline_mode = #tpu.pipeline_mode<synchronous>, transform_indices = @transform_2, window_bounds = array<i64: 16, 88>}, {transform_indices = @transform_3, window_bounds = array<i64: 2, 88, 88>}]} {
    %c0 = arith.constant 0 : index
    %c0_0 = arith.constant 0 : index
    %0 = vector.load %arg2[%c0, %c0_0] : memref<88x16xbf16, #tpu.memory_space<vmem>>, vector<88x16xbf16>
    %c0_1 = arith.constant 0 : index
    %c0_2 = arith.constant 0 : index
    %1 = vector.load %arg3[%c0_1, %c0_2] : memref<16x88xbf16, #tpu.memory_space<vmem>>, vector<16x88xbf16>
    %c0_3 = arith.constant 0 : index
    %c0_4 = arith.constant 0 : index
    %c0_5 = arith.constant 0 : index
    %2 = vector.load %arg1[%c0_3, %c0_4, %c0_5] : memref<2x16x16xf32, #tpu.memory_space<vmem>>, vector<2x16x16xf32>
    %3 = vector.shape_cast %2 : vector<2x16x16xf32> to vector<32x16xf32>
    %4 = arith.truncf %3 : vector<32x16xf32> to vector<32x16xbf16>
    %cst = arith.constant dense<0.000000e+00> : vector<32x88xf32>
    %5 = tpu.matmul %4, %1, %cst {dimension_numbers = #tpu.dot_dimension_numbers<[1], [0], [0], [1], [0, 0, 1, 1], [], []>} : vector<32x16xbf16>, vector<16x88xbf16>, vector<32x88xf32> -> vector<32x88xf32>
    %6 = arith.truncf %5 : vector<32x88xf32> to vector<32x88xbf16>
    %7 = vector.shape_cast %6 : vector<32x88xbf16> to vector<2x16x88xbf16>
    %8 = vector.extract_strided_slice %7 {offsets = [0, 0, 0], sizes = [1, 16, 88], strides = [1, 1, 1]} : vector<2x16x88xbf16> to vector<1x16x88xbf16>
    %9 = vector.shape_cast %8 : vector<1x16x88xbf16> to vector<16x88xbf16>
    %cst_6 = arith.constant dense<0.000000e+00> : vector<88x88xf32>
    %10 = tpu.matmul %0, %9, %cst_6 {dimension_numbers = #tpu.dot_dimension_numbers<[1], [0], [0], [1], [0, 0, 1, 1], [], []>} : vector<88x16xbf16>, vector<16x88xbf16>, vector<88x88xf32> -> vector<88x88xf32>
    %c0_7 = arith.constant 0 : index
    %c0_8 = arith.constant 0 : index
    %c0_9 = arith.constant 0 : index
    %11 = vector.load %arg4[%c0_7, %c0_8, %c0_9] : memref<2x88x88xf32, #tpu.memory_space<vmem>>, vector<1x88x88xf32>
    %12 = vector.shape_cast %11 : vector<1x88x88xf32> to vector<88x88xf32>
    %13 = vector.shape_cast %10 : vector<88x88xf32> to vector<1x88x88xf32>
    tpu.vector_store %arg4[%c0_7, %c0_8, %c0_9], %13 {strides = array<i32>} : memref<2x88x88xf32, #tpu.memory_space<vmem>>, vector<1x88x88xf32>,
    %14 = vector.extract_strided_slice %7 {offsets = [1, 0, 0], sizes = [1, 16, 88], strides = [1, 1, 1]} : vector<2x16x88xbf16> to vector<1x16x88xbf16>
    %15 = vector.shape_cast %14 : vector<1x16x88xbf16> to vector<16x88xbf16>
    %cst_10 = arith.constant dense<0.000000e+00> : vector<88x88xf32>
    %16 = tpu.matmul %0, %15, %cst_10 {dimension_numbers = #tpu.dot_dimension_numbers<[1], [0], [0], [1], [0, 0, 1, 1], [], []>} : vector<88x16xbf16>, vector<16x88xbf16>, vector<88x88xf32> -> vector<88x88xf32>
    %c1 = arith.constant 1 : index
    %c0_11 = arith.constant 0 : index
    %c0_12 = arith.constant 0 : index
    %17 = vector.load %arg4[%c1, %c0_11, %c0_12] : memref<2x88x88xf32, #tpu.memory_space<vmem>>, vector<1x88x88xf32>
    %18 = vector.shape_cast %17 : vector<1x88x88xf32> to vector<88x88xf32>
    %19 = vector.shape_cast %16 : vector<88x88xf32> to vector<1x88x88xf32>
    tpu.vector_store %arg4[%c1, %c0_11, %c0_12], %19 {strides = array<i32>} : memref<2x88x88xf32, #tpu.memory_space<vmem>>, vector<1x88x88xf32>,
    return
  }
  func.func @transform_0(%arg0: i32) -> (i32, i32, i32) {
    %c0_i32 = arith.constant 0 : i32
    %c0_i32_0 = arith.constant 0 : i32
    %c0_i32_1 = arith.constant 0 : i32
    return %arg0, %c0_i32, %c0_i32_0 : i32, i32, i32
  }
  func.func @transform_1(%arg0: i32) -> (i32, i32) {
    %c0_i32 = arith.constant 0 : i32
    %c0_i32_0 = arith.constant 0 : i32
    %c0_i32_1 = arith.constant 0 : i32
    return %c0_i32, %c0_i32_0 : i32, i32
  }
  func.func @transform_2(%arg0: i32) -> (i32, i32) {
    %c0_i32 = arith.constant 0 : i32
    %c0_i32_0 = arith.constant 0 : i32
    %c0_i32_1 = arith.constant 0 : i32
    return %c0_i32, %c0_i32_0 : i32, i32
  }
  func.func @transform_3(%arg0: i32) -> (i32, i32, i32) {
    %c0_i32 = arith.constant 0 : i32
    %c0_i32_0 = arith.constant 0 : i32
    %c0_i32_1 = arith.constant 0 : i32
    return %arg0, %c0_i32, %c0_i32_0 : i32, i32, i32
  }
}

module attributes {stable_mosaic.version = 11 : i64} {
  func.func @_resize_planes_kernel(%arg0: i32, %arg1: memref<1x16x16xf32, #tpu.memory_space<vmem>>, %arg2: memref<88x16xbf16, #tpu.memory_space<vmem>>, %arg3: memref<16x88xbf16, #tpu.memory_space<vmem>>, %arg4: memref<1x88x88xf32, #tpu.memory_space<vmem>>) attributes {dimension_semantics = [#tpu.dimension_semantics<parallel>], iteration_bounds = array<i64: 8>, scalar_prefetch = 0 : i64, scratch_operands = 0 : i64, tpu.core_type = #tpu.core_type<tc>, window_params = [{transform_indices = @transform_0, window_bounds = array<i64: 1, 16, 16>}, {pipeline_mode = #tpu.pipeline_mode<synchronous>, transform_indices = @transform_1, window_bounds = array<i64: 88, 16>}, {pipeline_mode = #tpu.pipeline_mode<synchronous>, transform_indices = @transform_2, window_bounds = array<i64: 16, 88>}, {transform_indices = @transform_3, window_bounds = array<i64: 1, 88, 88>}]} {
    %c0 = arith.constant 0 : index
    %c0_0 = arith.constant 0 : index
    %0 = vector.load %arg2[%c0, %c0_0] : memref<88x16xbf16, #tpu.memory_space<vmem>>, vector<88x16xbf16>
    %c0_1 = arith.constant 0 : index
    %c0_2 = arith.constant 0 : index
    %1 = vector.load %arg3[%c0_1, %c0_2] : memref<16x88xbf16, #tpu.memory_space<vmem>>, vector<16x88xbf16>
    %c0_3 = arith.constant 0 : index
    %c0_4 = arith.constant 0 : index
    %c0_5 = arith.constant 0 : index
    %2 = vector.load %arg1[%c0_3, %c0_4, %c0_5] : memref<1x16x16xf32, #tpu.memory_space<vmem>>, vector<1x16x16xf32>
    %3 = vector.shape_cast %2 : vector<1x16x16xf32> to vector<16x16xf32>
    %4 = arith.truncf %3 : vector<16x16xf32> to vector<16x16xbf16>
    %cst = arith.constant dense<0.000000e+00> : vector<16x88xf32>
    %5 = tpu.matmul %4, %1, %cst {dimension_numbers = #tpu.dot_dimension_numbers<[1], [0], [0], [1], [0, 0, 1, 1], [], []>} : vector<16x16xbf16>, vector<16x88xbf16>, vector<16x88xf32> -> vector<16x88xf32>
    %6 = arith.truncf %5 : vector<16x88xf32> to vector<16x88xbf16>
    %cst_6 = arith.constant dense<0.000000e+00> : vector<88x88xf32>
    %7 = tpu.matmul %0, %6, %cst_6 {dimension_numbers = #tpu.dot_dimension_numbers<[1], [0], [0], [1], [0, 0, 1, 1], [], []>} : vector<88x16xbf16>, vector<16x88xbf16>, vector<88x88xf32> -> vector<88x88xf32>
    %c0_7 = arith.constant 0 : index
    %c0_8 = arith.constant 0 : index
    %c0_9 = arith.constant 0 : index
    %8 = vector.load %arg4[%c0_7, %c0_8, %c0_9] : memref<1x88x88xf32, #tpu.memory_space<vmem>>, vector<1x88x88xf32>
    %9 = vector.shape_cast %8 : vector<1x88x88xf32> to vector<88x88xf32>
    %10 = vector.shape_cast %7 : vector<88x88xf32> to vector<1x88x88xf32>
    tpu.vector_store %arg4[%c0_7, %c0_8, %c0_9], %10 {strides = array<i32>} : memref<1x88x88xf32, #tpu.memory_space<vmem>>, vector<1x88x88xf32>,
    return
  }
  func.func @transform_0(%arg0: i32) -> (i32, i32, i32) {
    %c0_i32 = arith.constant 0 : i32
    %c0_i32_0 = arith.constant 0 : i32
    %c0_i32_1 = arith.constant 0 : i32
    return %arg0, %c0_i32, %c0_i32_0 : i32, i32, i32
  }
  func.func @transform_1(%arg0: i32) -> (i32, i32) {
    %c0_i32 = arith.constant 0 : i32
    %c0_i32_0 = arith.constant 0 : i32
    %c0_i32_1 = arith.constant 0 : i32
    return %c0_i32, %c0_i32_0 : i32, i32
  }
  func.func @transform_2(%arg0: i32) -> (i32, i32) {
    %c0_i32 = arith.constant 0 : i32
    %c0_i32_0 = arith.constant 0 : i32
    %c0_i32_1 = arith.constant 0 : i32
    return %c0_i32, %c0_i32_0 : i32, i32
  }
  func.func @transform_3(%arg0: i32) -> (i32, i32, i32) {
    %c0_i32 = arith.constant 0 : i32
    %c0_i32_0 = arith.constant 0 : i32
    %c0_i32_1 = arith.constant 0 : i32
    return %arg0, %c0_i32, %c0_i32_0 : i32, i32, i32
  }
}

module attributes {stable_mosaic.version = 11 : i64} {
  func.func @_resize_planes_kernel(%arg0: i32, %arg1: memref<1x16x16xf32, #tpu.memory_space<vmem>>, %arg2: memref<88x16xbf16, #tpu.memory_space<vmem>>, %arg3: memref<16x88xbf16, #tpu.memory_space<vmem>>, %arg4: memref<1x88x88xf32, #tpu.memory_space<vmem>>) attributes {dimension_semantics = [#tpu.dimension_semantics<parallel>], iteration_bounds = array<i64: 8>, scalar_prefetch = 0 : i64, scratch_operands = 0 : i64, tpu.core_type = #tpu.core_type<tc>, window_params = [{transform_indices = @transform_0, window_bounds = array<i64: 1, 16, 16>}, {pipeline_mode = #tpu.pipeline_mode<synchronous>, transform_indices = @transform_1, window_bounds = array<i64: 88, 16>}, {pipeline_mode = #tpu.pipeline_mode<synchronous>, transform_indices = @transform_2, window_bounds = array<i64: 16, 88>}, {transform_indices = @transform_3, window_bounds = array<i64: 1, 88, 88>}]} {
    %c0 = arith.constant 0 : index
    %c0_0 = arith.constant 0 : index
    %0 = vector.load %arg2[%c0, %c0_0] : memref<88x16xbf16, #tpu.memory_space<vmem>>, vector<88x16xbf16>
    %c0_1 = arith.constant 0 : index
    %c0_2 = arith.constant 0 : index
    %1 = vector.load %arg3[%c0_1, %c0_2] : memref<16x88xbf16, #tpu.memory_space<vmem>>, vector<16x88xbf16>
    %c0_3 = arith.constant 0 : index
    %c0_4 = arith.constant 0 : index
    %c0_5 = arith.constant 0 : index
    %2 = vector.load %arg1[%c0_3, %c0_4, %c0_5] : memref<1x16x16xf32, #tpu.memory_space<vmem>>, vector<1x16x16xf32>
    %3 = vector.shape_cast %2 : vector<1x16x16xf32> to vector<16x16xf32>
    %4 = arith.truncf %3 : vector<16x16xf32> to vector<16x16xbf16>
    %cst = arith.constant dense<0.000000e+00> : vector<16x88xf32>
    %5 = tpu.matmul %4, %1, %cst {dimension_numbers = #tpu.dot_dimension_numbers<[1], [0], [0], [1], [0, 0, 1, 1], [], []>} : vector<16x16xbf16>, vector<16x88xbf16>, vector<16x88xf32> -> vector<16x88xf32>
    %6 = arith.truncf %5 : vector<16x88xf32> to vector<16x88xbf16>
    %cst_6 = arith.constant dense<0.000000e+00> : vector<88x88xf32>
    %7 = tpu.matmul %0, %6, %cst_6 {dimension_numbers = #tpu.dot_dimension_numbers<[1], [0], [0], [1], [0, 0, 1, 1], [], []>} : vector<88x16xbf16>, vector<16x88xbf16>, vector<88x88xf32> -> vector<88x88xf32>
    %c0_7 = arith.constant 0 : index
    %c0_8 = arith.constant 0 : index
    %c0_9 = arith.constant 0 : index
    %8 = vector.load %arg4[%c0_7, %c0_8, %c0_9] : memref<1x88x88xf32, #tpu.memory_space<vmem>>, vector<1x88x88xf32>
    %9 = vector.shape_cast %8 : vector<1x88x88xf32> to vector<88x88xf32>
    %10 = vector.shape_cast %7 : vector<88x88xf32> to vector<1x88x88xf32>
    tpu.vector_store %arg4[%c0_7, %c0_8, %c0_9], %10 {strides = array<i32>} : memref<1x88x88xf32, #tpu.memory_space<vmem>>, vector<1x88x88xf32>,
    return
  }
  func.func @transform_0(%arg0: i32) -> (i32, i32, i32) {
    %c0_i32 = arith.constant 0 : i32
    %c0_i32_0 = arith.constant 0 : i32
    %c0_i32_1 = arith.constant 0 : i32
    return %arg0, %c0_i32, %c0_i32_0 : i32, i32, i32
  }
  func.func @transform_1(%arg0: i32) -> (i32, i32) {
    %c0_i32 = arith.constant 0 : i32
    %c0_i32_0 = arith.constant 0 : i32
    %c0_i32_1 = arith.constant 0 : i32
    return %c0_i32, %c0_i32_0 : i32, i32
  }
  func.func @transform_2(%arg0: i32) -> (i32, i32) {
    %c0_i32 = arith.constant 0 : i32
    %c0_i32_0 = arith.constant 0 : i32
    %c0_i32_1 = arith.constant 0 : i32
    return %c0_i32, %c0_i32_0 : i32, i32
  }
  func.func @transform_3(%arg0: i32) -> (i32, i32, i32) {
    %c0_i32 = arith.constant 0 : i32
    %c0_i32_0 = arith.constant 0 : i32
    %c0_i32_1 = arith.constant 0 : i32
    return %arg0, %c0_i32, %c0_i32_0 : i32, i32, i32
  }
}

</mosaic_0001>

<llo_original>
// kernel: tpu_custom_call.1
$region0: #{tpu_custom_call.1}
  #allocation0 [shape = 'u32[]', space=smem, size = 0x4, offset = 0x4, fixed_abs, tag = 'smem constant byte address 0x4 - core index']
  #allocation1 [shape = 'u32[144,128]{1,0:T(1,128)}', space=vmem, size = 0x12000, scoped, tag = 'internal scratch']
  %s0 = inlined_call_operand.hbm [shape: f32[8,16,16], index: 0, kind: input, shape index: {}]
  %s1 = inlined_call_operand.vmem [shape: bf16[88,16], index: 1, kind: input, shape index: {}]
  %s2 = inlined_call_operand.vmem [shape: bf16[16,88], index: 2, kind: input, shape index: {}]
  %s3 = inlined_call_operand.hbm [shape: f32[8,88,88], index: 3, kind: output, shape index: {}]
  %s4 = sld [smem:[#allocation0]]
  $region49: #{tpu_custom_call.1} parent=0
    _
  %s6 = ssub.s32 1, %s4
  %s7 = scalar_select 0, %s6, %s4
  $region1: #{tpu_custom_call.1} parent=0
    #allocation2 [shape = 'u8[65536]{0}', space=vmem, size = 0x10000, scoped, tag = 'input window, operand 0']
    #allocation3 [shape = 's32[2]{0}', space=sflag, size = 0x8, scoped, tag = 'scoped memory for tpu_custom_call.1']
    #allocation4 [shape = 's32[2]{0}', space=sflag, size = 0x8, scoped, tag = 'scoped memory for tpu_custom_call.1']
    #allocation5 [shape = 'u8[360448]{0}', space=vmem, size = 0x58000, scoped, tag = 'output window, operand 0']
    %8 = vsyncpa [#allocation3], 0
    %s9 = scalar_lea.sflag [#allocation3], 1
    %10 = vsyncpa %s9, 0
    %11 = vsyncpa [#allocation4], 0
    %s12 = scalar_lea.sflag [#allocation4], 1
    %13 = vsyncpa %s12, 0
    loop: start=0, step=1, limit=4
    $region2: #{tpu_custom_call.1} parent=1 // loop_pre_header
      _
    $region3: #{tpu_custom_call.1} parent=1 // loop_header
      %s15 = sphi 0, %s19
      %p16 = scmp.ge.s32.totalorder %s15, 4
      %s25 = sphi 0, %s27
      %s28 = sphi 0, %s25
      %s29 = sphi 0, %s28
      %s45 = sphi 0, %s29
      %s49 = sphi 0, %s49
      %s51 = sphi 0, %s49
      %s52 = sphi 0, %s51
      %s66 = sphi 0, %s52
      %s70 = sphi 0, %s70
      %s72 = sphi 0, %s70
      %s73 = sphi 0, %s72
      %s87 = sphi 0, %s73
      %s93 = sphi 0, %s95
      %s96 = sphi 0, %s93
      %s97 = sphi 0, %s96
      %s113 = sphi 0, %s97
    $region4: #{tpu_custom_call.1} parent=1 // loop_header_branch
      %18 = sbr.rel (%p16) target = $region8
    $region5: #{tpu_custom_call.1} parent=1 // loop_body
      %s20 = ssub.s32 %s15, 1
      %s21 = ssub.s32 %s15, 2
      %s22 = sadd.s32 %s15, 1
      %s23 = ssub.s32 %s15, %s22
      %p24 = scmp.eq.s32.totalorder %s23, 0
      %s26 = sadd.s32 %s25, 1
      %s27 = scalar_select %p24, %s25, %s26
      %p30 = pneg %p24
      %p31 = scmp.eq.s32.totalorder %s15, 1
      %p32 = por %p30, %p31
      %p33 = scmp.ne.s32.totalorder %s25, %s28
      %p34 = scmp.eq.s32.totalorder %s15, 0
      %p35 = por %p33, %p34
      %p36 = scmp.ne.s32.totalorder %s25, %s28
      %p37 = scmp.eq.s32.totalorder %s20, 1
      %p38 = por %p36, %p37
      %p39 = scmp.ne.s32.totalorder %s28, %s29
      %p40 = scmp.eq.s32.totalorder %s20, 0
      %p41 = por %p39, %p40
      %p42 = scmp.ne.s32.totalorder %s28, %s29
      %p43 = scmp.eq.s32.totalorder %s21, 1
      %p44 = por %p42, %p43
      %p46 = scmp.ne.s32.totalorder %s29, %s45
      %p47 = scmp.eq.s32.totalorder %s21, 0
      %p48 = por %p46, %p47
      %s50 = sadd.s32 %s49, 1
      %p53 = scmp.eq.s32.totalorder %s15, 1
      %p54 = scmp.ne.s32.totalorder %s49, %s51
      %p55 = scmp.eq.s32.totalorder %s15, 0
      %p56 = por %p54, %p55
      %p57 = scmp.ne.s32.totalorder %s49, %s51
      %p58 = scmp.eq.s32.totalorder %s20, 1
      %p59 = por %p57, %p58
      %p60 = scmp.ne.s32.totalorder %s51, %s52
      %p61 = scmp.eq.s32.totalorder %s20, 0
      %p62 = por %p60, %p61
      %p63 = scmp.ne.s32.totalorder %s51, %s52
      %p64 = scmp.eq.s32.totalorder %s21, 1
      %p65 = por %p63, %p64
      %p67 = scmp.ne.s32.totalorder %s52, %s66
      %p68 = scmp.eq.s32.totalorder %s21, 0
      %p69 = por %p67, %p68
      %s71 = sadd.s32 %s70, 1
      %p74 = scmp.eq.s32.totalorder %s15, 1
      %p75 = scmp.ne.s32.totalorder %s70, %s72
      %p76 = scmp.eq.s32.totalorder %s15, 0
      %p77 = por %p75, %p76
      %p78 = scmp.ne.s32.totalorder %s70, %s72
      %p79 = scmp.eq.s32.totalorder %s20, 1
      %p80 = por %p78, %p79
      %p81 = scmp.ne.s32.totalorder %s72, %s73
      %p82 = scmp.eq.s32.totalorder %s20, 0
      %p83 = por %p81, %p82
      %p84 = scmp.ne.s32.totalorder %s72, %s73
      %p85 = scmp.eq.s32.totalorder %s21, 1
      %p86 = por %p84, %p85
      %p88 = scmp.ne.s32.totalorder %s73, %s87
      %p89 = scmp.eq.s32.totalorder %s21, 0
      %p90 = por %p88, %p89
      %s91 = ssub.s32 %s15, %s22
      %p92 = scmp.eq.s32.totalorder %s91, 0
      %s94 = sadd.s32 %s93, 1
      %s95 = scalar_select %p92, %s93, %s94
      %p98 = pneg %p92
      %p99 = scmp.eq.s32.totalorder %s15, 1
      %p100 = por %p98, %p99
      %p101 = scmp.ne.s32.totalorder %s93, %s96
      %p102 = scmp.eq.s32.totalorder %s15, 0
      %p103 = por %p101, %p102
      %p104 = scmp.ne.s32.totalorder %s93, %s96
      %p105 = scmp.eq.s32.totalorder %s20, 1
      %p106 = por %p104, %p105
      %p107 = scmp.ne.s32.totalorder %s96, %s97
      %p108 = scmp.eq.s32.totalorder %s20, 0
      %p109 = por %p107, %p108
      %p110 = scmp.ne.s32.totalorder %s96, %s97
      %p111 = scmp.eq.s32.totalorder %s21, 1
      %p112 = por %p110, %p111
      %p114 = scmp.ne.s32.totalorder %s97, %s113
      %p115 = scmp.eq.s32.totalorder %s21, 0
      %p116 = por %p114, %p115
      %p117 = scmp.le.s32.totalorder 1, %s15
      %p118 = scmp.lt.s32.totalorder %s15, 3
      %p119 = pnand %p117, %p118
      %p120 = pneg %p119
      // Predicated region
      $region9: #{tpu_custom_call.1} parent=5 // pred_check
        _
      $region10: #{tpu_custom_call.1} parent=5 // pred_check_branch
        %122 = sbr.rel (%p119) target = $region12
      $region11: #{tpu_custom_call.1} parent=5 // pred_region
        %s123 = ssub.s32 %s15, 1
        // Predicated region
        $region13: #{tpu_custom_call.1} parent=11 // pred_check
          %p124 = pneg %p62
        $region14: #{tpu_custom_call.1} parent=11 // pred_check_branch
          %126 = sbr.rel (%p124) target = $region16
        $region15: #{tpu_custom_call.1} parent=11 // pred_region
          _
        $region16: #{tpu_custom_call.1} parent=11 // pred_fallthru
          _
        // Predicated region
        $region17: #{tpu_custom_call.1} parent=11 // pred_check
          %p127 = pneg %p83
        $region18: #{tpu_custom_call.1} parent=11 // pred_check_branch
          %129 = sbr.rel (%p127) target = $region20
        $region19: #{tpu_custom_call.1} parent=11 // pred_region
          _
        $region20: #{tpu_custom_call.1} parent=11 // pred_fallthru
          _
      $region12: #{tpu_custom_call.1} parent=5 // pred_fallthru
        _
      %p130 = scmp.lt.s32.totalorder %s15, 2
      // Predicated region
      $region21: #{tpu_custom_call.1} parent=5 // pred_check
        %p131 = pneg %p130
      $region22: #{tpu_custom_call.1} parent=5 // pred_check_branch
        %133 = sbr.rel (%p131) target = $region24
      $region23: #{tpu_custom_call.1} parent=5 // pred_region
        // Predicated region
        $region25: #{tpu_custom_call.1} parent=23 // pred_check
          %p134 = pneg %p35
        $region26: #{tpu_custom_call.1} parent=23 // pred_check_branch
          %136 = sbr.rel (%p134) target = $region28
        $region27: #{tpu_custom_call.1} parent=23 // pred_region
          %s137 = sand.u32 %s25, 1
          %s138 = scalar_lea.sflag [#allocation3], %s137
          %s139 = sand.u32 %s25, 1
          %s140 = smul.addr %s139, 64
          %s141 = scalar_lea.vmem [#allocation2], %s140
          %s142 = smul.u32 4, %s15
          %s144 = ssub.s32 1024, 1024
          %145 = vsyncadd %s138, %s144
          %s146 = smul.addr %s142, 2
          %s147 = smul.addr %s146, 128
          %s148 = scalar_lea.hbm %s0, %s147
          %s149 = sshll.u32 %s141, 4
          %s150 = int_to_ptr.vmem [resolvable:$true] %s149
          %155 = dma.hbm_to_vmem [thread:$0]  %s148, 1024, %s150, %s138, 128, 128, 8
        $region28: #{tpu_custom_call.1} parent=23 // pred_fallthru
          _
      $region24: #{tpu_custom_call.1} parent=5 // pred_fallthru
        _
      %p156 = scmp.le.s32.totalorder 1, %s15
      %p157 = scmp.lt.s32.totalorder %s15, 3
      %p158 = pnand %p156, %p157
      %p159 = pneg %p158
      // Predicated region
      $region29: #{tpu_custom_call.1} parent=5 // pred_check
        _
      $region30: #{tpu_custom_call.1} parent=5 // pred_check_branch
        %161 = sbr.rel (%p158) target = $region32
      $region31: #{tpu_custom_call.1} parent=5 // pred_region
        %s162 = ssub.s32 %s15, 1
        %s163 = sand.u32 %s28, 1
        %s164 = scalar_lea.sflag [#allocation3], %s163
        %s165 = sand.u32 %s28, 1
        %s166 = smul.addr %s165, 64
        %s167 = scalar_lea.vmem [#allocation2], %s166
        // Predicated region
        $region33: #{tpu_custom_call.1} parent=31 // pred_check
          %p168 = pneg %p41
        $region34: #{tpu_custom_call.1} parent=31 // pred_check_branch
          %170 = sbr.rel (%p168) target = $region36
        $region35: #{tpu_custom_call.1} parent=31 // pred_region
          %171 = dma.done %s164, 1024
        $region36: #{tpu_custom_call.1} parent=31 // pred_fallthru
          _
        %s172 = sand.u32 %s28, 1
        %s173 = scalar_lea.sflag [#allocation3], %s172
        %s174 = sand.u32 %s28, 1
        %s175 = smul.addr %s174, 64
        %s176 = scalar_lea.vmem [#allocation2], %s175
        %p177 = pneg %p41
        %p178 = pneg %p38
        %p179 = pneg %p62
        %p180 = pneg %p59
        %p181 = pneg %p83
        %p182 = pneg %p80
        %p183 = pneg %p109
        %p184 = pneg %p106
        %s185 = sand.u32 %s96, 1
        %s186 = scalar_lea.sflag [#allocation4], %s185
        %s187 = sand.u32 %s96, 1
        %s188 = smul.addr %s187, 352
        %s189 = scalar_lea.vmem [#allocation5], %s188
        %s190 = smul.u32 4, %s20
        %s191 = smul.u32 4, %s20
        %v193 = vld [vmem:[%s1] sm:$0xf]
        %v194 = vld [vmem:[%s1 + $0x4] sm:$0xf]
        %v195 = vld [vmem:[%s1 + $0x8] sm:$0xf]
        %v196 = vld [vmem:[%s1 + $0xc] sm:$0xf]
        %v197 = vld [vmem:[%s1 + $0x10] sm:$0xf]
        %v198 = vld [vmem:[%s1 + $0x14] sm:$0xf]
        %v199 = vld [vmem:[%s1 + $0x18] sm:$0xf]
        %v200 = vld [vmem:[%s1 + $0x1c] sm:$0xf]
        %v201 = vld [vmem:[%s1 + $0x20] sm:$0xf]
        %v202 = vld [vmem:[%s1 + $0x24] sm:$0xf]
        %v203 = vld [vmem:[%s1 + $0x28] sm:$0xf]
        %v204 = vld [vmem:[%s2] sm:$0xf]
        %v205 = vld [vmem:[%s2 + $0x4] sm:$0xf]
        %v206 = vld [vmem:[%s167] sm:$0xff]
        %v207 = vld [vmem:[%s167 + $0x8] sm:$0xff]
        %v208 = vld [vmem:[%s167 + $0x10] sm:$0xff]
        %v209 = vld [vmem:[%s167 + $0x18] sm:$0xff]
        %v210 = vld [vmem:[%s167 + $0x20] sm:$0xff]
        %v211 = vld [vmem:[%s167 + $0x28] sm:$0xff]
        %v212 = vld [vmem:[%s167 + $0x30] sm:$0xff]
        %v213 = vld [vmem:[%s167 + $0x38] sm:$0xff]
        %v214 = vpack.c.bf16 %v207, %v206
        %v215 = vpack.c.bf16 %v209, %v208
        %v216 = vpack.c.bf16 %v211, %v210
        %v217 = vpack.c.bf16 %v213, %v212
        %v220 = vunpack.c.l.b16 %v204
        %v221 = vunpack.c.l.b16 %v205
        %v222 = vpack.c.b16 %v221, %v220
        %vm224 = vcmask 130048
        %v226 = vsel %vm224, %v214, 0
        %v229 = vsel %vm224, %v215, 0
        %v232 = vsel %vm224, %v216, 0
        %v235 = vsel %vm224, %v217, 0
        %237 = vmatprep.subr.bf16.mxu0 0
        %238 = vmatpush1.bf16.msra.mxu0 %v222
        %239 = vmatprep.subr.bf16.mxu0 0
        %240 = vmatpush1.bf16.msra.mxu0 0
        %241 = vmatprep.subr.bf16.mxu0 0
        %242 = vmatpush1.bf16.msra.mxu0 0
        %243 = vmatprep.subr.bf16.mxu0 0
        %244 = vmatpush1.bf16.msra.mxu0 0
        %245 = vmatprep.subr.bf16.mxu0 0
        %246 = vmatpush1.bf16.msra.mxu0 0
        %247 = vmatprep.subr.bf16.mxu0 0
        %248 = vmatpush1.bf16.msra.mxu0 0
        %249 = vmatprep.subr.bf16.mxu0 0
        %250 = vmatpush1.bf16.msra.mxu0 0
        %251 = vmatprep.subr.bf16.mxu0 0
        %252 = vmatpush1.bf16.msra.mxu0 0
        %253 = vmatprep.subr.bf16.mxu0 0
        %254 = vmatpush1.bf16.msra.mxu0 0
        %255 = vmatprep.subr.bf16.mxu0 0
        %256 = vmatpush1.bf16.msra.mxu0 0
        %257 = vmatprep.subr.bf16.mxu0 0
        %258 = vmatpush1.bf16.msra.mxu0 0
        %259 = vmatprep.subr.bf16.mxu0 0
        %260 = vmatpush1.bf16.msra.mxu0 0
        %261 = vmatprep.subr.bf16.mxu0 0
        %262 = vmatpush1.bf16.msra.mxu0 0
        %263 = vmatprep.subr.bf16.mxu0 0
        %264 = vmatpush1.bf16.msra.mxu0 0
        %265 = vmatprep.subr.bf16.mxu0 0
        %266 = vmatpush1.bf16.msra.mxu0 0
        %267 = vmatprep.subr.bf16.mxu0 0
        %268 = vmatpush1.bf16.msra.mxu0 0
        %269 = vmatprep.mubr.bf16.mxu0 0
        %270 = vmatmul.mubr.bf16.gmra.mrb[0].mxu0 %v226
        %v271 = vpop.f32.mrb[0].mxu0
        %v272 = vadd.f32 0.0, %v271
        %v273 = vpop.f32.mrb[0].mxu0
        %v274 = vpop.f32.mrb[0].mxu0
        %v275 = vadd.f32 0.0, %v274
        %v276 = vpop.f32.mrb[0].mxu0
        %277 = vmatprep.mubr.bf16.mxu0 0
        %278 = vmatmul.mubr.bf16.gmra.mrb[0].mxu0 %v229
        %v279 = vpop.f32.mrb[0].mxu0
        %v280 = vadd.f32 0.0, %v279
        %v281 = vpop.f32.mrb[0].mxu0
        %v282 = vpop.f32.mrb[0].mxu0
        %v283 = vadd.f32 0.0, %v282
        %v284 = vpop.f32.mrb[0].mxu0
        %285 = vmatprep.mubr.bf16.mxu0 0
        %286 = vmatmul.mubr.bf16.gmra.mrb[0].mxu0 %v232
        %v287 = vpop.f32.mrb[0].mxu0
        %v288 = vadd.f32 0.0, %v287
        %v289 = vpop.f32.mrb[0].mxu0
        %v290 = vpop.f32.mrb[0].mxu0
        %v291 = vadd.f32 0.0, %v290
        %v292 = vpop.f32.mrb[0].mxu0
        %293 = vmatprep.mubr.bf16.mxu0 0
        %294 = vmatmul.mubr.bf16.gmra.mrb[0].mxu0 %v235
        %v295 = vpop.f32.mrb[0].mxu0
        %v296 = vadd.f32 0.0, %v295
        %v297 = vpop.f32.mrb[0].mxu0
        %v298 = vpop.f32.mrb[0].mxu0
        %v299 = vadd.f32 0.0, %v298
        %v300 = vpop.f32.mrb[0].mxu0
        %301 = vdwg.mxu0
        %v302 = vpack.c.bf16 %v275, %v272
        %v303 = vpack.c.bf16 %v283, %v280
        %v304 = vpack.c.bf16 %v291, %v288
        %v305 = vpack.c.bf16 %v299, %v296
        %v317 = vunpack.c.l.b16 %v193
        %v318 = vunpack.c.l.b16 %v194
        %v319 = vunpack.c.l.b16 %v195
        %v320 = vunpack.c.l.b16 %v196
        %v321 = vunpack.c.l.b16 %v197
        %v322 = vunpack.c.l.b16 %v198
        %v323 = vunpack.c.l.b16 %v199
        %v324 = vunpack.c.l.b16 %v200
        %v325 = vunpack.c.l.b16 %v201
        %v326 = vunpack.c.l.b16 %v202
        %v327 = vunpack.c.l.b16 %v203
        %v328 = vpack.c.b16 %v318, %v317
        %v329 = vpack.c.b16 %v320, %v319
        %v330 = vpack.c.b16 %v322, %v321
        %v331 = vpack.c.b16 %v324, %v323
        %v332 = vpack.c.b16 %v326, %v325
        %v333 = vpack.c.b16 %v327, %v327
        %v335 = vsel %vm224, %v328, 0
        %v338 = vsel %vm224, %v329, 0
        %v341 = vsel %vm224, %v330, 0
        %v344 = vsel %vm224, %v331, 0
        %v347 = vsel %vm224, %v332, 0
        %v350 = vsel %vm224, %v333, 0
        %352 = vmatprep.subr.bf16.mxu0 0
        %353 = vmatpush1.bf16.msra.mxu0 %v302
        %354 = vmatprep.subr.bf16.mxu0 0
        %355 = vmatpush1.bf16.msra.mxu0 0
        %356 = vmatprep.subr.bf16.mxu0 0
        %357 = vmatpush1.bf16.msra.mxu0 0
        %358 = vmatprep.subr.bf16.mxu0 0
        %359 = vmatpush1.bf16.msra.mxu0 0
        %360 = vmatprep.subr.bf16.mxu0 0
        %361 = vmatpush1.bf16.msra.mxu0 0
        %362 = vmatprep.subr.bf16.mxu0 0
        %363 = vmatpush1.bf16.msra.mxu0 0
        %364 = vmatprep.subr.bf16.mxu0 0
        %365 = vmatpush1.bf16.msra.mxu0 0
        %366 = vmatprep.subr.bf16.mxu0 0
        %367 = vmatpush1.bf16.msra.mxu0 0
        %368 = vmatprep.subr.bf16.mxu0 0
        %369 = vmatpush1.bf16.msra.mxu0 0
        %370 = vmatprep.subr.bf16.mxu0 0
        %371 = vmatpush1.bf16.msra.mxu0 0
        %372 = vmatprep.subr.bf16.mxu0 0
        %373 = vmatpush1.bf16.msra.mxu0 0
        %374 = vmatprep.subr.bf16.mxu0 0
        %375 = vmatpush1.bf16.msra.mxu0 0
        %376 = vmatprep.subr.bf16.mxu0 0
        %377 = vmatpush1.bf16.msra.mxu0 0
        %378 = vmatprep.subr.bf16.mxu0 0
        %379 = vmatpush1.bf16.msra.mxu0 0
        %380 = vmatprep.subr.bf16.mxu0 0
        %381 = vmatpush1.bf16.msra.mxu0 0
        %382 = vmatprep.subr.bf16.mxu0 0
        %383 = vmatpush1.bf16.msra.mxu0 0
        %384 = vmatprep.mubr.bf16.mxu0 0
        %385 = vmatmul.mubr.bf16.gmra.mrb[0].mxu0 %v335
        %v386 = vpop.f32.mrb[0].mxu0
        %v387 = vadd.f32 0.0, %v386
        %v388 = vpop.f32.mrb[0].mxu0
        %v389 = vpop.f32.mrb[0].mxu0
        %v390 = vadd.f32 0.0, %v389
        %v391 = vpop.f32.mrb[0].mxu0
        %392 = vmatprep.mubr.bf16.mxu0 0
        %393 = vmatmul.mubr.bf16.gmra.mrb[0].mxu0 %v338
        %v394 = vpop.f32.mrb[0].mxu0
        %v395 = vadd.f32 0.0, %v394
        %v396 = vpop.f32.mrb[0].mxu0
        %v397 = vpop.f32.mrb[0].mxu0
        %v398 = vadd.f32 0.0, %v397
        %v399 = vpop.f32.mrb[0].mxu0
        %400 = vmatprep.mubr.bf16.mxu0 0
        %401 = vmatmul.mubr.bf16.gmra.mrb[0].mxu0 %v341
        %v402 = vpop.f32.mrb[0].mxu0
        %v403 = vadd.f32 0.0, %v402
        %v404 = vpop.f32.mrb[0].mxu0
        %v405 = vpop.f32.mrb[0].mxu0
        %v406 = vadd.f32 0.0, %v405
        %v407 = vpop.f32.mrb[0].mxu0
        %408 = vmatprep.mubr.bf16.mxu0 0
        %409 = vmatmul.mubr.bf16.gmra.mrb[0].mxu0 %v344
        %v410 = vpop.f32.mrb[0].mxu0
        %v411 = vadd.f32 0.0, %v410
        %v412 = vpop.f32.mrb[0].mxu0
        %v413 = vpop.f32.mrb[0].mxu0
        %v414 = vadd.f32 0.0, %v413
        %v415 = vpop.f32.mrb[0].mxu0
        %416 = vmatprep.mubr.bf16.mxu0 0
        %417 = vmatmul.mubr.bf16.gmra.mrb[0].mxu0 %v347
        %v418 = vpop.f32.mrb[0].mxu0
        %v419 = vadd.f32 0.0, %v418
        %v420 = vpop.f32.mrb[0].mxu0
        %v421 = vpop.f32.mrb[0].mxu0
        %v422 = vadd.f32 0.0, %v421
        %v423 = vpop.f32.mrb[0].mxu0
        %424 = vmatprep.mubr.bf16.mxu0 0
        %425 = vmatmul.mubr.bf16.gmra.mrb[0].mxu0 %v350
        %v426 = vpop.f32.mrb[0].mxu0
        %v427 = vadd.f32 0.0, %v426
        %v428 = vpop.f32.mrb[0].mxu0
        %v429 = vpop.f32.mrb[0].mxu0
        %v430 = vpop.f32.mrb[0].mxu0
        %431 = vdwg.mxu0
        %vm432 = vcmask 719872
        %433 = vst.msk [vmem:[%s189] sm:$0xff] %vm432, %v387
        %434 = vst.msk [vmem:[%s189 + $0x8] sm:$0xff] %vm432, %v390
        %435 = vst.msk [vmem:[%s189 + $0x10] sm:$0xff] %vm432, %v395
        %436 = vst.msk [vmem:[%s189 + $0x18] sm:$0xff] %vm432, %v398
        %437 = vst.msk [vmem:[%s189 + $0x20] sm:$0xff] %vm432, %v403
        %438 = vst.msk [vmem:[%s189 + $0x28] sm:$0xff] %vm432, %v406
        %439 = vst.msk [vmem:[%s189 + $0x30] sm:$0xff] %vm432, %v411
        %440 = vst.msk [vmem:[%s189 + $0x38] sm:$0xff] %vm432, %v414
        %441 = vst.msk [vmem:[%s189 + $0x40] sm:$0xff] %vm432, %v419
        %442 = vst.msk [vmem:[%s189 + $0x48] sm:$0xff] %vm432, %v422
        %443 = vst.msk [vmem:[%s189 + $0x50] sm:$0xff] %vm432, %v427
        %444 = vmatprep.subr.bf16.mxu0 0
        %445 = vmatpush1.bf16.msra.mxu0 %v303
        %446 = vmatprep.subr.bf16.mxu0 0
        %447 = vmatpush1.bf16.msra.mxu0 0
        %448 = vmatprep.subr.bf16.mxu0 0
        %449 = vmatpush1.bf16.msra.mxu0 0
        %450 = vmatprep.subr.bf16.mxu0 0
        %451 = vmatpush1.bf16.msra.mxu0 0
        %452 = vmatprep.subr.bf16.mxu0 0
        %453 = vmatpush1.bf16.msra.mxu0 0
        %454 = vmatprep.subr.bf16.mxu0 0
        %455 = vmatpush1.bf16.msra.mxu0 0
        %456 = vmatprep.subr.bf16.mxu0 0
        %457 = vmatpush1.bf16.msra.mxu0 0
        %458 = vmatprep.subr.bf16.mxu0 0
        %459 = vmatpush1.bf16.msra.mxu0 0
        %460 = vmatprep.subr.bf16.mxu0 0
        %461 = vmatpush1.bf16.msra.mxu0 0
        %462 = vmatprep.subr.bf16.mxu0 0
        %463 = vmatpush1.bf16.msra.mxu0 0
        %464 = vmatprep.subr.bf16.mxu0 0
        %465 = vmatpush1.bf16.msra.mxu0 0
        %466 = vmatprep.subr.bf16.mxu0 0
        %467 = vmatpush1.bf16.msra.mxu0 0
        %468 = vmatprep.subr.bf16.mxu0 0
        %469 = vmatpush1.bf16.msra.mxu0 0
        %470 = vmatprep.subr.bf16.mxu0 0
        %471 = vmatpush1.bf16.msra.mxu0 0
        %472 = vmatprep.subr.bf16.mxu0 0
        %473 = vmatpush1.bf16.msra.mxu0 0
        %474 = vmatprep.subr.bf16.mxu0 0
        %475 = vmatpush1.bf16.msra.mxu0 0
        %476 = vmatprep.mubr.bf16.mxu0 0
        %477 = vmatmul.mubr.bf16.gmra.mrb[0].mxu0 %v335
        %v478 = vpop.f32.mrb[0].mxu0
        %v479 = vadd.f32 0.0, %v478
        %v480 = vpop.f32.mrb[0].mxu0
        %v481 = vpop.f32.mrb[0].mxu0
        %v482 = vadd.f32 0.0, %v481
        %v483 = vpop.f32.mrb[0].mxu0
        %484 = vmatprep.mubr.bf16.mxu0 0
        %485 = vmatmul.mubr.bf16.gmra.mrb[0].mxu0 %v338
        %v486 = vpop.f32.mrb[0].mxu0
        %v487 = vadd.f32 0.0, %v486
        %v488 = vpop.f32.mrb[0].mxu0
        %v489 = vpop.f32.mrb[0].mxu0
        %v490 = vadd.f32 0.0, %v489
        %v491 = vpop.f32.mrb[0].mxu0
        %492 = vmatprep.mubr.bf16.mxu0 0
        %493 = vmatmul.mubr.bf16.gmra.mrb[0].mxu0 %v341
        %v494 = vpop.f32.mrb[0].mxu0
        %v495 = vadd.f32 0.0, %v494
        %v496 = vpop.f32.mrb[0].mxu0
        %v497 = vpop.f32.mrb[0].mxu0
        %v498 = vadd.f32 0.0, %v497
        %v499 = vpop.f32.mrb[0].mxu0
        %500 = vmatprep.mubr.bf16.mxu0 0
        %501 = vmatmul.mubr.bf16.gmra.mrb[0].mxu0 %v344
        %v502 = vpop.f32.mrb[0].mxu0
        %v503 = vadd.f32 0.0, %v502
        %v504 = vpop.f32.mrb[0].mxu0
        %v505 = vpop.f32.mrb[0].mxu0
        %v506 = vadd.f32 0.0, %v505
        %v507 = vpop.f32.mrb[0].mxu0
        %508 = vmatprep.mubr.bf16.mxu0 0
        %509 = vmatmul.mubr.bf16.gmra.mrb[0].mxu0 %v347
        %v510 = vpop.f32.mrb[0].mxu0
        %v511 = vadd.f32 0.0, %v510
        %v512 = vpop.f32.mrb[0].mxu0
        %v513 = vpop.f32.mrb[0].mxu0
        %v514 = vadd.f32 0.0, %v513
        %v515 = vpop.f32.mrb[0].mxu0
        %516 = vmatprep.mubr.bf16.mxu0 0
        %517 = vmatmul.mubr.bf16.gmra.mrb[0].mxu0 %v350
        %v518 = vpop.f32.mrb[0].mxu0
        %v519 = vadd.f32 0.0, %v518
        %v520 = vpop.f32.mrb[0].mxu0
        %v521 = vpop.f32.mrb[0].mxu0
        %v522 = vpop.f32.mrb[0].mxu0
        %523 = vdwg.mxu0
        %s524 = scalar_lea.vmem %s189, 88 [#allocation5]
        %525 = vst.msk [vmem:[%s524] sm:$0xff] %vm432, %v479
        %526 = vst.msk [vmem:[%s524 + $0x8] sm:$0xff] %vm432, %v482
        %527 = vst.msk [vmem:[%s524 + $0x10] sm:$0xff] %vm432, %v487
        %528 = vst.msk [vmem:[%s524 + $0x18] sm:$0xff] %vm432, %v490
        %529 = vst.msk [vmem:[%s524 + $0x20] sm:$0xff] %vm432, %v495
        %530 = vst.msk [vmem:[%s524 + $0x28] sm:$0xff] %vm432, %v498
        %531 = vst.msk [vmem:[%s524 + $0x30] sm:$0xff] %vm432, %v503
        %532 = vst.msk [vmem:[%s524 + $0x38] sm:$0xff] %vm432, %v506
        %533 = vst.msk [vmem:[%s524 + $0x40] sm:$0xff] %vm432, %v511
        %534 = vst.msk [vmem:[%s524 + $0x48] sm:$0xff] %vm432, %v514
        %535 = vst.msk [vmem:[%s524 + $0x50] sm:$0xff] %vm432, %v519
        %536 = vmatprep.subr.bf16.mxu0 0
        %537 = vmatpush1.bf16.msra.mxu0 %v304
        %538 = vmatprep.subr.bf16.mxu0 0
        %539 = vmatpush1.bf16.msra.mxu0 0
        %540 = vmatprep.subr.bf16.mxu0 0
        %541 = vmatpush1.bf16.msra.mxu0 0
        %542 = vmatprep.subr.bf16.mxu0 0
        %543 = vmatpush1.bf16.msra.mxu0 0
        %544 = vmatprep.subr.bf16.mxu0 0
        %545 = vmatpush1.bf16.msra.mxu0 0
        %546 = vmatprep.subr.bf16.mxu0 0
        %547 = vmatpush1.bf16.msra.mxu0 0
        %548 = vmatprep.subr.bf16.mxu0 0
        %549 = vmatpush1.bf16.msra.mxu0 0
        %550 = vmatprep.subr.bf16.mxu0 0
        %551 = vmatpush1.bf16.msra.mxu0 0
        %552 = vmatprep.subr.bf16.mxu0 0
        %553 = vmatpush1.bf16.msra.mxu0 0
        %554 = vmatprep.subr.bf16.mxu0 0
        %555 = vmatpush1.bf16.msra.mxu0 0
        %556 = vmatprep.subr.bf16.mxu0 0
        %557 = vmatpush1.bf16.msra.mxu0 0
        %558 = vmatprep.subr.bf16.mxu0 0
        %559 = vmatpush1.bf16.msra.mxu0 0
        %560 = vmatprep.subr.bf16.mxu0 0
        %561 = vmatpush1.bf16.msra.mxu0 0
        %562 = vmatprep.subr.bf16.mxu0 0
        %563 = vmatpush1.bf16.msra.mxu0 0
        %564 = vmatprep.subr.bf16.mxu0 0
        %565 = vmatpush1.bf16.msra.mxu0 0
        %566 = vmatprep.subr.bf16.mxu0 0
        %567 = vmatpush1.bf16.msra.mxu0 0
        %568 = vmatprep.mubr.bf16.mxu0 0
        %569 = vmatmul.mubr.bf16.gmra.mrb[0].mxu0 %v335
        %v570 = vpop.f32.mrb[0].mxu0
        %v571 = vadd.f32 0.0, %v570
        %v572 = vpop.f32.mrb[0].mxu0
        %v573 = vpop.f32.mrb[0].mxu0
        %v574 = vadd.f32 0.0, %v573
        %v575 = vpop.f32.mrb[0].mxu0
        %576 = vmatprep.mubr.bf16.mxu0 0
        %577 = vmatmul.mubr.bf16.gmra.mrb[0].mxu0 %v338
        %v578 = vpop.f32.mrb[0].mxu0
        %v579 = vadd.f32 0.0, %v578
        %v580 = vpop.f32.mrb[0].mxu0
        %v581 = vpop.f32.mrb[0].mxu0
        %v582 = vadd.f32 0.0, %v581
        %v583 = vpop.f32.mrb[0].mxu0
        %584 = vmatprep.mubr.bf16.mxu0 0
        %585 = vmatmul.mubr.bf16.gmra.mrb[0].mxu0 %v341
        %v586 = vpop.f32.mrb[0].mxu0
        %v587 = vadd.f32 0.0, %v586
        %v588 = vpop.f32.mrb[0].mxu0
        %v589 = vpop.f32.mrb[0].mxu0
        %v590 = vadd.f32 0.0, %v589
        %v591 = vpop.f32.mrb[0].mxu0
        %592 = vmatprep.mubr.bf16.mxu0 0
        %593 = vmatmul.mubr.bf16.gmra.mrb[0].mxu0 %v344
        %v594 = vpop.f32.mrb[0].mxu0
        %v595 = vadd.f32 0.0, %v594
        %v596 = vpop.f32.mrb[0].mxu0
        %v597 = vpop.f32.mrb[0].mxu0
        %v598 = vadd.f32 0.0, %v597
        %v599 = vpop.f32.mrb[0].mxu0
        %600 = vmatprep.mubr.bf16.mxu0 0
        %601 = vmatmul.mubr.bf16.gmra.mrb[0].mxu0 %v347
        %v602 = vpop.f32.mrb[0].mxu0
        %v603 = vadd.f32 0.0, %v602
        %v604 = vpop.f32.mrb[0].mxu0
        %v605 = vpop.f32.mrb[0].mxu0
        %v606 = vadd.f32 0.0, %v605
        %v607 = vpop.f32.mrb[0].mxu0
        %608 = vmatprep.mubr.bf16.mxu0 0
        %609 = vmatmul.mubr.bf16.gmra.mrb[0].mxu0 %v350
        %v610 = vpop.f32.mrb[0].mxu0
        %v611 = vadd.f32 0.0, %v610
        %v612 = vpop.f32.mrb[0].mxu0
        %v613 = vpop.f32.mrb[0].mxu0
        %v614 = vpop.f32.mrb[0].mxu0
        %615 = vdwg.mxu0
        %s616 = scalar_lea.vmem %s189, 176 [#allocation5]
        %617 = vst.msk [vmem:[%s616] sm:$0xff] %vm432, %v571
        %618 = vst.msk [vmem:[%s616 + $0x8] sm:$0xff] %vm432, %v574
        %619 = vst.msk [vmem:[%s616 + $0x10] sm:$0xff] %vm432, %v579
        %620 = vst.msk [vmem:[%s616 + $0x18] sm:$0xff] %vm432, %v582
        %621 = vst.msk [vmem:[%s616 + $0x20] sm:$0xff] %vm432, %v587
        %622 = vst.msk [vmem:[%s616 + $0x28] sm:$0xff] %vm432, %v590
        %623 = vst.msk [vmem:[%s616 + $0x30] sm:$0xff] %vm432, %v595
        %624 = vst.msk [vmem:[%s616 + $0x38] sm:$0xff] %vm432, %v598
        %625 = vst.msk [vmem:[%s616 + $0x40] sm:$0xff] %vm432, %v603
        %626 = vst.msk [vmem:[%s616 + $0x48] sm:$0xff] %vm432, %v606
        %627 = vst.msk [vmem:[%s616 + $0x50] sm:$0xff] %vm432, %v611
        %628 = vmatprep.subr.bf16.mxu0 0
        %629 = vmatpush1.bf16.msra.mxu0 %v305
        %630 = vmatprep.subr.bf16.mxu0 0
        %631 = vmatpush1.bf16.msra.mxu0 0
        %632 = vmatprep.subr.bf16.mxu0 0
        %633 = vmatpush1.bf16.msra.mxu0 0
        %634 = vmatprep.subr.bf16.mxu0 0
        %635 = vmatpush1.bf16.msra.mxu0 0
        %636 = vmatprep.subr.bf16.mxu0 0
        %637 = vmatpush1.bf16.msra.mxu0 0
        %638 = vmatprep.subr.bf16.mxu0 0
        %639 = vmatpush1.bf16.msra.mxu0 0
        %640 = vmatprep.subr.bf16.mxu0 0
        %641 = vmatpush1.bf16.msra.mxu0 0
        %642 = vmatprep.subr.bf16.mxu0 0
        %643 = vmatpush1.bf16.msra.mxu0 0
        %644 = vmatprep.subr.bf16.mxu0 0
        %645 = vmatpush1.bf16.msra.mxu0 0
        %646 = vmatprep.subr.bf16.mxu0 0
        %647 = vmatpush1.bf16.msra.mxu0 0
        %648 = vmatprep.subr.bf16.mxu0 0
        %649 = vmatpush1.bf16.msra.mxu0 0
        %650 = vmatprep.subr.bf16.mxu0 0
        %651 = vmatpush1.bf16.msra.mxu0 0
        %652 = vmatprep.subr.bf16.mxu0 0
        %653 = vmatpush1.bf16.msra.mxu0 0
        %654 = vmatprep.subr.bf16.mxu0 0
        %655 = vmatpush1.bf16.msra.mxu0 0
        %656 = vmatprep.subr.bf16.mxu0 0
        %657 = vmatpush1.bf16.msra.mxu0 0
        %658 = vmatprep.subr.bf16.mxu0 0
        %659 = vmatpush1.bf16.msra.mxu0 0
        %660 = vmatprep.mubr.bf16.mxu0 0
        %661 = vmatmul.mubr.bf16.gmra.mrb[0].mxu0 %v335
        %v662 = vpop.f32.mrb[0].mxu0
        %v663 = vadd.f32 0.0, %v662
        %v664 = vpop.f32.mrb[0].mxu0
        %v665 = vpop.f32.mrb[0].mxu0
        %v666 = vadd.f32 0.0, %v665
        %v667 = vpop.f32.mrb[0].mxu0
        %668 = vmatprep.mubr.bf16.mxu0 0
        %669 = vmatmul.mubr.bf16.gmra.mrb[0].mxu0 %v338
        %v670 = vpop.f32.mrb[0].mxu0
        %v671 = vadd.f32 0.0, %v670
        %v672 = vpop.f32.mrb[0].mxu0
        %v673 = vpop.f32.mrb[0].mxu0
        %v674 = vadd.f32 0.0, %v673
        %v675 = vpop.f32.mrb[0].mxu0
        %676 = vmatprep.mubr.bf16.mxu0 0
        %677 = vmatmul.mubr.bf16.gmra.mrb[0].mxu0 %v341
        %v678 = vpop.f32.mrb[0].mxu0
        %v679 = vadd.f32 0.0, %v678
        %v680 = vpop.f32.mrb[0].mxu0
        %v681 = vpop.f32.mrb[0].mxu0
        %v682 = vadd.f32 0.0, %v681
        %v683 = vpop.f32.mrb[0].mxu0
        %684 = vmatprep.mubr.bf16.mxu0 0
        %685 = vmatmul.mubr.bf16.gmra.mrb[0].mxu0 %v344
        %v686 = vpop.f32.mrb[0].mxu0
        %v687 = vadd.f32 0.0, %v686
        %v688 = vpop.f32.mrb[0].mxu0
        %v689 = vpop.f32.mrb[0].mxu0
        %v690 = vadd.f32 0.0, %v689
        %v691 = vpop.f32.mrb[0].mxu0
        %692 = vmatprep.mubr.bf16.mxu0 0
        %693 = vmatmul.mubr.bf16.gmra.mrb[0].mxu0 %v347
        %v694 = vpop.f32.mrb[0].mxu0
        %v695 = vadd.f32 0.0, %v694
        %v696 = vpop.f32.mrb[0].mxu0
        %v697 = vpop.f32.mrb[0].mxu0
        %v698 = vadd.f32 0.0, %v697
        %v699 = vpop.f32.mrb[0].mxu0
        %700 = vmatprep.mubr.bf16.mxu0 0
        %701 = vmatmul.mubr.bf16.gmra.mrb[0].mxu0 %v350
        %v702 = vpop.f32.mrb[0].mxu0
        %v703 = vadd.f32 0.0, %v702
        %v704 = vpop.f32.mrb[0].mxu0
        %v705 = vpop.f32.mrb[0].mxu0
        %v706 = vpop.f32.mrb[0].mxu0
        %707 = vdwg.mxu0
        %s708 = scalar_lea.vmem %s189, 264 [#allocation5]
        %709 = vst.msk [vmem:[%s708] sm:$0xff] %vm432, %v663
        %710 = vst.msk [vmem:[%s708 + $0x8] sm:$0xff] %vm432, %v666
        %711 = vst.msk [vmem:[%s708 + $0x10] sm:$0xff] %vm432, %v671
        %712 = vst.msk [vmem:[%s708 + $0x18] sm:$0xff] %vm432, %v674
        %713 = vst.msk [vmem:[%s708 + $0x20] sm:$0xff] %vm432, %v679
        %714 = vst.msk [vmem:[%s708 + $0x28] sm:$0xff] %vm432, %v682
        %715 = vst.msk [vmem:[%s708 + $0x30] sm:$0xff] %vm432, %v687
        %716 = vst.msk [vmem:[%s708 + $0x38] sm:$0xff] %vm432, %v690
        %717 = vst.msk [vmem:[%s708 + $0x40] sm:$0xff] %vm432, %v695
        %718 = vst.msk [vmem:[%s708 + $0x48] sm:$0xff] %vm432, %v698
        %719 = vst.msk [vmem:[%s708 + $0x50] sm:$0xff] %vm432, %v703
        %s720 = sand.u32 %s96, 1
        %s721 = scalar_lea.sflag [#allocation4], %s720
        %s722 = sand.u32 %s96, 1
        %s723 = smul.addr %s722, 352
        %s724 = scalar_lea.vmem [#allocation5], %s723
        // Predicated region
        $region37: #{tpu_custom_call.1} parent=31 // pred_check
          %p725 = pneg %p106
        $region38: #{tpu_custom_call.1} parent=31 // pred_check_branch
          %727 = sbr.rel (%p725) target = $region40
        $region39: #{tpu_custom_call.1} parent=31 // pred_region
          %s728 = smul.u32 4, %s20
          %s730 = ssub.s32 5632, 5632
          %731 = vsyncadd %s721, %s730
          %s732 = smul.addr %s728, 11
          %s733 = smul.addr %s732, 128
          %s734 = scalar_lea.hbm %s3, %s733
          %s735 = sshll.u32 %s724, 4
          %s736 = int_to_ptr.vmem [resolvable:$true] %s735
          %741 = dma.vmem_to_hbm [thread:$0]  %s736, 5632, %s734, %s721, 128, 128, 8
        $region40: #{tpu_custom_call.1} parent=31 // pred_fallthru
          _
      $region32: #{tpu_custom_call.1} parent=5 // pred_fallthru
        _
      %p742 = scmp.le.s32.totalorder 2, %s15
      // Predicated region
      $region41: #{tpu_custom_call.1} parent=5 // pred_check
        %p743 = pneg %p742
      $region42: #{tpu_custom_call.1} parent=5 // pred_check_branch
        %745 = sbr.rel (%p743) target = $region44
      $region43: #{tpu_custom_call.1} parent=5 // pred_region
        %s746 = ssub.s32 %s15, 2
        // Predicated region
        $region45: #{tpu_custom_call.1} parent=43 // pred_check
          %p747 = pneg %p112
        $region46: #{tpu_custom_call.1} parent=43 // pred_check_branch
          %749 = sbr.rel (%p747) target = $region48
        $region47: #{tpu_custom_call.1} parent=43 // pred_region
          %s750 = sand.u32 %s97, 1
          %s751 = scalar_lea.sflag [#allocation4], %s750
          %s752 = sand.u32 %s97, 1
          %s753 = smul.addr %s752, 352
          %s754 = scalar_lea.vmem [#allocation5], %s753
          %755 = dma.done %s751, 5632
        $region48: #{tpu_custom_call.1} parent=43 // pred_fallthru
          _
      $region44: #{tpu_custom_call.1} parent=5 // pred_fallthru
        _
    $region6: #{tpu_custom_call.1} parent=1 // loop_footer
      %s19 = sadd.s32 1, %s15
    $region7: #{tpu_custom_call.1} parent=1 // loop_footer_branch
      %14 = sbr.rel target = $region3
    $region8: #{tpu_custom_call.1} parent=1 // loop_exit
      _
    %756 = vsyncpa [#allocation3], 1
    %s757 = scalar_lea.sflag [#allocation3], 1
    %758 = vsyncpa %s757, 1
    %759 = vsyncpa [#allocation4], 1
    %s760 = scalar_lea.sflag [#allocation4], 1
    %761 = vsyncpa %s760, 1

// kernel: tpu_custom_call.1
$region0: #{tpu_custom_call.1}
  #allocation0 [shape = 'u32[]', space=smem, size = 0x4, offset = 0x4, fixed_abs, tag = 'smem constant byte address 0x4 - core index']
  #allocation1 [shape = 'u32[144,128]{1,0:T(1,128)}', space=vmem, size = 0x12000, scoped, tag = 'internal scratch']
  %s0 = inlined_call_operand.hbm [shape: f32[8,16,16], index: 0, kind: input, shape index: {}]
  %s1 = inlined_call_operand.vmem [shape: bf16[88,16], index: 1, kind: input, shape index: {}]
  %s2 = inlined_call_operand.vmem [shape: bf16[16,88], index: 2, kind: input, shape index: {}]
  %s3 = inlined_call_operand.hbm [shape: f32[8,88,88], index: 3, kind: output, shape index: {}]
  %s4 = sld [smem:[#allocation0]]
  $region49: #{tpu_custom_call.1} parent=0
    _
  %s6 = ssub.s32 1, %s4
  %s7 = scalar_select 0, %s6, %s4
  $region1: #{tpu_custom_call.1} parent=0
    #allocation2 [shape = 'u8[65536]{0}', space=vmem, size = 0x10000, scoped, tag = 'input window, operand 0']
    #allocation3 [shape = 's32[2]{0}', space=sflag, size = 0x8, scoped, tag = 'scoped memory for tpu_custom_call.1']
    #allocation4 [shape = 's32[2]{0}', space=sflag, size = 0x8, scoped, tag = 'scoped memory for tpu_custom_call.1']
    #allocation5 [shape = 'u8[360448]{0}', space=vmem, size = 0x58000, scoped, tag = 'output window, operand 0']
    %8 = vsyncpa [#allocation3], 0
    %s9 = scalar_lea.sflag [#allocation3], 1
    %10 = vsyncpa %s9, 0
    %11 = vsyncpa [#allocation4], 0
    %s12 = scalar_lea.sflag [#allocation4], 1
    %13 = vsyncpa %s12, 0
    loop: start=0, step=1, limit=4
    $region2: #{tpu_custom_call.1} parent=1 // loop_pre_header
      _
    $region3: #{tpu_custom_call.1} parent=1 // loop_header
      %s15 = sphi 0, %s19
      %p16 = scmp.ge.s32.totalorder %s15, 4
      %s25 = sphi 0, %s27
      %s28 = sphi 0, %s25
      %s29 = sphi 0, %s28
      %s45 = sphi 0, %s29
      %s49 = sphi 0, %s49
      %s51 = sphi 0, %s49
      %s52 = sphi 0, %s51
      %s66 = sphi 0, %s52
      %s70 = sphi 0, %s70
      %s72 = sphi 0, %s70
      %s73 = sphi 0, %s72
      %s87 = sphi 0, %s73
      %s93 = sphi 0, %s95
      %s96 = sphi 0, %s93
      %s97 = sphi 0, %s96
      %s113 = sphi 0, %s97
    $region4: #{tpu_custom_call.1} parent=1 // loop_header_branch
      %18 = sbr.rel (%p16) target = $region8
    $region5: #{tpu_custom_call.1} parent=1 // loop_body
      %s20 = ssub.s32 %s15, 1
      %s21 = ssub.s32 %s15, 2
      %s22 = sadd.s32 %s15, 1
      %s23 = ssub.s32 %s15, %s22
      %p24 = scmp.eq.s32.totalorder %s23, 0
      %s26 = sadd.s32 %s25, 1
      %s27 = scalar_select %p24, %s25, %s26
      %p30 = pneg %p24
      %p31 = scmp.eq.s32.totalorder %s15, 1
      %p32 = por %p30, %p31
      %p33 = scmp.ne.s32.totalorder %s25, %s28
      %p34 = scmp.eq.s32.totalorder %s15, 0
      %p35 = por %p33, %p34
      %p36 = scmp.ne.s32.totalorder %s25, %s28
      %p37 = scmp.eq.s32.totalorder %s20, 1
      %p38 = por %p36, %p37
      %p39 = scmp.ne.s32.totalorder %s28, %s29
      %p40 = scmp.eq.s32.totalorder %s20, 0
      %p41 = por %p39, %p40
      %p42 = scmp.ne.s32.totalorder %s28, %s29
      %p43 = scmp.eq.s32.totalorder %s21, 1
      %p44 = por %p42, %p43
      %p46 = scmp.ne.s32.totalorder %s29, %s45
      %p47 = scmp.eq.s32.totalorder %s21, 0
      %p48 = por %p46, %p47
      %s50 = sadd.s32 %s49, 1
      %p53 = scmp.eq.s32.totalorder %s15, 1
      %p54 = scmp.ne.s32.totalorder %s49, %s51
      %p55 = scmp.eq.s32.totalorder %s15, 0
      %p56 = por %p54, %p55
      %p57 = scmp.ne.s32.totalorder %s49, %s51
      %p58 = scmp.eq.s32.totalorder %s20, 1
      %p59 = por %p57, %p58
      %p60 = scmp.ne.s32.totalorder %s51, %s52
      %p61 = scmp.eq.s32.totalorder %s20, 0
      %p62 = por %p60, %p61
      %p63 = scmp.ne.s32.totalorder %s51, %s52
      %p64 = scmp.eq.s32.totalorder %s21, 1
      %p65 = por %p63, %p64
      %p67 = scmp.ne.s32.totalorder %s52, %s66
      %p68 = scmp.eq.s32.totalorder %s21, 0
      %p69 = por %p67, %p68
      %s71 = sadd.s32 %s70, 1
      %p74 = scmp.eq.s32.totalorder %s15, 1
      %p75 = scmp.ne.s32.totalorder %s70, %s72
      %p76 = scmp.eq.s32.totalorder %s15, 0
      %p77 = por %p75, %p76
      %p78 = scmp.ne.s32.totalorder %s70, %s72
      %p79 = scmp.eq.s32.totalorder %s20, 1
      %p80 = por %p78, %p79
      %p81 = scmp.ne.s32.totalorder %s72, %s73
      %p82 = scmp.eq.s32.totalorder %s20, 0
      %p83 = por %p81, %p82
      %p84 = scmp.ne.s32.totalorder %s72, %s73
      %p85 = scmp.eq.s32.totalorder %s21, 1
      %p86 = por %p84, %p85
      %p88 = scmp.ne.s32.totalorder %s73, %s87
      %p89 = scmp.eq.s32.totalorder %s21, 0
      %p90 = por %p88, %p89
      %s91 = ssub.s32 %s15, %s22
      %p92 = scmp.eq.s32.totalorder %s91, 0
      %s94 = sadd.s32 %s93, 1
      %s95 = scalar_select %p92, %s93, %s94
      %p98 = pneg %p92
      %p99 = scmp.eq.s32.totalorder %s15, 1
      %p100 = por %p98, %p99
      %p101 = scmp.ne.s32.totalorder %s93, %s96
      %p102 = scmp.eq.s32.totalorder %s15, 0
      %p103 = por %p101, %p102
      %p104 = scmp.ne.s32.totalorder %s93, %s96
      %p105 = scmp.eq.s32.totalorder %s20, 1
      %p106 = por %p104, %p105
      %p107 = scmp.ne.s32.totalorder %s96, %s97
      %p108 = scmp.eq.s32.totalorder %s20, 0
      %p109 = por %p107, %p108
      %p110 = scmp.ne.s32.totalorder %s96, %s97
      %p111 = scmp.eq.s32.totalorder %s21, 1
      %p112 = por %p110, %p111
      %p114 = scmp.ne.s32.totalorder %s97, %s113
      %p115 = scmp.eq.s32.totalorder %s21, 0
      %p116 = por %p114, %p115
      %p117 = scmp.le.s32.totalorder 1, %s15
      %p118 = scmp.lt.s32.totalorder %s15, 3
      %p119 = pnand %p117, %p118
      %p120 = pneg %p119
      // Predicated region
      $region9: #{tpu_custom_call.1} parent=5 // pred_check
        _
      $region10: #{tpu_custom_call.1} parent=5 // pred_check_branch
        %122 = sbr.rel (%p119) target = $region12
      $region11: #{tpu_custom_call.1} parent=5 // pred_region
        %s123 = ssub.s32 %s15, 1
        // Predicated region
        $region13: #{tpu_custom_call.1} parent=11 // pred_check
          %p124 = pneg %p62
        $region14: #{tpu_custom_call.1} parent=11 // pred_check_branch
          %126 = sbr.rel (%p124) target = $region16
        $region15: #{tpu_custom_call.1} parent=11 // pred_region
          _
        $region16: #{tpu_custom_call.1} parent=11 // pred_fallthru
          _
        // Predicated region
        $region17: #{tpu_custom_call.1} parent=11 // pred_check
          %p127 = pneg %p83
        $region18: #{tpu_custom_call.1} parent=11 // pred_check_branch
          %129 = sbr.rel (%p127) target = $region20
        $region19: #{tpu_custom_call.1} parent=11 // pred_region
          _
        $region20: #{tpu_custom_call.1} parent=11 // pred_fallthru
          _
      $region12: #{tpu_custom_call.1} parent=5 // pred_fallthru
        _
      %p130 = scmp.lt.s32.totalorder %s15, 2
      // Predicated region
      $region21: #{tpu_custom_call.1} parent=5 // pred_check
        %p131 = pneg %p130
      $region22: #{tpu_custom_call.1} parent=5 // pred_check_branch
        %133 = sbr.rel (%p131) target = $region24
      $region23: #{tpu_custom_call.1} parent=5 // pred_region
        // Predicated region
        $region25: #{tpu_custom_call.1} parent=23 // pred_check
          %p134 = pneg %p35
        $region26: #{tpu_custom_call.1} parent=23 // pred_check_branch
          %136 = sbr.rel (%p134) target = $region28
        $region27: #{tpu_custom_call.1} parent=23 // pred_region
          %s137 = sand.u32 %s25, 1
          %s138 = scalar_lea.sflag [#allocation3], %s137
          %s139 = sand.u32 %s25, 1
          %s140 = smul.addr %s139, 64
          %s141 = scalar_lea.vmem [#allocation2], %s140
          %s142 = smul.u32 4, %s15
          %s144 = ssub.s32 1024, 1024
          %145 = vsyncadd %s138, %s144
          %s146 = smul.addr %s142, 2
          %s147 = smul.addr %s146, 128
          %s148 = scalar_lea.hbm %s0, %s147
          %s149 = sshll.u32 %s141, 4
          %s150 = int_to_ptr.vmem [resolvable:$true] %s149
          %155 = dma.hbm_to_vmem [thread:$0]  %s148, 1024, %s150, %s138, 128, 128, 8
        $region28: #{tpu_custom_call.1} parent=23 // pred_fallthru
          _
      $region24: #{tpu_custom_call.1} parent=5 // pred_fallthru
        _
      %p156 = scmp.le.s32.totalorder 1, %s15
      %p157 = scmp.lt.s32.totalorder %s15, 3
      %p158 = pnand %p156, %p157
      %p159 = pneg %p158
      // Predicated region
      $region29: #{tpu_custom_call.1} parent=5 // pred_check
        _
      $region30: #{tpu_custom_call.1} parent=5 // pred_check_branch
        %161 = sbr.rel (%p158) target = $region32
      $region31: #{tpu_custom_call.1} parent=5 // pred_region
        %s162 = ssub.s32 %s15, 1
        %s163 = sand.u32 %s28, 1
        %s164 = scalar_lea.sflag [#allocation3], %s163
        %s165 = sand.u32 %s28, 1
        %s166 = smul.addr %s165, 64
        %s167 = scalar_lea.vmem [#allocation2], %s166
        // Predicated region
        $region33: #{tpu_custom_call.1} parent=31 // pred_check
          %p168 = pneg %p41
        $region34: #{tpu_custom_call.1} parent=31 // pred_check_branch
          %170 = sbr.rel (%p168) target = $region36
        $region35: #{tpu_custom_call.1} parent=31 // pred_region
          %171 = dma.done %s164, 1024
        $region36: #{tpu_custom_call.1} parent=31 // pred_fallthru
          _
        %s172 = sand.u32 %s28, 1
        %s173 = scalar_lea.sflag [#allocation3], %s172
        %s174 = sand.u32 %s28, 1
        %s175 = smul.addr %s174, 64
        %s176 = scalar_lea.vmem [#allocation2], %s175
        %p177 = pneg %p41
        %p178 = pneg %p38
        %p179 = pneg %p62
        %p180 = pneg %p59
        %p181 = pneg %p83
        %p182 = pneg %p80
        %p183 = pneg %p109
        %p184 = pneg %p106
        %s185 = sand.u32 %s96, 1
        %s186 = scalar_lea.sflag [#allocation4], %s185
        %s187 = sand.u32 %s96, 1
        %s188 = smul.addr %s187, 352
        %s189 = scalar_lea.vmem [#allocation5], %s188
        %s190 = smul.u32 4, %s20
        %s191 = smul.u32 4, %s20
        %v193 = vld [vmem:[%s1] sm:$0xf]
        %v194 = vld [vmem:[%s1 + $0x4] sm:$0xf]
        %v195 = vld [vmem:[%s1 + $0x8] sm:$0xf]
        %v196 = vld [vmem:[%s1 + $0xc] sm:$0xf]
        %v197 = vld [vmem:[%s1 + $0x10] sm:$0xf]
        %v198 = vld [vmem:[%s1 + $0x14] sm:$0xf]
        %v199 = vld [vmem:[%s1 + $0x18] sm:$0xf]
        %v200 = vld [vmem:[%s1 + $0x1c] sm:$0xf]
        %v201 = vld [vmem:[%s1 + $0x20] sm:$0xf]
        %v202 = vld [vmem:[%s1 + $0x24] sm:$0xf]
        %v203 = vld [vmem:[%s1 + $0x28] sm:$0xf]
        %v204 = vld [vmem:[%s2] sm:$0xf]
        %v205 = vld [vmem:[%s2 + $0x4] sm:$0xf]
        %v206 = vld [vmem:[%s167] sm:$0xff]
        %v207 = vld [vmem:[%s167 + $0x8] sm:$0xff]
        %v208 = vld [vmem:[%s167 + $0x10] sm:$0xff]
        %v209 = vld [vmem:[%s167 + $0x18] sm:$0xff]
        %v210 = vld [vmem:[%s167 + $0x20] sm:$0xff]
        %v211 = vld [vmem:[%s167 + $0x28] sm:$0xff]
        %v212 = vld [vmem:[%s167 + $0x30] sm:$0xff]
        %v213 = vld [vmem:[%s167 + $0x38] sm:$0xff]
        %v214 = vpack.c.bf16 %v207, %v206
        %v215 = vpack.c.bf16 %v209, %v208
        %v216 = vpack.c.bf16 %v211, %v210
        %v217 = vpack.c.bf16 %v213, %v212
        %v220 = vunpack.c.l.b16 %v204
        %v221 = vunpack.c.l.b16 %v205
        %v222 = vpack.c.b16 %v221, %v220
        %vm224 = vcmask 130048
        %v226 = vsel %vm224, %v214, 0
        %v229 = vsel %vm224, %v215, 0
        %v232 = vsel %vm224, %v216, 0
        %v235 = vsel %vm224, %v217, 0
        %237 = vmatprep.subr.bf16.mxu0 0
        %238 = vmatpush1.bf16.msra.mxu0 %v222
        %239 = vmatprep.subr.bf16.mxu0 0
        %240 = vmatpush1.bf16.msra.mxu0 0
        %241 = vmatprep.subr.bf16.mxu0 0
        %242 = vmatpush1.bf16.msra.mxu0 0
        %243 = vmatprep.subr.bf16.mxu0 0
        %244 = vmatpush1.bf16.msra.mxu0 0
        %245 = vmatprep.subr.bf16.mxu0 0
        %246 = vmatpush1.bf16.msra.mxu0 0
        %247 = vmatprep.subr.bf16.mxu0 0
        %248 = vmatpush1.bf16.msra.mxu0 0
        %249 = vmatprep.subr.bf16.mxu0 0
        %250 = vmatpush1.bf16.msra.mxu0 0
        %251 = vmatprep.subr.bf16.mxu0 0
        %252 = vmatpush1.bf16.msra.mxu0 0
        %253 = vmatprep.subr.bf16.mxu0 0
        %254 = vmatpush1.bf16.msra.mxu0 0
        %255 = vmatprep.subr.bf16.mxu0 0
        %256 = vmatpush1.bf16.msra.mxu0 0
        %257 = vmatprep.subr.bf16.mxu0 0
        %258 = vmatpush1.bf16.msra.mxu0 0
        %259 = vmatprep.subr.bf16.mxu0 0
        %260 = vmatpush1.bf16.msra.mxu0 0
        %261 = vmatprep.subr.bf16.mxu0 0
        %262 = vmatpush1.bf16.msra.mxu0 0
        %263 = vmatprep.subr.bf16.mxu0 0
        %264 = vmatpush1.bf16.msra.mxu0 0
        %265 = vmatprep.subr.bf16.mxu0 0
        %266 = vmatpush1.bf16.msra.mxu0 0
        %267 = vmatprep.subr.bf16.mxu0 0
        %268 = vmatpush1.bf16.msra.mxu0 0
        %269 = vmatprep.mubr.bf16.mxu0 0
        %270 = vmatmul.mubr.bf16.gmra.mrb[0].mxu0 %v226
        %v271 = vpop.f32.mrb[0].mxu0
        %v272 = vadd.f32 0.0, %v271
        %v273 = vpop.f32.mrb[0].mxu0
        %v274 = vpop.f32.mrb[0].mxu0
        %v275 = vadd.f32 0.0, %v274
        %v276 = vpop.f32.mrb[0].mxu0
        %277 = vmatprep.mubr.bf16.mxu0 0
        %278 = vmatmul.mubr.bf16.gmra.mrb[0].mxu0 %v229
        %v279 = vpop.f32.mrb[0].mxu0
        %v280 = vadd.f32 0.0, %v279
        %v281 = vpop.f32.mrb[0].mxu0
        %v282 = vpop.f32.mrb[0].mxu0
        %v283 = vadd.f32 0.0, %v282
        %v284 = vpop.f32.mrb[0].mxu0
        %285 = vmatprep.mubr.bf16.mxu0 0
        %286 = vmatmul.mubr.bf16.gmra.mrb[0].mxu0 %v232
        %v287 = vpop.f32.mrb[0].mxu0
        %v288 = vadd.f32 0.0, %v287
        %v289 = vpop.f32.mrb[0].mxu0
        %v290 = vpop.f32.mrb[0].mxu0
        %v291 = vadd.f32 0.0, %v290
        %v292 = vpop.f32.mrb[0].mxu0
        %293 = vmatprep.mubr.bf16.mxu0 0
        %294 = vmatmul.mubr.bf16.gmra.mrb[0].mxu0 %v235
        %v295 = vpop.f32.mrb[0].mxu0
        %v296 = vadd.f32 0.0, %v295
        %v297 = vpop.f32.mrb[0].mxu0
        %v298 = vpop.f32.mrb[0].mxu0
        %v299 = vadd.f32 0.0, %v298
        %v300 = vpop.f32.mrb[0].mxu0
        %301 = vdwg.mxu0
        %v302 = vpack.c.bf16 %v275, %v272
        %v303 = vpack.c.bf16 %v283, %v280
        %v304 = vpack.c.bf16 %v291, %v288
        %v305 = vpack.c.bf16 %v299, %v296
        %v317 = vunpack.c.l.b16 %v193
        %v318 = vunpack.c.l.b16 %v194
        %v319 = vunpack.c.l.b16 %v195
        %v320 = vunpack.c.l.b16 %v196
        %v321 = vunpack.c.l.b16 %v197
        %v322 = vunpack.c.l.b16 %v198
        %v323 = vunpack.c.l.b16 %v199
        %v324 = vunpack.c.l.b16 %v200
        %v325 = vunpack.c.l.b16 %v201
        %v326 = vunpack.c.l.b16 %v202
        %v327 = vunpack.c.l.b16 %v203
        %v328 = vpack.c.b16 %v318, %v317
        %v329 = vpack.c.b16 %v320, %v319
        %v330 = vpack.c.b16 %v322, %v321
        %v331 = vpack.c.b16 %v324, %v323
        %v332 = vpack.c.b16 %v326, %v325
        %v333 = vpack.c.b16 %v327, %v327
        %v335 = vsel %vm224, %v328, 0
        %v338 = vsel %vm224, %v329, 0
        %v341 = vsel %vm224, %v330, 0
        %v344 = vsel %vm224, %v331, 0
        %v347 = vsel %vm224, %v332, 0
        %v350 = vsel %vm224, %v333, 0
        %352 = vmatprep.subr.bf16.mxu0 0
        %353 = vmatpush1.bf16.msra.mxu0 %v302
        %354 = vmatprep.subr.bf16.mxu0 0
        %355 = vmatpush1.bf16.msra.mxu0 0
        %356 = vmatprep.subr.bf16.mxu0 0
        %357 = vmatpush1.bf16.msra.mxu0 0
        %358 = vmatprep.subr.bf16.mxu0 0
        %359 = vmatpush1.bf16.msra.mxu0 0
        %360 = vmatprep.subr.bf16.mxu0 0
        %361 = vmatpush1.bf16.msra.mxu0 0
        %362 = vmatprep.subr.bf16.mxu0 0
        %363 = vmatpush1.bf16.msra.mxu0 0
        %364 = vmatprep.subr.bf16.mxu0 0
        %365 = vmatpush1.bf16.msra.mxu0 0
        %366 = vmatprep.subr.bf16.mxu0 0
        %367 = vmatpush1.bf16.msra.mxu0 0
        %368 = vmatprep.subr.bf16.mxu0 0
        %369 = vmatpush1.bf16.msra.mxu0 0
        %370 = vmatprep.subr.bf16.mxu0 0
        %371 = vmatpush1.bf16.msra.mxu0 0
        %372 = vmatprep.subr.bf16.mxu0 0
        %373 = vmatpush1.bf16.msra.mxu0 0
        %374 = vmatprep.subr.bf16.mxu0 0
        %375 = vmatpush1.bf16.msra.mxu0 0
        %376 = vmatprep.subr.bf16.mxu0 0
        %377 = vmatpush1.bf16.msra.mxu0 0
        %378 = vmatprep.subr.bf16.mxu0 0
        %379 = vmatpush1.bf16.msra.mxu0 0
        %380 = vmatprep.subr.bf16.mxu0 0
        %381 = vmatpush1.bf16.msra.mxu0 0
        %382 = vmatprep.subr.bf16.mxu0 0
        %383 = vmatpush1.bf16.msra.mxu0 0
        %384 = vmatprep.mubr.bf16.mxu0 0
        %385 = vmatmul.mubr.bf16.gmra.mrb[0].mxu0 %v335
        %v386 = vpop.f32.mrb[0].mxu0
        %v387 = vadd.f32 0.0, %v386
        %v388 = vpop.f32.mrb[0].mxu0
        %v389 = vpop.f32.mrb[0].mxu0
        %v390 = vadd.f32 0.0, %v389
        %v391 = vpop.f32.mrb[0].mxu0
        %392 = vmatprep.mubr.bf16.mxu0 0
        %393 = vmatmul.mubr.bf16.gmra.mrb[0].mxu0 %v338
        %v394 = vpop.f32.mrb[0].mxu0
        %v395 = vadd.f32 0.0, %v394
        %v396 = vpop.f32.mrb[0].mxu0
        %v397 = vpop.f32.mrb[0].mxu0
        %v398 = vadd.f32 0.0, %v397
        %v399 = vpop.f32.mrb[0].mxu0
        %400 = vmatprep.mubr.bf16.mxu0 0
        %401 = vmatmul.mubr.bf16.gmra.mrb[0].mxu0 %v341
        %v402 = vpop.f32.mrb[0].mxu0
        %v403 = vadd.f32 0.0, %v402
        %v404 = vpop.f32.mrb[0].mxu0
        %v405 = vpop.f32.mrb[0].mxu0
        %v406 = vadd.f32 0.0, %v405
        %v407 = vpop.f32.mrb[0].mxu0
        %408 = vmatprep.mubr.bf16.mxu0 0
        %409 = vmatmul.mubr.bf16.gmra.mrb[0].mxu0 %v344
        %v410 = vpop.f32.mrb[0].mxu0
        %v411 = vadd.f32 0.0, %v410
        %v412 = vpop.f32.mrb[0].mxu0
        %v413 = vpop.f32.mrb[0].mxu0
        %v414 = vadd.f32 0.0, %v413
        %v415 = vpop.f32.mrb[0].mxu0
        %416 = vmatprep.mubr.bf16.mxu0 0
        %417 = vmatmul.mubr.bf16.gmra.mrb[0].mxu0 %v347
        %v418 = vpop.f32.mrb[0].mxu0
        %v419 = vadd.f32 0.0, %v418
        %v420 = vpop.f32.mrb[0].mxu0
        %v421 = vpop.f32.mrb[0].mxu0
        %v422 = vadd.f32 0.0, %v421
        %v423 = vpop.f32.mrb[0].mxu0
        %424 = vmatprep.mubr.bf16.mxu0 0
        %425 = vmatmul.mubr.bf16.gmra.mrb[0].mxu0 %v350
        %v426 = vpop.f32.mrb[0].mxu0
        %v427 = vadd.f32 0.0, %v426
        %v428 = vpop.f32.mrb[0].mxu0
        %v429 = vpop.f32.mrb[0].mxu0
        %v430 = vpop.f32.mrb[0].mxu0
        %431 = vdwg.mxu0
        %vm432 = vcmask 719872
        %433 = vst.msk [vmem:[%s189] sm:$0xff] %vm432, %v387
        %434 = vst.msk [vmem:[%s189 + $0x8] sm:$0xff] %vm432, %v390
        %435 = vst.msk [vmem:[%s189 + $0x10] sm:$0xff] %vm432, %v395
        %436 = vst.msk [vmem:[%s189 + $0x18] sm:$0xff] %vm432, %v398
        %437 = vst.msk [vmem:[%s189 + $0x20] sm:$0xff] %vm432, %v403
        %438 = vst.msk [vmem:[%s189 + $0x28] sm:$0xff] %vm432, %v406
        %439 = vst.msk [vmem:[%s189 + $0x30] sm:$0xff] %vm432, %v411
        %440 = vst.msk [vmem:[%s189 + $0x38] sm:$0xff] %vm432, %v414
        %441 = vst.msk [vmem:[%s189 + $0x40] sm:$0xff] %vm432, %v419
        %442 = vst.msk [vmem:[%s189 + $0x48] sm:$0xff] %vm432, %v422
        %443 = vst.msk [vmem:[%s189 + $0x50] sm:$0xff] %vm432, %v427
        %444 = vmatprep.subr.bf16.mxu0 0
        %445 = vmatpush1.bf16.msra.mxu0 %v303
        %446 = vmatprep.subr.bf16.mxu0 0
        %447 = vmatpush1.bf16.msra.mxu0 0
        %448 = vmatprep.subr.bf16.mxu0 0
        %449 = vmatpush1.bf16.msra.mxu0 0
        %450 = vmatprep.subr.bf16.mxu0 0
        %451 = vmatpush1.bf16.msra.mxu0 0
        %452 = vmatprep.subr.bf16.mxu0 0
        %453 = vmatpush1.bf16.msra.mxu0 0
        %454 = vmatprep.subr.bf16.mxu0 0
        %455 = vmatpush1.bf16.msra.mxu0 0
        %456 = vmatprep.subr.bf16.mxu0 0
        %457 = vmatpush1.bf16.msra.mxu0 0
        %458 = vmatprep.subr.bf16.mxu0 0
        %459 = vmatpush1.bf16.msra.mxu0 0
        %460 = vmatprep.subr.bf16.mxu0 0
        %461 = vmatpush1.bf16.msra.mxu0 0
        %462 = vmatprep.subr.bf16.mxu0 0
        %463 = vmatpush1.bf16.msra.mxu0 0
        %464 = vmatprep.subr.bf16.mxu0 0
        %465 = vmatpush1.bf16.msra.mxu0 0
        %466 = vmatprep.subr.bf16.mxu0 0
        %467 = vmatpush1.bf16.msra.mxu0 0
        %468 = vmatprep.subr.bf16.mxu0 0
        %469 = vmatpush1.bf16.msra.mxu0 0
        %470 = vmatprep.subr.bf16.mxu0 0
        %471 = vmatpush1.bf16.msra.mxu0 0
        %472 = vmatprep.subr.bf16.mxu0 0
        %473 = vmatpush1.bf16.msra.mxu0 0
        %474 = vmatprep.subr.bf16.mxu0 0
        %475 = vmatpush1.bf16.msra.mxu0 0
        %476 = vmatprep.mubr.bf16.mxu0 0
        %477 = vmatmul.mubr.bf16.gmra.mrb[0].mxu0 %v335
        %v478 = vpop.f32.mrb[0].mxu0
        %v479 = vadd.f32 0.0, %v478
        %v480 = vpop.f32.mrb[0].mxu0
        %v481 = vpop.f32.mrb[0].mxu0
        %v482 = vadd.f32 0.0, %v481
        %v483 = vpop.f32.mrb[0].mxu0
        %484 = vmatprep.mubr.bf16.mxu0 0
        %485 = vmatmul.mubr.bf16.gmra.mrb[0].mxu0 %v338
        %v486 = vpop.f32.mrb[0].mxu0
        %v487 = vadd.f32 0.0, %v486
        %v488 = vpop.f32.mrb[0].mxu0
        %v489 = vpop.f32.mrb[0].mxu0
        %v490 = vadd.f32 0.0, %v489
        %v491 = vpop.f32.mrb[0].mxu0
        %492 = vmatprep.mubr.bf16.mxu0 0
        %493 = vmatmul.mubr.bf16.gmra.mrb[0].mxu0 %v341
        %v494 = vpop.f32.mrb[0].mxu0
        %v495 = vadd.f32 0.0, %v494
        %v496 = vpop.f32.mrb[0].mxu0
        %v497 = vpop.f32.mrb[0].mxu0
        %v498 = vadd.f32 0.0, %v497
        %v499 = vpop.f32.mrb[0].mxu0
        %500 = vmatprep.mubr.bf16.mxu0 0
        %501 = vmatmul.mubr.bf16.gmra.mrb[0].mxu0 %v344
        %v502 = vpop.f32.mrb[0].mxu0
        %v503 = vadd.f32 0.0, %v502
        %v504 = vpop.f32.mrb[0].mxu0
        %v505 = vpop.f32.mrb[0].mxu0
        %v506 = vadd.f32 0.0, %v505
        %v507 = vpop.f32.mrb[0].mxu0
        %508 = vmatprep.mubr.bf16.mxu0 0
        %509 = vmatmul.mubr.bf16.gmra.mrb[0].mxu0 %v347
        %v510 = vpop.f32.mrb[0].mxu0
        %v511 = vadd.f32 0.0, %v510
        %v512 = vpop.f32.mrb[0].mxu0
        %v513 = vpop.f32.mrb[0].mxu0
        %v514 = vadd.f32 0.0, %v513
        %v515 = vpop.f32.mrb[0].mxu0
        %516 = vmatprep.mubr.bf16.mxu0 0
        %517 = vmatmul.mubr.bf16.gmra.mrb[0].mxu0 %v350
        %v518 = vpop.f32.mrb[0].mxu0
        %v519 = vadd.f32 0.0, %v518
        %v520 = vpop.f32.mrb[0].mxu0
        %v521 = vpop.f32.mrb[0].mxu0
        %v522 = vpop.f32.mrb[0].mxu0
        %523 = vdwg.mxu0
        %s524 = scalar_lea.vmem %s189, 88 [#allocation5]
        %525 = vst.msk [vmem:[%s524] sm:$0xff] %vm432, %v479
        %526 = vst.msk [vmem:[%s524 + $0x8] sm:$0xff] %vm432, %v482
        %527 = vst.msk [vmem:[%s524 + $0x10] sm:$0xff] %vm432, %v487
        %528 = vst.msk [vmem:[%s524 + $0x18] sm:$0xff] %vm432, %v490
        %529 = vst.msk [vmem:[%s524 + $0x20] sm:$0xff] %vm432, %v495
        %530 = vst.msk [vmem:[%s524 + $0x28] sm:$0xff] %vm432, %v498
        %531 = vst.msk [vmem:[%s524 + $0x30] sm:$0xff] %vm432, %v503
        %532 = vst.msk [vmem:[%s524 + $0x38] sm:$0xff] %vm432, %v506
        %533 = vst.msk [vmem:[%s524 + $0x40] sm:$0xff] %vm432, %v511
        %534 = vst.msk [vmem:[%s524 + $0x48] sm:$0xff] %vm432, %v514
        %535 = vst.msk [vmem:[%s524 + $0x50] sm:$0xff] %vm432, %v519
        %536 = vmatprep.subr.bf16.mxu0 0
        %537 = vmatpush1.bf16.msra.mxu0 %v304
        %538 = vmatprep.subr.bf16.mxu0 0
        %539 = vmatpush1.bf16.msra.mxu0 0
        %540 = vmatprep.subr.bf16.mxu0 0
        %541 = vmatpush1.bf16.msra.mxu0 0
        %542 = vmatprep.subr.bf16.mxu0 0
        %543 = vmatpush1.bf16.msra.mxu0 0
        %544 = vmatprep.subr.bf16.mxu0 0
        %545 = vmatpush1.bf16.msra.mxu0 0
        %546 = vmatprep.subr.bf16.mxu0 0
        %547 = vmatpush1.bf16.msra.mxu0 0
        %548 = vmatprep.subr.bf16.mxu0 0
        %549 = vmatpush1.bf16.msra.mxu0 0
        %550 = vmatprep.subr.bf16.mxu0 0
        %551 = vmatpush1.bf16.msra.mxu0 0
        %552 = vmatprep.subr.bf16.mxu0 0
        %553 = vmatpush1.bf16.msra.mxu0 0
        %554 = vmatprep.subr.bf16.mxu0 0
        %555 = vmatpush1.bf16.msra.mxu0 0
        %556 = vmatprep.subr.bf16.mxu0 0
        %557 = vmatpush1.bf16.msra.mxu0 0
        %558 = vmatprep.subr.bf16.mxu0 0
        %559 = vmatpush1.bf16.msra.mxu0 0
        %560 = vmatprep.subr.bf16.mxu0 0
        %561 = vmatpush1.bf16.msra.mxu0 0
        %562 = vmatprep.subr.bf16.mxu0 0
        %563 = vmatpush1.bf16.msra.mxu0 0
        %564 = vmatprep.subr.bf16.mxu0 0
        %565 = vmatpush1.bf16.msra.mxu0 0
        %566 = vmatprep.subr.bf16.mxu0 0
        %567 = vmatpush1.bf16.msra.mxu0 0
        %568 = vmatprep.mubr.bf16.mxu0 0
        %569 = vmatmul.mubr.bf16.gmra.mrb[0].mxu0 %v335
        %v570 = vpop.f32.mrb[0].mxu0
        %v571 = vadd.f32 0.0, %v570
        %v572 = vpop.f32.mrb[0].mxu0
        %v573 = vpop.f32.mrb[0].mxu0
        %v574 = vadd.f32 0.0, %v573
        %v575 = vpop.f32.mrb[0].mxu0
        %576 = vmatprep.mubr.bf16.mxu0 0
        %577 = vmatmul.mubr.bf16.gmra.mrb[0].mxu0 %v338
        %v578 = vpop.f32.mrb[0].mxu0
        %v579 = vadd.f32 0.0, %v578
        %v580 = vpop.f32.mrb[0].mxu0
        %v581 = vpop.f32.mrb[0].mxu0
        %v582 = vadd.f32 0.0, %v581
        %v583 = vpop.f32.mrb[0].mxu0
        %584 = vmatprep.mubr.bf16.mxu0 0
        %585 = vmatmul.mubr.bf16.gmra.mrb[0].mxu0 %v341
        %v586 = vpop.f32.mrb[0].mxu0
        %v587 = vadd.f32 0.0, %v586
        %v588 = vpop.f32.mrb[0].mxu0
        %v589 = vpop.f32.mrb[0].mxu0
        %v590 = vadd.f32 0.0, %v589
        %v591 = vpop.f32.mrb[0].mxu0
        %592 = vmatprep.mubr.bf16.mxu0 0
        %593 = vmatmul.mubr.bf16.gmra.mrb[0].mxu0 %v344
        %v594 = vpop.f32.mrb[0].mxu0
        %v595 = vadd.f32 0.0, %v594
        %v596 = vpop.f32.mrb[0].mxu0
        %v597 = vpop.f32.mrb[0].mxu0
        %v598 = vadd.f32 0.0, %v597
        %v599 = vpop.f32.mrb[0].mxu0
        %600 = vmatprep.mubr.bf16.mxu0 0
        %601 = vmatmul.mubr.bf16.gmra.mrb[0].mxu0 %v347
        %v602 = vpop.f32.mrb[0].mxu0
        %v603 = vadd.f32 0.0, %v602
        %v604 = vpop.f32.mrb[0].mxu0
        %v605 = vpop.f32.mrb[0].mxu0
        %v606 = vadd.f32 0.0, %v605
        %v607 = vpop.f32.mrb[0].mxu0
        %608 = vmatprep.mubr.bf16.mxu0 0
        %609 = vmatmul.mubr.bf16.gmra.mrb[0].mxu0 %v350
        %v610 = vpop.f32.mrb[0].mxu0
        %v611 = vadd.f32 0.0, %v610
        %v612 = vpop.f32.mrb[0].mxu0
        %v613 = vpop.f32.mrb[0].mxu0
        %v614 = vpop.f32.mrb[0].mxu0
        %615 = vdwg.mxu0
        %s616 = scalar_lea.vmem %s189, 176 [#allocation5]
        %617 = vst.msk [vmem:[%s616] sm:$0xff] %vm432, %v571
        %618 = vst.msk [vmem:[%s616 + $0x8] sm:$0xff] %vm432, %v574
        %619 = vst.msk [vmem:[%s616 + $0x10] sm:$0xff] %vm432, %v579
        %620 = vst.msk [vmem:[%s616 + $0x18] sm:$0xff] %vm432, %v582
        %621 = vst.msk [vmem:[%s616 + $0x20] sm:$0xff] %vm432, %v587
        %622 = vst.msk [vmem:[%s616 + $0x28] sm:$0xff] %vm432, %v590
        %623 = vst.msk [vmem:[%s616 + $0x30] sm:$0xff] %vm432, %v595
        %624 = vst.msk [vmem:[%s616 + $0x38] sm:$0xff] %vm432, %v598
        %625 = vst.msk [vmem:[%s616 + $0x40] sm:$0xff] %vm432, %v603
        %626 = vst.msk [vmem:[%s616 + $0x48] sm:$0xff] %vm432, %v606
        %627 = vst.msk [vmem:[%s616 + $0x50] sm:$0xff] %vm432, %v611
        %628 = vmatprep.subr.bf16.mxu0 0
        %629 = vmatpush1.bf16.msra.mxu0 %v305
        %630 = vmatprep.subr.bf16.mxu0 0
        %631 = vmatpush1.bf16.msra.mxu0 0
        %632 = vmatprep.subr.bf16.mxu0 0
        %633 = vmatpush1.bf16.msra.mxu0 0
        %634 = vmatprep.subr.bf16.mxu0 0
        %635 = vmatpush1.bf16.msra.mxu0 0
        %636 = vmatprep.subr.bf16.mxu0 0
        %637 = vmatpush1.bf16.msra.mxu0 0
        %638 = vmatprep.subr.bf16.mxu0 0
        %639 = vmatpush1.bf16.msra.mxu0 0
        %640 = vmatprep.subr.bf16.mxu0 0
        %641 = vmatpush1.bf16.msra.mxu0 0
        %642 = vmatprep.subr.bf16.mxu0 0
        %643 = vmatpush1.bf16.msra.mxu0 0
        %644 = vmatprep.subr.bf16.mxu0 0
        %645 = vmatpush1.bf16.msra.mxu0 0
        %646 = vmatprep.subr.bf16.mxu0 0
        %647 = vmatpush1.bf16.msra.mxu0 0
        %648 = vmatprep.subr.bf16.mxu0 0
        %649 = vmatpush1.bf16.msra.mxu0 0
        %650 = vmatprep.subr.bf16.mxu0 0
        %651 = vmatpush1.bf16.msra.mxu0 0
        %652 = vmatprep.subr.bf16.mxu0 0
        %653 = vmatpush1.bf16.msra.mxu0 0
        %654 = vmatprep.subr.bf16.mxu0 0
        %655 = vmatpush1.bf16.msra.mxu0 0
        %656 = vmatprep.subr.bf16.mxu0 0
        %657 = vmatpush1.bf16.msra.mxu0 0
        %658 = vmatprep.subr.bf16.mxu0 0
        %659 = vmatpush1.bf16.msra.mxu0 0
        %660 = vmatprep.mubr.bf16.mxu0 0
        %661 = vmatmul.mubr.bf16.gmra.mrb[0].mxu0 %v335
        %v662 = vpop.f32.mrb[0].mxu0
        %v663 = vadd.f32 0.0, %v662
        %v664 = vpop.f32.mrb[0].mxu0
        %v665 = vpop.f32.mrb[0].mxu0
        %v666 = vadd.f32 0.0, %v665
        %v667 = vpop.f32.mrb[0].mxu0
        %668 = vmatprep.mubr.bf16.mxu0 0
        %669 = vmatmul.mubr.bf16.gmra.mrb[0].mxu0 %v338
        %v670 = vpop.f32.mrb[0].mxu0
        %v671 = vadd.f32 0.0, %v670
        %v672 = vpop.f32.mrb[0].mxu0
        %v673 = vpop.f32.mrb[0].mxu0
        %v674 = vadd.f32 0.0, %v673
        %v675 = vpop.f32.mrb[0].mxu0
        %676 = vmatprep.mubr.bf16.mxu0 0
        %677 = vmatmul.mubr.bf16.gmra.mrb[0].mxu0 %v341
        %v678 = vpop.f32.mrb[0].mxu0
        %v679 = vadd.f32 0.0, %v678
        %v680 = vpop.f32.mrb[0].mxu0
        %v681 = vpop.f32.mrb[0].mxu0
        %v682 = vadd.f32 0.0, %v681
        %v683 = vpop.f32.mrb[0].mxu0
        %684 = vmatprep.mubr.bf16.mxu0 0
        %685 = vmatmul.mubr.bf16.gmra.mrb[0].mxu0 %v344
        %v686 = vpop.f32.mrb[0].mxu0
        %v687 = vadd.f32 0.0, %v686
        %v688 = vpop.f32.mrb[0].mxu0
        %v689 = vpop.f32.mrb[0].mxu0
        %v690 = vadd.f32 0.0, %v689
        %v691 = vpop.f32.mrb[0].mxu0
        %692 = vmatprep.mubr.bf16.mxu0 0
        %693 = vmatmul.mubr.bf16.gmra.mrb[0].mxu0 %v347
        %v694 = vpop.f32.mrb[0].mxu0
        %v695 = vadd.f32 0.0, %v694
        %v696 = vpop.f32.mrb[0].mxu0
        %v697 = vpop.f32.mrb[0].mxu0
        %v698 = vadd.f32 0.0, %v697
        %v699 = vpop.f32.mrb[0].mxu0
        %700 = vmatprep.mubr.bf16.mxu0 0
        %701 = vmatmul.mubr.bf16.gmra.mrb[0].mxu0 %v350
        %v702 = vpop.f32.mrb[0].mxu0
        %v703 = vadd.f32 0.0, %v702
        %v704 = vpop.f32.mrb[0].mxu0
        %v705 = vpop.f32.mrb[0].mxu0
        %v706 = vpop.f32.mrb[0].mxu0
        %707 = vdwg.mxu0
        %s708 = scalar_lea.vmem %s189, 264 [#allocation5]
        %709 = vst.msk [vmem:[%s708] sm:$0xff] %vm432, %v663
        %710 = vst.msk [vmem:[%s708 + $0x8] sm:$0xff] %vm432, %v666
        %711 = vst.msk [vmem:[%s708 + $0x10] sm:$0xff] %vm432, %v671
        %712 = vst.msk [vmem:[%s708 + $0x18] sm:$0xff] %vm432, %v674
        %713 = vst.msk [vmem:[%s708 + $0x20] sm:$0xff] %vm432, %v679
        %714 = vst.msk [vmem:[%s708 + $0x28] sm:$0xff] %vm432, %v682
        %715 = vst.msk [vmem:[%s708 + $0x30] sm:$0xff] %vm432, %v687
        %716 = vst.msk [vmem:[%s708 + $0x38] sm:$0xff] %vm432, %v690
        %717 = vst.msk [vmem:[%s708 + $0x40] sm:$0xff] %vm432, %v695
        %718 = vst.msk [vmem:[%s708 + $0x48] sm:$0xff] %vm432, %v698
        %719 = vst.msk [vmem:[%s708 + $0x50] sm:$0xff] %vm432, %v703
        %s720 = sand.u32 %s96, 1
        %s721 = scalar_lea.sflag [#allocation4], %s720
        %s722 = sand.u32 %s96, 1
        %s723 = smul.addr %s722, 352
        %s724 = scalar_lea.vmem [#allocation5], %s723
        // Predicated region
        $region37: #{tpu_custom_call.1} parent=31 // pred_check
          %p725 = pneg %p106
        $region38: #{tpu_custom_call.1} parent=31 // pred_check_branch
          %727 = sbr.rel (%p725) target = $region40
        $region39: #{tpu_custom_call.1} parent=31 // pred_region
          %s728 = smul.u32 4, %s20
          %s730 = ssub.s32 5632, 5632
          %731 = vsyncadd %s721, %s730
          %s732 = smul.addr %s728, 11
          %s733 = smul.addr %s732, 128
          %s734 = scalar_lea.hbm %s3, %s733
          %s735 = sshll.u32 %s724, 4
          %s736 = int_to_ptr.vmem [resolvable:$true] %s735
          %741 = dma.vmem_to_hbm [thread:$0]  %s736, 5632, %s734, %s721, 128, 128, 8
        $region40: #{tpu_custom_call.1} parent=31 // pred_fallthru
          _
      $region32: #{tpu_custom_call.1} parent=5 // pred_fallthru
        _
      %p742 = scmp.le.s32.totalorder 2, %s15
      // Predicated region
      $region41: #{tpu_custom_call.1} parent=5 // pred_check
        %p743 = pneg %p742
      $region42: #{tpu_custom_call.1} parent=5 // pred_check_branch
        %745 = sbr.rel (%p743) target = $region44
      $region43: #{tpu_custom_call.1} parent=5 // pred_region
        %s746 = ssub.s32 %s15, 2
        // Predicated region
        $region45: #{tpu_custom_call.1} parent=43 // pred_check
          %p747 = pneg %p112
        $region46: #{tpu_custom_call.1} parent=43 // pred_check_branch
          %749 = sbr.rel (%p747) target = $region48
        $region47: #{tpu_custom_call.1} parent=43 // pred_region
          %s750 = sand.u32 %s97, 1
          %s751 = scalar_lea.sflag [#allocation4], %s750
          %s752 = sand.u32 %s97, 1
          %s753 = smul.addr %s752, 352
          %s754 = scalar_lea.vmem [#allocation5], %s753
          %755 = dma.done %s751, 5632
        $region48: #{tpu_custom_call.1} parent=43 // pred_fallthru
          _
      $region44: #{tpu_custom_call.1} parent=5 // pred_fallthru
        _
    $region6: #{tpu_custom_call.1} parent=1 // loop_footer
      %s19 = sadd.s32 1, %s15
    $region7: #{tpu_custom_call.1} parent=1 // loop_footer_branch
      %14 = sbr.rel target = $region3
    $region8: #{tpu_custom_call.1} parent=1 // loop_exit
      _
    %756 = vsyncpa [#allocation3], 1
    %s757 = scalar_lea.sflag [#allocation3], 1
    %758 = vsyncpa %s757, 1
    %759 = vsyncpa [#allocation4], 1
    %s760 = scalar_lea.sflag [#allocation4], 1
    %761 = vsyncpa %s760, 1

// kernel: tpu_custom_call.1
$region0: #{tpu_custom_call.1}
  #allocation0 [shape = 'u32[]', space=smem, size = 0x4, offset = 0x4, fixed_abs, tag = 'smem constant byte address 0x4 - core index']
  #allocation1 [shape = 'u32[144,128]{1,0:T(1,128)}', space=vmem, size = 0x12000, scoped, tag = 'internal scratch']
  %s0 = inlined_call_operand.hbm [shape: f32[8,16,16], index: 0, kind: input, shape index: {}]
  %s1 = inlined_call_operand.vmem [shape: bf16[88,16], index: 1, kind: input, shape index: {}]
  %s2 = inlined_call_operand.vmem [shape: bf16[16,88], index: 2, kind: input, shape index: {}]
  %s3 = inlined_call_operand.hbm [shape: f32[8,88,88], index: 3, kind: output, shape index: {}]
  %s4 = sld [smem:[#allocation0]]
  $region49: #{tpu_custom_call.1} parent=0
    _
  %s6 = ssub.s32 1, %s4
  %s7 = scalar_select 0, %s6, %s4
  $region1: #{tpu_custom_call.1} parent=0
    #allocation2 [shape = 'u8[32768]{0}', space=vmem, size = 0x8000, scoped, tag = 'input window, operand 0']
    #allocation3 [shape = 's32[2]{0}', space=sflag, size = 0x8, scoped, tag = 'scoped memory for tpu_custom_call.1']
    #allocation4 [shape = 's32[2]{0}', space=sflag, size = 0x8, scoped, tag = 'scoped memory for tpu_custom_call.1']
    #allocation5 [shape = 'u8[180224]{0}', space=vmem, size = 0x2c000, scoped, tag = 'output window, operand 0']
    %8 = vsyncpa [#allocation3], 0
    %s9 = scalar_lea.sflag [#allocation3], 1
    %10 = vsyncpa %s9, 0
    %11 = vsyncpa [#allocation4], 0
    %s12 = scalar_lea.sflag [#allocation4], 1
    %13 = vsyncpa %s12, 0
    loop: start=0, step=1, limit=6
    $region2: #{tpu_custom_call.1} parent=1 // loop_pre_header
      _
    $region3: #{tpu_custom_call.1} parent=1 // loop_header
      %s15 = sphi 0, %s19
      %p16 = scmp.ge.s32.totalorder %s15, 6
      %s25 = sphi 0, %s27
      %s28 = sphi 0, %s25
      %s29 = sphi 0, %s28
      %s45 = sphi 0, %s29
      %s49 = sphi 0, %s49
      %s51 = sphi 0, %s49
      %s52 = sphi 0, %s51
      %s66 = sphi 0, %s52
      %s70 = sphi 0, %s70
      %s72 = sphi 0, %s70
      %s73 = sphi 0, %s72
      %s87 = sphi 0, %s73
      %s93 = sphi 0, %s95
      %s96 = sphi 0, %s93
      %s97 = sphi 0, %s96
      %s113 = sphi 0, %s97
    $region4: #{tpu_custom_call.1} parent=1 // loop_header_branch
      %18 = sbr.rel (%p16) target = $region8
    $region5: #{tpu_custom_call.1} parent=1 // loop_body
      %s20 = ssub.s32 %s15, 1
      %s21 = ssub.s32 %s15, 2
      %s22 = sadd.s32 %s15, 1
      %s23 = ssub.s32 %s15, %s22
      %p24 = scmp.eq.s32.totalorder %s23, 0
      %s26 = sadd.s32 %s25, 1
      %s27 = scalar_select %p24, %s25, %s26
      %p30 = pneg %p24
      %p31 = scmp.eq.s32.totalorder %s15, 3
      %p32 = por %p30, %p31
      %p33 = scmp.ne.s32.totalorder %s25, %s28
      %p34 = scmp.eq.s32.totalorder %s15, 0
      %p35 = por %p33, %p34
      %p36 = scmp.ne.s32.totalorder %s25, %s28
      %p37 = scmp.eq.s32.totalorder %s20, 3
      %p38 = por %p36, %p37
      %p39 = scmp.ne.s32.totalorder %s28, %s29
      %p40 = scmp.eq.s32.totalorder %s20, 0
      %p41 = por %p39, %p40
      %p42 = scmp.ne.s32.totalorder %s28, %s29
      %p43 = scmp.eq.s32.totalorder %s21, 3
      %p44 = por %p42, %p43
      %p46 = scmp.ne.s32.totalorder %s29, %s45
      %p47 = scmp.eq.s32.totalorder %s21, 0
      %p48 = por %p46, %p47
      %s50 = sadd.s32 %s49, 1
      %p53 = scmp.eq.s32.totalorder %s15, 3
      %p54 = scmp.ne.s32.totalorder %s49, %s51
      %p55 = scmp.eq.s32.totalorder %s15, 0
      %p56 = por %p54, %p55
      %p57 = scmp.ne.s32.totalorder %s49, %s51
      %p58 = scmp.eq.s32.totalorder %s20, 3
      %p59 = por %p57, %p58
      %p60 = scmp.ne.s32.totalorder %s51, %s52
      %p61 = scmp.eq.s32.totalorder %s20, 0
      %p62 = por %p60, %p61
      %p63 = scmp.ne.s32.totalorder %s51, %s52
      %p64 = scmp.eq.s32.totalorder %s21, 3
      %p65 = por %p63, %p64
      %p67 = scmp.ne.s32.totalorder %s52, %s66
      %p68 = scmp.eq.s32.totalorder %s21, 0
      %p69 = por %p67, %p68
      %s71 = sadd.s32 %s70, 1
      %p74 = scmp.eq.s32.totalorder %s15, 3
      %p75 = scmp.ne.s32.totalorder %s70, %s72
      %p76 = scmp.eq.s32.totalorder %s15, 0
      %p77 = por %p75, %p76
      %p78 = scmp.ne.s32.totalorder %s70, %s72
      %p79 = scmp.eq.s32.totalorder %s20, 3
      %p80 = por %p78, %p79
      %p81 = scmp.ne.s32.totalorder %s72, %s73
      %p82 = scmp.eq.s32.totalorder %s20, 0
      %p83 = por %p81, %p82
      %p84 = scmp.ne.s32.totalorder %s72, %s73
      %p85 = scmp.eq.s32.totalorder %s21, 3
      %p86 = por %p84, %p85
      %p88 = scmp.ne.s32.totalorder %s73, %s87
      %p89 = scmp.eq.s32.totalorder %s21, 0
      %p90 = por %p88, %p89
      %s91 = ssub.s32 %s15, %s22
      %p92 = scmp.eq.s32.totalorder %s91, 0
      %s94 = sadd.s32 %s93, 1
      %s95 = scalar_select %p92, %s93, %s94
      %p98 = pneg %p92
      %p99 = scmp.eq.s32.totalorder %s15, 3
      %p100 = por %p98, %p99
      %p101 = scmp.ne.s32.totalorder %s93, %s96
      %p102 = scmp.eq.s32.totalorder %s15, 0
      %p103 = por %p101, %p102
      %p104 = scmp.ne.s32.totalorder %s93, %s96
      %p105 = scmp.eq.s32.totalorder %s20, 3
      %p106 = por %p104, %p105
      %p107 = scmp.ne.s32.totalorder %s96, %s97
      %p108 = scmp.eq.s32.totalorder %s20, 0
      %p109 = por %p107, %p108
      %p110 = scmp.ne.s32.totalorder %s96, %s97
      %p111 = scmp.eq.s32.totalorder %s21, 3
      %p112 = por %p110, %p111
      %p114 = scmp.ne.s32.totalorder %s97, %s113
      %p115 = scmp.eq.s32.totalorder %s21, 0
      %p116 = por %p114, %p115
      %p117 = scmp.le.s32.totalorder 1, %s15
      %p118 = scmp.lt.s32.totalorder %s15, 5
      %p119 = pnand %p117, %p118
      %p120 = pneg %p119
      // Predicated region
      $region9: #{tpu_custom_call.1} parent=5 // pred_check
        _
      $region10: #{tpu_custom_call.1} parent=5 // pred_check_branch
        %122 = sbr.rel (%p119) target = $region12
      $region11: #{tpu_custom_call.1} parent=5 // pred_region
        %s123 = ssub.s32 %s15, 1
        // Predicated region
        $region13: #{tpu_custom_call.1} parent=11 // pred_check
          %p124 = pneg %p62
        $region14: #{tpu_custom_call.1} parent=11 // pred_check_branch
          %126 = sbr.rel (%p124) target = $region16
        $region15: #{tpu_custom_call.1} parent=11 // pred_region
          _
        $region16: #{tpu_custom_call.1} parent=11 // pred_fallthru
          _
        // Predicated region
        $region17: #{tpu_custom_call.1} parent=11 // pred_check
          %p127 = pneg %p83
        $region18: #{tpu_custom_call.1} parent=11 // pred_check_branch
          %129 = sbr.rel (%p127) target = $region20
        $region19: #{tpu_custom_call.1} parent=11 // pred_region
          _
        $region20: #{tpu_custom_call.1} parent=11 // pred_fallthru
          _
      $region12: #{tpu_custom_call.1} parent=5 // pred_fallthru
        _
      %p130 = scmp.lt.s32.totalorder %s15, 4
      // Predicated region
      $region21: #{tpu_custom_call.1} parent=5 // pred_check
        %p131 = pneg %p130
      $region22: #{tpu_custom_call.1} parent=5 // pred_check_branch
        %133 = sbr.rel (%p131) target = $region24
      $region23: #{tpu_custom_call.1} parent=5 // pred_region
        // Predicated region
        $region25: #{tpu_custom_call.1} parent=23 // pred_check
          %p134 = pneg %p35
        $region26: #{tpu_custom_call.1} parent=23 // pred_check_branch
          %136 = sbr.rel (%p134) target = $region28
        $region27: #{tpu_custom_call.1} parent=23 // pred_region
          %s137 = sand.u32 %s25, 1
          %s138 = scalar_lea.sflag [#allocation3], %s137
          %s139 = sand.u32 %s25, 1
          %s140 = smul.addr %s139, 32
          %s141 = scalar_lea.vmem [#allocation2], %s140
          %s142 = smul.u32 2, %s15
          %s144 = ssub.s32 512, 512
          %145 = vsyncadd %s138, %s144
          %s146 = smul.addr %s142, 2
          %s147 = smul.addr %s146, 128
          %s148 = scalar_lea.hbm %s0, %s147
          %s149 = sshll.u32 %s141, 4
          %s150 = int_to_ptr.vmem [resolvable:$true] %s149
          %155 = dma.hbm_to_vmem [thread:$0]  %s148, 512, %s150, %s138, 128, 128, 8
        $region28: #{tpu_custom_call.1} parent=23 // pred_fallthru
          _
      $region24: #{tpu_custom_call.1} parent=5 // pred_fallthru
        _
      %p156 = scmp.le.s32.totalorder 1, %s15
      %p157 = scmp.lt.s32.totalorder %s15, 5
      %p158 = pnand %p156, %p157
      %p159 = pneg %p158
      // Predicated region
      $region29: #{tpu_custom_call.1} parent=5 // pred_check
        _
      $region30: #{tpu_custom_call.1} parent=5 // pred_check_branch
        %161 = sbr.rel (%p158) target = $region32
      $region31: #{tpu_custom_call.1} parent=5 // pred_region
        %s162 = ssub.s32 %s15, 1
        %s163 = sand.u32 %s28, 1
        %s164 = scalar_lea.sflag [#allocation3], %s163
        %s165 = sand.u32 %s28, 1
        %s166 = smul.addr %s165, 32
        %s167 = scalar_lea.vmem [#allocation2], %s166
        // Predicated region
        $region33: #{tpu_custom_call.1} parent=31 // pred_check
          %p168 = pneg %p41
        $region34: #{tpu_custom_call.1} parent=31 // pred_check_branch
          %170 = sbr.rel (%p168) target = $region36
        $region35: #{tpu_custom_call.1} parent=31 // pred_region
          %171 = dma.done %s164, 512
        $region36: #{tpu_custom_call.1} parent=31 // pred_fallthru
          _
        %s172 = sand.u32 %s28, 1
        %s173 = scalar_lea.sflag [#allocation3], %s172
        %s174 = sand.u32 %s28, 1
        %s175 = smul.addr %s174, 32
        %s176 = scalar_lea.vmem [#allocation2], %s175
        %p177 = pneg %p41
        %p178 = pneg %p38
        %p179 = pneg %p62
        %p180 = pneg %p59
        %p181 = pneg %p83
        %p182 = pneg %p80
        %p183 = pneg %p109
        %p184 = pneg %p106
        %s185 = sand.u32 %s96, 1
        %s186 = scalar_lea.sflag [#allocation4], %s185
        %s187 = sand.u32 %s96, 1
        %s188 = smul.addr %s187, 176
        %s189 = scalar_lea.vmem [#allocation5], %s188
        %s190 = smul.u32 2, %s20
        %s191 = smul.u32 2, %s20
        %v193 = vld [vmem:[%s1] sm:$0xf]
        %v194 = vld [vmem:[%s1 + $0x4] sm:$0xf]
        %v195 = vld [vmem:[%s1 + $0x8] sm:$0xf]
        %v196 = vld [vmem:[%s1 + $0xc] sm:$0xf]
        %v197 = vld [vmem:[%s1 + $0x10] sm:$0xf]
        %v198 = vld [vmem:[%s1 + $0x14] sm:$0xf]
        %v199 = vld [vmem:[%s1 + $0x18] sm:$0xf]
        %v200 = vld [vmem:[%s1 + $0x1c] sm:$0xf]
        %v201 = vld [vmem:[%s1 + $0x20] sm:$0xf]
        %v202 = vld [vmem:[%s1 + $0x24] sm:$0xf]
        %v203 = vld [vmem:[%s1 + $0x28] sm:$0xf]
        %v204 = vld [vmem:[%s2] sm:$0xf]
        %v205 = vld [vmem:[%s2 + $0x4] sm:$0xf]
        %v206 = vld [vmem:[%s167] sm:$0xff]
        %v207 = vld [vmem:[%s167 + $0x8] sm:$0xff]
        %v208 = vld [vmem:[%s167 + $0x10] sm:$0xff]
        %v209 = vld [vmem:[%s167 + $0x18] sm:$0xff]
        %v210 = vpack.c.bf16 %v207, %v206
        %v211 = vpack.c.bf16 %v209, %v208
        %v214 = vunpack.c.l.b16 %v204
        %v215 = vunpack.c.l.b16 %v205
        %v216 = vpack.c.b16 %v215, %v214
        %vm218 = vcmask 130048
        %v220 = vsel %vm218, %v210, 0
        %v223 = vsel %vm218, %v211, 0
        %225 = vmatprep.subr.bf16.mxu0 0
        %226 = vmatpush1.bf16.msra.mxu0 %v216
        %227 = vmatprep.subr.bf16.mxu0 0
        %228 = vmatpush1.bf16.msra.mxu0 0
        %229 = vmatprep.subr.bf16.mxu0 0
        %230 = vmatpush1.bf16.msra.mxu0 0
        %231 = vmatprep.subr.bf16.mxu0 0
        %232 = vmatpush1.bf16.msra.mxu0 0
        %233 = vmatprep.subr.bf16.mxu0 0
        %234 = vmatpush1.bf16.msra.mxu0 0
        %235 = vmatprep.subr.bf16.mxu0 0
        %236 = vmatpush1.bf16.msra.mxu0 0
        %237 = vmatprep.subr.bf16.mxu0 0
        %238 = vmatpush1.bf16.msra.mxu0 0
        %239 = vmatprep.subr.bf16.mxu0 0
        %240 = vmatpush1.bf16.msra.mxu0 0
        %241 = vmatprep.subr.bf16.mxu0 0
        %242 = vmatpush1.bf16.msra.mxu0 0
        %243 = vmatprep.subr.bf16.mxu0 0
        %244 = vmatpush1.bf16.msra.mxu0 0
        %245 = vmatprep.subr.bf16.mxu0 0
        %246 = vmatpush1.bf16.msra.mxu0 0
        %247 = vmatprep.subr.bf16.mxu0 0
        %248 = vmatpush1.bf16.msra.mxu0 0
        %249 = vmatprep.subr.bf16.mxu0 0
        %250 = vmatpush1.bf16.msra.mxu0 0
        %251 = vmatprep.subr.bf16.mxu0 0
        %252 = vmatpush1.bf16.msra.mxu0 0
        %253 = vmatprep.subr.bf16.mxu0 0
        %254 = vmatpush1.bf16.msra.mxu0 0
        %255 = vmatprep.subr.bf16.mxu0 0
        %256 = vmatpush1.bf16.msra.mxu0 0
        %257 = vmatprep.mubr.bf16.mxu0 0
        %258 = vmatmul.mubr.bf16.gmra.mrb[0].mxu0 %v220
        %v259 = vpop.f32.mrb[0].mxu0
        %v260 = vadd.f32 0.0, %v259
        %v261 = vpop.f32.mrb[0].mxu0
        %v262 = vpop.f32.mrb[0].mxu0
        %v263 = vadd.f32 0.0, %v262
        %v264 = vpop.f32.mrb[0].mxu0
        %265 = vmatprep.mubr.bf16.mxu0 0
        %266 = vmatmul.mubr.bf16.gmra.mrb[0].mxu0 %v223
        %v267 = vpop.f32.mrb[0].mxu0
        %v268 = vadd.f32 0.0, %v267
        %v269 = vpop.f32.mrb[0].mxu0
        %v270 = vpop.f32.mrb[0].mxu0
        %v271 = vadd.f32 0.0, %v270
        %v272 = vpop.f32.mrb[0].mxu0
        %273 = vdwg.mxu0
        %v274 = vpack.c.bf16 %v263, %v260
        %v275 = vpack.c.bf16 %v271, %v268
        %v287 = vunpack.c.l.b16 %v193
        %v288 = vunpack.c.l.b16 %v194
        %v289 = vunpack.c.l.b16 %v195
        %v290 = vunpack.c.l.b16 %v196
        %v291 = vunpack.c.l.b16 %v197
        %v292 = vunpack.c.l.b16 %v198
        %v293 = vunpack.c.l.b16 %v199
        %v294 = vunpack.c.l.b16 %v200
        %v295 = vunpack.c.l.b16 %v201
        %v296 = vunpack.c.l.b16 %v202
        %v297 = vunpack.c.l.b16 %v203
        %v298 = vpack.c.b16 %v288, %v287
        %v299 = vpack.c.b16 %v290, %v289
        %v300 = vpack.c.b16 %v292, %v291
        %v301 = vpack.c.b16 %v294, %v293
        %v302 = vpack.c.b16 %v296, %v295
        %v303 = vpack.c.b16 %v297, %v297
        %v305 = vsel %vm218, %v298, 0
        %v308 = vsel %vm218, %v299, 0
        %v311 = vsel %vm218, %v300, 0
        %v314 = vsel %vm218, %v301, 0
        %v317 = vsel %vm218, %v302, 0
        %v320 = vsel %vm218, %v303, 0
        %322 = vmatprep.subr.bf16.mxu0 0
        %323 = vmatpush1.bf16.msra.mxu0 %v274
        %324 = vmatprep.subr.bf16.mxu0 0
        %325 = vmatpush1.bf16.msra.mxu0 0
        %326 = vmatprep.subr.bf16.mxu0 0
        %327 = vmatpush1.bf16.msra.mxu0 0
        %328 = vmatprep.subr.bf16.mxu0 0
        %329 = vmatpush1.bf16.msra.mxu0 0
        %330 = vmatprep.subr.bf16.mxu0 0
        %331 = vmatpush1.bf16.msra.mxu0 0
        %332 = vmatprep.subr.bf16.mxu0 0
        %333 = vmatpush1.bf16.msra.mxu0 0
        %334 = vmatprep.subr.bf16.mxu0 0
        %335 = vmatpush1.bf16.msra.mxu0 0
        %336 = vmatprep.subr.bf16.mxu0 0
        %337 = vmatpush1.bf16.msra.mxu0 0
        %338 = vmatprep.subr.bf16.mxu0 0
        %339 = vmatpush1.bf16.msra.mxu0 0
        %340 = vmatprep.subr.bf16.mxu0 0
        %341 = vmatpush1.bf16.msra.mxu0 0
        %342 = vmatprep.subr.bf16.mxu0 0
        %343 = vmatpush1.bf16.msra.mxu0 0
        %344 = vmatprep.subr.bf16.mxu0 0
        %345 = vmatpush1.bf16.msra.mxu0 0
        %346 = vmatprep.subr.bf16.mxu0 0
        %347 = vmatpush1.bf16.msra.mxu0 0
        %348 = vmatprep.subr.bf16.mxu0 0
        %349 = vmatpush1.bf16.msra.mxu0 0
        %350 = vmatprep.subr.bf16.mxu0 0
        %351 = vmatpush1.bf16.msra.mxu0 0
        %352 = vmatprep.subr.bf16.mxu0 0
        %353 = vmatpush1.bf16.msra.mxu0 0
        %354 = vmatprep.mubr.bf16.mxu0 0
        %355 = vmatmul.mubr.bf16.gmra.mrb[0].mxu0 %v305
        %v356 = vpop.f32.mrb[0].mxu0
        %v357 = vadd.f32 0.0, %v356
        %v358 = vpop.f32.mrb[0].mxu0
        %v359 = vpop.f32.mrb[0].mxu0
        %v360 = vadd.f32 0.0, %v359
        %v361 = vpop.f32.mrb[0].mxu0
        %362 = vmatprep.mubr.bf16.mxu0 0
        %363 = vmatmul.mubr.bf16.gmra.mrb[0].mxu0 %v308
        %v364 = vpop.f32.mrb[0].mxu0
        %v365 = vadd.f32 0.0, %v364
        %v366 = vpop.f32.mrb[0].mxu0
        %v367 = vpop.f32.mrb[0].mxu0
        %v368 = vadd.f32 0.0, %v367
        %v369 = vpop.f32.mrb[0].mxu0
        %370 = vmatprep.mubr.bf16.mxu0 0
        %371 = vmatmul.mubr.bf16.gmra.mrb[0].mxu0 %v311
        %v372 = vpop.f32.mrb[0].mxu0
        %v373 = vadd.f32 0.0, %v372
        %v374 = vpop.f32.mrb[0].mxu0
        %v375 = vpop.f32.mrb[0].mxu0
        %v376 = vadd.f32 0.0, %v375
        %v377 = vpop.f32.mrb[0].mxu0
        %378 = vmatprep.mubr.bf16.mxu0 0
        %379 = vmatmul.mubr.bf16.gmra.mrb[0].mxu0 %v314
        %v380 = vpop.f32.mrb[0].mxu0
        %v381 = vadd.f32 0.0, %v380
        %v382 = vpop.f32.mrb[0].mxu0
        %v383 = vpop.f32.mrb[0].mxu0
        %v384 = vadd.f32 0.0, %v383
        %v385 = vpop.f32.mrb[0].mxu0
        %386 = vmatprep.mubr.bf16.mxu0 0
        %387 = vmatmul.mubr.bf16.gmra.mrb[0].mxu0 %v317
        %v388 = vpop.f32.mrb[0].mxu0
        %v389 = vadd.f32 0.0, %v388
        %v390 = vpop.f32.mrb[0].mxu0
        %v391 = vpop.f32.mrb[0].mxu0
        %v392 = vadd.f32 0.0, %v391
        %v393 = vpop.f32.mrb[0].mxu0
        %394 = vmatprep.mubr.bf16.mxu0 0
        %395 = vmatmul.mubr.bf16.gmra.mrb[0].mxu0 %v320
        %v396 = vpop.f32.mrb[0].mxu0
        %v397 = vadd.f32 0.0, %v396
        %v398 = vpop.f32.mrb[0].mxu0
        %v399 = vpop.f32.mrb[0].mxu0
        %v400 = vpop.f32.mrb[0].mxu0
        %401 = vdwg.mxu0
        %vm402 = vcmask 719872
        %403 = vst.msk [vmem:[%s189] sm:$0xff] %vm402, %v357
        %404 = vst.msk [vmem:[%s189 + $0x8] sm:$0xff] %vm402, %v360
        %405 = vst.msk [vmem:[%s189 + $0x10] sm:$0xff] %vm402, %v365
        %406 = vst.msk [vmem:[%s189 + $0x18] sm:$0xff] %vm402, %v368
        %407 = vst.msk [vmem:[%s189 + $0x20] sm:$0xff] %vm402, %v373
        %408 = vst.msk [vmem:[%s189 + $0x28] sm:$0xff] %vm402, %v376
        %409 = vst.msk [vmem:[%s189 + $0x30] sm:$0xff] %vm402, %v381
        %410 = vst.msk [vmem:[%s189 + $0x38] sm:$0xff] %vm402, %v384
        %411 = vst.msk [vmem:[%s189 + $0x40] sm:$0xff] %vm402, %v389
        %412 = vst.msk [vmem:[%s189 + $0x48] sm:$0xff] %vm402, %v392
        %413 = vst.msk [vmem:[%s189 + $0x50] sm:$0xff] %vm402, %v397
        %414 = vmatprep.subr.bf16.mxu0 0
        %415 = vmatpush1.bf16.msra.mxu0 %v275
        %416 = vmatprep.subr.bf16.mxu0 0
        %417 = vmatpush1.bf16.msra.mxu0 0
        %418 = vmatprep.subr.bf16.mxu0 0
        %419 = vmatpush1.bf16.msra.mxu0 0
        %420 = vmatprep.subr.bf16.mxu0 0
        %421 = vmatpush1.bf16.msra.mxu0 0
        %422 = vmatprep.subr.bf16.mxu0 0
        %423 = vmatpush1.bf16.msra.mxu0 0
        %424 = vmatprep.subr.bf16.mxu0 0
        %425 = vmatpush1.bf16.msra.mxu0 0
        %426 = vmatprep.subr.bf16.mxu0 0
        %427 = vmatpush1.bf16.msra.mxu0 0
        %428 = vmatprep.subr.bf16.mxu0 0
        %429 = vmatpush1.bf16.msra.mxu0 0
        %430 = vmatprep.subr.bf16.mxu0 0
        %431 = vmatpush1.bf16.msra.mxu0 0
        %432 = vmatprep.subr.bf16.mxu0 0
        %433 = vmatpush1.bf16.msra.mxu0 0
        %434 = vmatprep.subr.bf16.mxu0 0
        %435 = vmatpush1.bf16.msra.mxu0 0
        %436 = vmatprep.subr.bf16.mxu0 0
        %437 = vmatpush1.bf16.msra.mxu0 0
        %438 = vmatprep.subr.bf16.mxu0 0
        %439 = vmatpush1.bf16.msra.mxu0 0
        %440 = vmatprep.subr.bf16.mxu0 0
        %441 = vmatpush1.bf16.msra.mxu0 0
        %442 = vmatprep.subr.bf16.mxu0 0
        %443 = vmatpush1.bf16.msra.mxu0 0
        %444 = vmatprep.subr.bf16.mxu0 0
        %445 = vmatpush1.bf16.msra.mxu0 0
        %446 = vmatprep.mubr.bf16.mxu0 0
        %447 = vmatmul.mubr.bf16.gmra.mrb[0].mxu0 %v305
        %v448 = vpop.f32.mrb[0].mxu0
        %v449 = vadd.f32 0.0, %v448
        %v450 = vpop.f32.mrb[0].mxu0
        %v451 = vpop.f32.mrb[0].mxu0
        %v452 = vadd.f32 0.0, %v451
        %v453 = vpop.f32.mrb[0].mxu0
        %454 = vmatprep.mubr.bf16.mxu0 0
        %455 = vmatmul.mubr.bf16.gmra.mrb[0].mxu0 %v308
        %v456 = vpop.f32.mrb[0].mxu0
        %v457 = vadd.f32 0.0, %v456
        %v458 = vpop.f32.mrb[0].mxu0
        %v459 = vpop.f32.mrb[0].mxu0
        %v460 = vadd.f32 0.0, %v459
        %v461 = vpop.f32.mrb[0].mxu0
        %462 = vmatprep.mubr.bf16.mxu0 0
        %463 = vmatmul.mubr.bf16.gmra.mrb[0].mxu0 %v311
        %v464 = vpop.f32.mrb[0].mxu0
        %v465 = vadd.f32 0.0, %v464
        %v466 = vpop.f32.mrb[0].mxu0
        %v467 = vpop.f32.mrb[0].mxu0
        %v468 = vadd.f32 0.0, %v467
        %v469 = vpop.f32.mrb[0].mxu0
        %470 = vmatprep.mubr.bf16.mxu0 0
        %471 = vmatmul.mubr.bf16.gmra.mrb[0].mxu0 %v314
        %v472 = vpop.f32.mrb[0].mxu0
        %v473 = vadd.f32 0.0, %v472
        %v474 = vpop.f32.mrb[0].mxu0
        %v475 = vpop.f32.mrb[0].mxu0
        %v476 = vadd.f32 0.0, %v475
        %v477 = vpop.f32.mrb[0].mxu0
        %478 = vmatprep.mubr.bf16.mxu0 0
        %479 = vmatmul.mubr.bf16.gmra.mrb[0].mxu0 %v317
        %v480 = vpop.f32.mrb[0].mxu0
        %v481 = vadd.f32 0.0, %v480
        %v482 = vpop.f32.mrb[0].mxu0
        %v483 = vpop.f32.mrb[0].mxu0
        %v484 = vadd.f32 0.0, %v483
        %v485 = vpop.f32.mrb[0].mxu0
        %486 = vmatprep.mubr.bf16.mxu0 0
        %487 = vmatmul.mubr.bf16.gmra.mrb[0].mxu0 %v320
        %v488 = vpop.f32.mrb[0].mxu0
        %v489 = vadd.f32 0.0, %v488
        %v490 = vpop.f32.mrb[0].mxu0
        %v491 = vpop.f32.mrb[0].mxu0
        %v492 = vpop.f32.mrb[0].mxu0
        %493 = vdwg.mxu0
        %s494 = scalar_lea.vmem %s189, 88 [#allocation5]
        %495 = vst.msk [vmem:[%s494] sm:$0xff] %vm402, %v449
        %496 = vst.msk [vmem:[%s494 + $0x8] sm:$0xff] %vm402, %v452
        %497 = vst.msk [vmem:[%s494 + $0x10] sm:$0xff] %vm402, %v457
        %498 = vst.msk [vmem:[%s494 + $0x18] sm:$0xff] %vm402, %v460
        %499 = vst.msk [vmem:[%s494 + $0x20] sm:$0xff] %vm402, %v465
        %500 = vst.msk [vmem:[%s494 + $0x28] sm:$0xff] %vm402, %v468
        %501 = vst.msk [vmem:[%s494 + $0x30] sm:$0xff] %vm402, %v473
        %502 = vst.msk [vmem:[%s494 + $0x38] sm:$0xff] %vm402, %v476
        %503 = vst.msk [vmem:[%s494 + $0x40] sm:$0xff] %vm402, %v481
        %504 = vst.msk [vmem:[%s494 + $0x48] sm:$0xff] %vm402, %v484
        %505 = vst.msk [vmem:[%s494 + $0x50] sm:$0xff] %vm402, %v489
        %s506 = sand.u32 %s96, 1
        %s507 = scalar_lea.sflag [#allocation4], %s506
        %s508 = sand.u32 %s96, 1
        %s509 = smul.addr %s508, 176
        %s510 = scalar_lea.vmem [#allocation5], %s509
        // Predicated region
        $region37: #{tpu_custom_call.1} parent=31 // pred_check
          %p511 = pneg %p106
        $region38: #{tpu_custom_call.1} parent=31 // pred_check_branch
          %513 = sbr.rel (%p511) target = $region40
        $region39: #{tpu_custom_call.1} parent=31 // pred_region
          %s514 = smul.u32 2, %s20
          %s516 = ssub.s32 2816, 2816
          %517 = vsyncadd %s507, %s516
          %s518 = smul.addr %s514, 11
          %s519 = smul.addr %s518, 128
          %s520 = scalar_lea.hbm %s3, %s519
          %s521 = sshll.u32 %s510, 4
          %s522 = int_to_ptr.vmem [resolvable:$true] %s521
          %527 = dma.vmem_to_hbm [thread:$0]  %s522, 2816, %s520, %s507, 128, 128, 8
        $region40: #{tpu_custom_call.1} parent=31 // pred_fallthru
          _
      $region32: #{tpu_custom_call.1} parent=5 // pred_fallthru
        _
      %p528 = scmp.le.s32.totalorder 2, %s15
      // Predicated region
      $region41: #{tpu_custom_call.1} parent=5 // pred_check
        %p529 = pneg %p528
      $region42: #{tpu_custom_call.1} parent=5 // pred_check_branch
        %531 = sbr.rel (%p529) target = $region44
      $region43: #{tpu_custom_call.1} parent=5 // pred_region
        %s532 = ssub.s32 %s15, 2
        // Predicated region
        $region45: #{tpu_custom_call.1} parent=43 // pred_check
          %p533 = pneg %p112
        $region46: #{tpu_custom_call.1} parent=43 // pred_check_branch
          %535 = sbr.rel (%p533) target = $region48
        $region47: #{tpu_custom_call.1} parent=43 // pred_region
          %s536 = sand.u32 %s97, 1
          %s537 = scalar_lea.sflag [#allocation4], %s536
          %s538 = sand.u32 %s97, 1
          %s539 = smul.addr %s538, 176
          %s540 = scalar_lea.vmem [#allocation5], %s539
          %541 = dma.done %s537, 2816
        $region48: #{tpu_custom_call.1} parent=43 // pred_fallthru
          _
      $region44: #{tpu_custom_call.1} parent=5 // pred_fallthru
        _
    $region6: #{tpu_custom_call.1} parent=1 // loop_footer
      %s19 = sadd.s32 1, %s15
    $region7: #{tpu_custom_call.1} parent=1 // loop_footer_branch
      %14 = sbr.rel target = $region3
    $region8: #{tpu_custom_call.1} parent=1 // loop_exit
      _
    %542 = vsyncpa [#allocation3], 1
    %s543 = scalar_lea.sflag [#allocation3], 1
    %544 = vsyncpa %s543, 1
    %545 = vsyncpa [#allocation4], 1
    %s546 = scalar_lea.sflag [#allocation4], 1
    %547 = vsyncpa %s546, 1

// kernel: tpu_custom_call.1
$region0: #{tpu_custom_call.1}
  #allocation0 [shape = 'u32[]', space=smem, size = 0x4, offset = 0x4, fixed_abs, tag = 'smem constant byte address 0x4 - core index']
  #allocation1 [shape = 'u32[144,128]{1,0:T(1,128)}', space=vmem, size = 0x12000, scoped, tag = 'internal scratch']
  %s0 = inlined_call_operand.hbm [shape: f32[8,16,16], index: 0, kind: input, shape index: {}]
  %s1 = inlined_call_operand.vmem [shape: bf16[88,16], index: 1, kind: input, shape index: {}]
  %s2 = inlined_call_operand.vmem [shape: bf16[16,88], index: 2, kind: input, shape index: {}]
  %s3 = inlined_call_operand.hbm [shape: f32[8,88,88], index: 3, kind: output, shape index: {}]
  %s4 = sld [smem:[#allocation0]]
  $region49: #{tpu_custom_call.1} parent=0
    _
  %s6 = ssub.s32 1, %s4
  %s7 = scalar_select 0, %s6, %s4
  $region1: #{tpu_custom_call.1} parent=0
    #allocation2 [shape = 'u8[32768]{0}', space=vmem, size = 0x8000, scoped, tag = 'input window, operand 0']
    #allocation3 [shape = 's32[2]{0}', space=sflag, size = 0x8, scoped, tag = 'scoped memory for tpu_custom_call.1']
    #allocation4 [shape = 's32[2]{0}', space=sflag, size = 0x8, scoped, tag = 'scoped memory for tpu_custom_call.1']
    #allocation5 [shape = 'u8[180224]{0}', space=vmem, size = 0x2c000, scoped, tag = 'output window, operand 0']
    %8 = vsyncpa [#allocation3], 0
    %s9 = scalar_lea.sflag [#allocation3], 1
    %10 = vsyncpa %s9, 0
    %11 = vsyncpa [#allocation4], 0
    %s12 = scalar_lea.sflag [#allocation4], 1
    %13 = vsyncpa %s12, 0
    loop: start=0, step=1, limit=6
    $region2: #{tpu_custom_call.1} parent=1 // loop_pre_header
      _
    $region3: #{tpu_custom_call.1} parent=1 // loop_header
      %s15 = sphi 0, %s19
      %p16 = scmp.ge.s32.totalorder %s15, 6
      %s25 = sphi 0, %s27
      %s28 = sphi 0, %s25
      %s29 = sphi 0, %s28
      %s45 = sphi 0, %s29
      %s49 = sphi 0, %s49
      %s51 = sphi 0, %s49
      %s52 = sphi 0, %s51
      %s66 = sphi 0, %s52
      %s70 = sphi 0, %s70
      %s72 = sphi 0, %s70
      %s73 = sphi 0, %s72
      %s87 = sphi 0, %s73
      %s93 = sphi 0, %s95
      %s96 = sphi 0, %s93
      %s97 = sphi 0, %s96
      %s113 = sphi 0, %s97
    $region4: #{tpu_custom_call.1} parent=1 // loop_header_branch
      %18 = sbr.rel (%p16) target = $region8
    $region5: #{tpu_custom_call.1} parent=1 // loop_body
      %s20 = ssub.s32 %s15, 1
      %s21 = ssub.s32 %s15, 2
      %s22 = sadd.s32 %s15, 1
      %s23 = ssub.s32 %s15, %s22
      %p24 = scmp.eq.s32.totalorder %s23, 0
      %s26 = sadd.s32 %s25, 1
      %s27 = scalar_select %p24, %s25, %s26
      %p30 = pneg %p24
      %p31 = scmp.eq.s32.totalorder %s15, 3
      %p32 = por %p30, %p31
      %p33 = scmp.ne.s32.totalorder %s25, %s28
      %p34 = scmp.eq.s32.totalorder %s15, 0
      %p35 = por %p33, %p34
      %p36 = scmp.ne.s32.totalorder %s25, %s28
      %p37 = scmp.eq.s32.totalorder %s20, 3
      %p38 = por %p36, %p37
      %p39 = scmp.ne.s32.totalorder %s28, %s29
      %p40 = scmp.eq.s32.totalorder %s20, 0
      %p41 = por %p39, %p40
      %p42 = scmp.ne.s32.totalorder %s28, %s29
      %p43 = scmp.eq.s32.totalorder %s21, 3
      %p44 = por %p42, %p43
      %p46 = scmp.ne.s32.totalorder %s29, %s45
      %p47 = scmp.eq.s32.totalorder %s21, 0
      %p48 = por %p46, %p47
      %s50 = sadd.s32 %s49, 1
      %p53 = scmp.eq.s32.totalorder %s15, 3
      %p54 = scmp.ne.s32.totalorder %s49, %s51
      %p55 = scmp.eq.s32.totalorder %s15, 0
      %p56 = por %p54, %p55
      %p57 = scmp.ne.s32.totalorder %s49, %s51
      %p58 = scmp.eq.s32.totalorder %s20, 3
      %p59 = por %p57, %p58
      %p60 = scmp.ne.s32.totalorder %s51, %s52
      %p61 = scmp.eq.s32.totalorder %s20, 0
      %p62 = por %p60, %p61
      %p63 = scmp.ne.s32.totalorder %s51, %s52
      %p64 = scmp.eq.s32.totalorder %s21, 3
      %p65 = por %p63, %p64
      %p67 = scmp.ne.s32.totalorder %s52, %s66
      %p68 = scmp.eq.s32.totalorder %s21, 0
      %p69 = por %p67, %p68
      %s71 = sadd.s32 %s70, 1
      %p74 = scmp.eq.s32.totalorder %s15, 3
      %p75 = scmp.ne.s32.totalorder %s70, %s72
      %p76 = scmp.eq.s32.totalorder %s15, 0
      %p77 = por %p75, %p76
      %p78 = scmp.ne.s32.totalorder %s70, %s72
      %p79 = scmp.eq.s32.totalorder %s20, 3
      %p80 = por %p78, %p79
      %p81 = scmp.ne.s32.totalorder %s72, %s73
      %p82 = scmp.eq.s32.totalorder %s20, 0
      %p83 = por %p81, %p82
      %p84 = scmp.ne.s32.totalorder %s72, %s73
      %p85 = scmp.eq.s32.totalorder %s21, 3
      %p86 = por %p84, %p85
      %p88 = scmp.ne.s32.totalorder %s73, %s87
      %p89 = scmp.eq.s32.totalorder %s21, 0
      %p90 = por %p88, %p89
      %s91 = ssub.s32 %s15, %s22
      %p92 = scmp.eq.s32.totalorder %s91, 0
      %s94 = sadd.s32 %s93, 1
      %s95 = scalar_select %p92, %s93, %s94
      %p98 = pneg %p92
      %p99 = scmp.eq.s32.totalorder %s15, 3
      %p100 = por %p98, %p99
      %p101 = scmp.ne.s32.totalorder %s93, %s96
      %p102 = scmp.eq.s32.totalorder %s15, 0
      %p103 = por %p101, %p102
      %p104 = scmp.ne.s32.totalorder %s93, %s96
      %p105 = scmp.eq.s32.totalorder %s20, 3
      %p106 = por %p104, %p105
      %p107 = scmp.ne.s32.totalorder %s96, %s97
      %p108 = scmp.eq.s32.totalorder %s20, 0
      %p109 = por %p107, %p108
      %p110 = scmp.ne.s32.totalorder %s96, %s97
      %p111 = scmp.eq.s32.totalorder %s21, 3
      %p112 = por %p110, %p111
      %p114 = scmp.ne.s32.totalorder %s97, %s113
      %p115 = scmp.eq.s32.totalorder %s21, 0
      %p116 = por %p114, %p115
      %p117 = scmp.le.s32.totalorder 1, %s15
      %p118 = scmp.lt.s32.totalorder %s15, 5
      %p119 = pnand %p117, %p118
      %p120 = pneg %p119
      // Predicated region
      $region9: #{tpu_custom_call.1} parent=5 // pred_check
        _
      $region10: #{tpu_custom_call.1} parent=5 // pred_check_branch
        %122 = sbr.rel (%p119) target = $region12
      $region11: #{tpu_custom_call.1} parent=5 // pred_region
        %s123 = ssub.s32 %s15, 1
        // Predicated region
        $region13: #{tpu_custom_call.1} parent=11 // pred_check
          %p124 = pneg %p62
        $region14: #{tpu_custom_call.1} parent=11 // pred_check_branch
          %126 = sbr.rel (%p124) target = $region16
        $region15: #{tpu_custom_call.1} parent=11 // pred_region
          _
        $region16: #{tpu_custom_call.1} parent=11 // pred_fallthru
          _
        // Predicated region
        $region17: #{tpu_custom_call.1} parent=11 // pred_check
          %p127 = pneg %p83
        $region18: #{tpu_custom_call.1} parent=11 // pred_check_branch
          %129 = sbr.rel (%p127) target = $region20
        $region19: #{tpu_custom_call.1} parent=11 // pred_region
          _
        $region20: #{tpu_custom_call.1} parent=11 // pred_fallthru
          _
      $region12: #{tpu_custom_call.1} parent=5 // pred_fallthru
        _
      %p130 = scmp.lt.s32.totalorder %s15, 4
      // Predicated region
      $region21: #{tpu_custom_call.1} parent=5 // pred_check
        %p131 = pneg %p130
      $region22: #{tpu_custom_call.1} parent=5 // pred_check_branch
        %133 = sbr.rel (%p131) target = $region24
      $region23: #{tpu_custom_call.1} parent=5 // pred_region
        // Predicated region
        $region25: #{tpu_custom_call.1} parent=23 // pred_check
          %p134 = pneg %p35
        $region26: #{tpu_custom_call.1} parent=23 // pred_check_branch
          %136 = sbr.rel (%p134) target = $region28
        $region27: #{tpu_custom_call.1} parent=23 // pred_region
          %s137 = sand.u32 %s25, 1
          %s138 = scalar_lea.sflag [#allocation3], %s137
          %s139 = sand.u32 %s25, 1
          %s140 = smul.addr %s139, 32
          %s141 = scalar_lea.vmem [#allocation2], %s140
          %s142 = smul.u32 2, %s15
          %s144 = ssub.s32 512, 512
          %145 = vsyncadd %s138, %s144
          %s146 = smul.addr %s142, 2
          %s147 = smul.addr %s146, 128
          %s148 = scalar_lea.hbm %s0, %s147
          %s149 = sshll.u32 %s141, 4
          %s150 = int_to_ptr.vmem [resolvable:$true] %s149
          %155 = dma.hbm_to_vmem [thread:$0]  %s148, 512, %s150, %s138, 128, 128, 8
        $region28: #{tpu_custom_call.1} parent=23 // pred_fallthru
          _
      $region24: #{tpu_custom_call.1} parent=5 // pred_fallthru
        _
      %p156 = scmp.le.s32.totalorder 1, %s15
      %p157 = scmp.lt.s32.totalorder %s15, 5
      %p158 = pnand %p156, %p157
      %p159 = pneg %p158
      // Predicated region
      $region29: #{tpu_custom_call.1} parent=5 // pred_check
        _
      $region30: #{tpu_custom_call.1} parent=5 // pred_check_branch
        %161 = sbr.rel (%p158) target = $region32
      $region31: #{tpu_custom_call.1} parent=5 // pred_region
        %s162 = ssub.s32 %s15, 1
        %s163 = sand.u32 %s28, 1
        %s164 = scalar_lea.sflag [#allocation3], %s163
        %s165 = sand.u32 %s28, 1
        %s166 = smul.addr %s165, 32
        %s167 = scalar_lea.vmem [#allocation2], %s166
        // Predicated region
        $region33: #{tpu_custom_call.1} parent=31 // pred_check
          %p168 = pneg %p41
        $region34: #{tpu_custom_call.1} parent=31 // pred_check_branch
          %170 = sbr.rel (%p168) target = $region36
        $region35: #{tpu_custom_call.1} parent=31 // pred_region
          %171 = dma.done %s164, 512
        $region36: #{tpu_custom_call.1} parent=31 // pred_fallthru
          _
        %s172 = sand.u32 %s28, 1
        %s173 = scalar_lea.sflag [#allocation3], %s172
        %s174 = sand.u32 %s28, 1
        %s175 = smul.addr %s174, 32
        %s176 = scalar_lea.vmem [#allocation2], %s175
        %p177 = pneg %p41
        %p178 = pneg %p38
        %p179 = pneg %p62
        %p180 = pneg %p59
        %p181 = pneg %p83
        %p182 = pneg %p80
        %p183 = pneg %p109
        %p184 = pneg %p106
        %s185 = sand.u32 %s96, 1
        %s186 = scalar_lea.sflag [#allocation4], %s185
        %s187 = sand.u32 %s96, 1
        %s188 = smul.addr %s187, 176
        %s189 = scalar_lea.vmem [#allocation5], %s188
        %s190 = smul.u32 2, %s20
        %s191 = smul.u32 2, %s20
        %v193 = vld [vmem:[%s1] sm:$0xf]
        %v194 = vld [vmem:[%s1 + $0x4] sm:$0xf]
        %v195 = vld [vmem:[%s1 + $0x8] sm:$0xf]
        %v196 = vld [vmem:[%s1 + $0xc] sm:$0xf]
        %v197 = vld [vmem:[%s1 + $0x10] sm:$0xf]
        %v198 = vld [vmem:[%s1 + $0x14] sm:$0xf]
        %v199 = vld [vmem:[%s1 + $0x18] sm:$0xf]
        %v200 = vld [vmem:[%s1 + $0x1c] sm:$0xf]
        %v201 = vld [vmem:[%s1 + $0x20] sm:$0xf]
        %v202 = vld [vmem:[%s1 + $0x24] sm:$0xf]
        %v203 = vld [vmem:[%s1 + $0x28] sm:$0xf]
        %v204 = vld [vmem:[%s2] sm:$0xf]
        %v205 = vld [vmem:[%s2 + $0x4] sm:$0xf]
        %v206 = vld [vmem:[%s167] sm:$0xff]
        %v207 = vld [vmem:[%s167 + $0x8] sm:$0xff]
        %v208 = vld [vmem:[%s167 + $0x10] sm:$0xff]
        %v209 = vld [vmem:[%s167 + $0x18] sm:$0xff]
        %v210 = vpack.c.bf16 %v207, %v206
        %v211 = vpack.c.bf16 %v209, %v208
        %v214 = vunpack.c.l.b16 %v204
        %v215 = vunpack.c.l.b16 %v205
        %v216 = vpack.c.b16 %v215, %v214
        %vm218 = vcmask 130048
        %v220 = vsel %vm218, %v210, 0
        %v223 = vsel %vm218, %v211, 0
        %225 = vmatprep.subr.bf16.mxu0 0
        %226 = vmatpush1.bf16.msra.mxu0 %v216
        %227 = vmatprep.subr.bf16.mxu0 0
        %228 = vmatpush1.bf16.msra.mxu0 0
        %229 = vmatprep.subr.bf16.mxu0 0
        %230 = vmatpush1.bf16.msra.mxu0 0
        %231 = vmatprep.subr.bf16.mxu0 0
        %232 = vmatpush1.bf16.msra.mxu0 0
        %233 = vmatprep.subr.bf16.mxu0 0
        %234 = vmatpush1.bf16.msra.mxu0 0
        %235 = vmatprep.subr.bf16.mxu0 0
        %236 = vmatpush1.bf16.msra.mxu0 0
        %237 = vmatprep.subr.bf16.mxu0 0
        %238 = vmatpush1.bf16.msra.mxu0 0
        %239 = vmatprep.subr.bf16.mxu0 0
        %240 = vmatpush1.bf16.msra.mxu0 0
        %241 = vmatprep.subr.bf16.mxu0 0
        %242 = vmatpush1.bf16.msra.mxu0 0
        %243 = vmatprep.subr.bf16.mxu0 0
        %244 = vmatpush1.bf16.msra.mxu0 0
        %245 = vmatprep.subr.bf16.mxu0 0
        %246 = vmatpush1.bf16.msra.mxu0 0
        %247 = vmatprep.subr.bf16.mxu0 0
        %248 = vmatpush1.bf16.msra.mxu0 0
        %249 = vmatprep.subr.bf16.mxu0 0
        %250 = vmatpush1.bf16.msra.mxu0 0
        %251 = vmatprep.subr.bf16.mxu0 0
        %252 = vmatpush1.bf16.msra.mxu0 0
        %253 = vmatprep.subr.bf16.mxu0 0
        %254 = vmatpush1.bf16.msra.mxu0 0
        %255 = vmatprep.subr.bf16.mxu0 0
        %256 = vmatpush1.bf16.msra.mxu0 0
        %257 = vmatprep.mubr.bf16.mxu0 0
        %258 = vmatmul.mubr.bf16.gmra.mrb[0].mxu0 %v220
        %v259 = vpop.f32.mrb[0].mxu0
        %v260 = vadd.f32 0.0, %v259
        %v261 = vpop.f32.mrb[0].mxu0
        %v262 = vpop.f32.mrb[0].mxu0
        %v263 = vadd.f32 0.0, %v262
        %v264 = vpop.f32.mrb[0].mxu0
        %265 = vmatprep.mubr.bf16.mxu0 0
        %266 = vmatmul.mubr.bf16.gmra.mrb[0].mxu0 %v223
        %v267 = vpop.f32.mrb[0].mxu0
        %v268 = vadd.f32 0.0, %v267
        %v269 = vpop.f32.mrb[0].mxu0
        %v270 = vpop.f32.mrb[0].mxu0
        %v271 = vadd.f32 0.0, %v270
        %v272 = vpop.f32.mrb[0].mxu0
        %273 = vdwg.mxu0
        %v274 = vpack.c.bf16 %v263, %v260
        %v275 = vpack.c.bf16 %v271, %v268
        %v287 = vunpack.c.l.b16 %v193
        %v288 = vunpack.c.l.b16 %v194
        %v289 = vunpack.c.l.b16 %v195
        %v290 = vunpack.c.l.b16 %v196
        %v291 = vunpack.c.l.b16 %v197
        %v292 = vunpack.c.l.b16 %v198
        %v293 = vunpack.c.l.b16 %v199
        %v294 = vunpack.c.l.b16 %v200
        %v295 = vunpack.c.l.b16 %v201
        %v296 = vunpack.c.l.b16 %v202
        %v297 = vunpack.c.l.b16 %v203
        %v298 = vpack.c.b16 %v288, %v287
        %v299 = vpack.c.b16 %v290, %v289
        %v300 = vpack.c.b16 %v292, %v291
        %v301 = vpack.c.b16 %v294, %v293
        %v302 = vpack.c.b16 %v296, %v295
        %v303 = vpack.c.b16 %v297, %v297
        %v305 = vsel %vm218, %v298, 0
        %v308 = vsel %vm218, %v299, 0
        %v311 = vsel %vm218, %v300, 0
        %v314 = vsel %vm218, %v301, 0
        %v317 = vsel %vm218, %v302, 0
        %v320 = vsel %vm218, %v303, 0
        %322 = vmatprep.subr.bf16.mxu0 0
        %323 = vmatpush1.bf16.msra.mxu0 %v274
        %324 = vmatprep.subr.bf16.mxu0 0
        %325 = vmatpush1.bf16.msra.mxu0 0
        %326 = vmatprep.subr.bf16.mxu0 0
        %327 = vmatpush1.bf16.msra.mxu0 0
        %328 = vmatprep.subr.bf16.mxu0 0
        %329 = vmatpush1.bf16.msra.mxu0 0
        %330 = vmatprep.subr.bf16.mxu0 0
        %331 = vmatpush1.bf16.msra.mxu0 0
        %332 = vmatprep.subr.bf16.mxu0 0
        %333 = vmatpush1.bf16.msra.mxu0 0
        %334 = vmatprep.subr.bf16.mxu0 0
        %335 = vmatpush1.bf16.msra.mxu0 0
        %336 = vmatprep.subr.bf16.mxu0 0
        %337 = vmatpush1.bf16.msra.mxu0 0
        %338 = vmatprep.subr.bf16.mxu0 0
        %339 = vmatpush1.bf16.msra.mxu0 0
        %340 = vmatprep.subr.bf16.mxu0 0
        %341 = vmatpush1.bf16.msra.mxu0 0
        %342 = vmatprep.subr.bf16.mxu0 0
        %343 = vmatpush1.bf16.msra.mxu0 0
        %344 = vmatprep.subr.bf16.mxu0 0
        %345 = vmatpush1.bf16.msra.mxu0 0
        %346 = vmatprep.subr.bf16.mxu0 0
        %347 = vmatpush1.bf16.msra.mxu0 0
        %348 = vmatprep.subr.bf16.mxu0 0
        %349 = vmatpush1.bf16.msra.mxu0 0
        %350 = vmatprep.subr.bf16.mxu0 0
        %351 = vmatpush1.bf16.msra.mxu0 0
        %352 = vmatprep.subr.bf16.mxu0 0
        %353 = vmatpush1.bf16.msra.mxu0 0
        %354 = vmatprep.mubr.bf16.mxu0 0
        %355 = vmatmul.mubr.bf16.gmra.mrb[0].mxu0 %v305
        %v356 = vpop.f32.mrb[0].mxu0
        %v357 = vadd.f32 0.0, %v356
        %v358 = vpop.f32.mrb[0].mxu0
        %v359 = vpop.f32.mrb[0].mxu0
        %v360 = vadd.f32 0.0, %v359
        %v361 = vpop.f32.mrb[0].mxu0
        %362 = vmatprep.mubr.bf16.mxu0 0
        %363 = vmatmul.mubr.bf16.gmra.mrb[0].mxu0 %v308
        %v364 = vpop.f32.mrb[0].mxu0
        %v365 = vadd.f32 0.0, %v364
        %v366 = vpop.f32.mrb[0].mxu0
        %v367 = vpop.f32.mrb[0].mxu0
        %v368 = vadd.f32 0.0, %v367
        %v369 = vpop.f32.mrb[0].mxu0
        %370 = vmatprep.mubr.bf16.mxu0 0
        %371 = vmatmul.mubr.bf16.gmra.mrb[0].mxu0 %v311
        %v372 = vpop.f32.mrb[0].mxu0
        %v373 = vadd.f32 0.0, %v372
        %v374 = vpop.f32.mrb[0].mxu0
        %v375 = vpop.f32.mrb[0].mxu0
        %v376 = vadd.f32 0.0, %v375
        %v377 = vpop.f32.mrb[0].mxu0
        %378 = vmatprep.mubr.bf16.mxu0 0
        %379 = vmatmul.mubr.bf16.gmra.mrb[0].mxu0 %v314
        %v380 = vpop.f32.mrb[0].mxu0
        %v381 = vadd.f32 0.0, %v380
        %v382 = vpop.f32.mrb[0].mxu0
        %v383 = vpop.f32.mrb[0].mxu0
        %v384 = vadd.f32 0.0, %v383
        %v385 = vpop.f32.mrb[0].mxu0
        %386 = vmatprep.mubr.bf16.mxu0 0
        %387 = vmatmul.mubr.bf16.gmra.mrb[0].mxu0 %v317
        %v388 = vpop.f32.mrb[0].mxu0
        %v389 = vadd.f32 0.0, %v388
        %v390 = vpop.f32.mrb[0].mxu0
        %v391 = vpop.f32.mrb[0].mxu0
        %v392 = vadd.f32 0.0, %v391
        %v393 = vpop.f32.mrb[0].mxu0
        %394 = vmatprep.mubr.bf16.mxu0 0
        %395 = vmatmul.mubr.bf16.gmra.mrb[0].mxu0 %v320
        %v396 = vpop.f32.mrb[0].mxu0
        %v397 = vadd.f32 0.0, %v396
        %v398 = vpop.f32.mrb[0].mxu0
        %v399 = vpop.f32.mrb[0].mxu0
        %v400 = vpop.f32.mrb[0].mxu0
        %401 = vdwg.mxu0
        %vm402 = vcmask 719872
        %403 = vst.msk [vmem:[%s189] sm:$0xff] %vm402, %v357
        %404 = vst.msk [vmem:[%s189 + $0x8] sm:$0xff] %vm402, %v360
        %405 = vst.msk [vmem:[%s189 + $0x10] sm:$0xff] %vm402, %v365
        %406 = vst.msk [vmem:[%s189 + $0x18] sm:$0xff] %vm402, %v368
        %407 = vst.msk [vmem:[%s189 + $0x20] sm:$0xff] %vm402, %v373
        %408 = vst.msk [vmem:[%s189 + $0x28] sm:$0xff] %vm402, %v376
        %409 = vst.msk [vmem:[%s189 + $0x30] sm:$0xff] %vm402, %v381
        %410 = vst.msk [vmem:[%s189 + $0x38] sm:$0xff] %vm402, %v384
        %411 = vst.msk [vmem:[%s189 + $0x40] sm:$0xff] %vm402, %v389
        %412 = vst.msk [vmem:[%s189 + $0x48] sm:$0xff] %vm402, %v392
        %413 = vst.msk [vmem:[%s189 + $0x50] sm:$0xff] %vm402, %v397
        %414 = vmatprep.subr.bf16.mxu0 0
        %415 = vmatpush1.bf16.msra.mxu0 %v275
        %416 = vmatprep.subr.bf16.mxu0 0
        %417 = vmatpush1.bf16.msra.mxu0 0
        %418 = vmatprep.subr.bf16.mxu0 0
        %419 = vmatpush1.bf16.msra.mxu0 0
        %420 = vmatprep.subr.bf16.mxu0 0
        %421 = vmatpush1.bf16.msra.mxu0 0
        %422 = vmatprep.subr.bf16.mxu0 0
        %423 = vmatpush1.bf16.msra.mxu0 0
        %424 = vmatprep.subr.bf16.mxu0 0
        %425 = vmatpush1.bf16.msra.mxu0 0
        %426 = vmatprep.subr.bf16.mxu0 0
        %427 = vmatpush1.bf16.msra.mxu0 0
        %428 = vmatprep.subr.bf16.mxu0 0
        %429 = vmatpush1.bf16.msra.mxu0 0
        %430 = vmatprep.subr.bf16.mxu0 0
        %431 = vmatpush1.bf16.msra.mxu0 0
        %432 = vmatprep.subr.bf16.mxu0 0
        %433 = vmatpush1.bf16.msra.mxu0 0
        %434 = vmatprep.subr.bf16.mxu0 0
        %435 = vmatpush1.bf16.msra.mxu0 0
        %436 = vmatprep.subr.bf16.mxu0 0
        %437 = vmatpush1.bf16.msra.mxu0 0
        %438 = vmatprep.subr.bf16.mxu0 0
        %439 = vmatpush1.bf16.msra.mxu0 0
        %440 = vmatprep.subr.bf16.mxu0 0
        %441 = vmatpush1.bf16.msra.mxu0 0
        %442 = vmatprep.subr.bf16.mxu0 0
        %443 = vmatpush1.bf16.msra.mxu0 0
        %444 = vmatprep.subr.bf16.mxu0 0
        %445 = vmatpush1.bf16.msra.mxu0 0
        %446 = vmatprep.mubr.bf16.mxu0 0
        %447 = vmatmul.mubr.bf16.gmra.mrb[0].mxu0 %v305
        %v448 = vpop.f32.mrb[0].mxu0
        %v449 = vadd.f32 0.0, %v448
        %v450 = vpop.f32.mrb[0].mxu0
        %v451 = vpop.f32.mrb[0].mxu0
        %v452 = vadd.f32 0.0, %v451
        %v453 = vpop.f32.mrb[0].mxu0
        %454 = vmatprep.mubr.bf16.mxu0 0
        %455 = vmatmul.mubr.bf16.gmra.mrb[0].mxu0 %v308
        %v456 = vpop.f32.mrb[0].mxu0
        %v457 = vadd.f32 0.0, %v456
        %v458 = vpop.f32.mrb[0].mxu0
        %v459 = vpop.f32.mrb[0].mxu0
        %v460 = vadd.f32 0.0, %v459
        %v461 = vpop.f32.mrb[0].mxu0
        %462 = vmatprep.mubr.bf16.mxu0 0
        %463 = vmatmul.mubr.bf16.gmra.mrb[0].mxu0 %v311
        %v464 = vpop.f32.mrb[0].mxu0
        %v465 = vadd.f32 0.0, %v464
        %v466 = vpop.f32.mrb[0].mxu0
        %v467 = vpop.f32.mrb[0].mxu0
        %v468 = vadd.f32 0.0, %v467
        %v469 = vpop.f32.mrb[0].mxu0
        %470 = vmatprep.mubr.bf16.mxu0 0
        %471 = vmatmul.mubr.bf16.gmra.mrb[0].mxu0 %v314
        %v472 = vpop.f32.mrb[0].mxu0
        %v473 = vadd.f32 0.0, %v472
        %v474 = vpop.f32.mrb[0].mxu0
        %v475 = vpop.f32.mrb[0].mxu0
        %v476 = vadd.f32 0.0, %v475
        %v477 = vpop.f32.mrb[0].mxu0
        %478 = vmatprep.mubr.bf16.mxu0 0
        %479 = vmatmul.mubr.bf16.gmra.mrb[0].mxu0 %v317
        %v480 = vpop.f32.mrb[0].mxu0
        %v481 = vadd.f32 0.0, %v480
        %v482 = vpop.f32.mrb[0].mxu0
        %v483 = vpop.f32.mrb[0].mxu0
        %v484 = vadd.f32 0.0, %v483
        %v485 = vpop.f32.mrb[0].mxu0
        %486 = vmatprep.mubr.bf16.mxu0 0
        %487 = vmatmul.mubr.bf16.gmra.mrb[0].mxu0 %v320
        %v488 = vpop.f32.mrb[0].mxu0
        %v489 = vadd.f32 0.0, %v488
        %v490 = vpop.f32.mrb[0].mxu0
        %v491 = vpop.f32.mrb[0].mxu0
        %v492 = vpop.f32.mrb[0].mxu0
        %493 = vdwg.mxu0
        %s494 = scalar_lea.vmem %s189, 88 [#allocation5]
        %495 = vst.msk [vmem:[%s494] sm:$0xff] %vm402, %v449
        %496 = vst.msk [vmem:[%s494 + $0x8] sm:$0xff] %vm402, %v452
        %497 = vst.msk [vmem:[%s494 + $0x10] sm:$0xff] %vm402, %v457
        %498 = vst.msk [vmem:[%s494 + $0x18] sm:$0xff] %vm402, %v460
        %499 = vst.msk [vmem:[%s494 + $0x20] sm:$0xff] %vm402, %v465
        %500 = vst.msk [vmem:[%s494 + $0x28] sm:$0xff] %vm402, %v468
        %501 = vst.msk [vmem:[%s494 + $0x30] sm:$0xff] %vm402, %v473
        %502 = vst.msk [vmem:[%s494 + $0x38] sm:$0xff] %vm402, %v476
        %503 = vst.msk [vmem:[%s494 + $0x40] sm:$0xff] %vm402, %v481
        %504 = vst.msk [vmem:[%s494 + $0x48] sm:$0xff] %vm402, %v484
        %505 = vst.msk [vmem:[%s494 + $0x50] sm:$0xff] %vm402, %v489
        %s506 = sand.u32 %s96, 1
        %s507 = scalar_lea.sflag [#allocation4], %s506
        %s508 = sand.u32 %s96, 1
        %s509 = smul.addr %s508, 176
        %s510 = scalar_lea.vmem [#allocation5], %s509
        // Predicated region
        $region37: #{tpu_custom_call.1} parent=31 // pred_check
          %p511 = pneg %p106
        $region38: #{tpu_custom_call.1} parent=31 // pred_check_branch
          %513 = sbr.rel (%p511) target = $region40
        $region39: #{tpu_custom_call.1} parent=31 // pred_region
          %s514 = smul.u32 2, %s20
          %s516 = ssub.s32 2816, 2816
          %517 = vsyncadd %s507, %s516
          %s518 = smul.addr %s514, 11
          %s519 = smul.addr %s518, 128
          %s520 = scalar_lea.hbm %s3, %s519
          %s521 = sshll.u32 %s510, 4
          %s522 = int_to_ptr.vmem [resolvable:$true] %s521
          %527 = dma.vmem_to_hbm [thread:$0]  %s522, 2816, %s520, %s507, 128, 128, 8
        $region40: #{tpu_custom_call.1} parent=31 // pred_fallthru
          _
      $region32: #{tpu_custom_call.1} parent=5 // pred_fallthru
        _
      %p528 = scmp.le.s32.totalorder 2, %s15
      // Predicated region
      $region41: #{tpu_custom_call.1} parent=5 // pred_check
        %p529 = pneg %p528
      $region42: #{tpu_custom_call.1} parent=5 // pred_check_branch
        %531 = sbr.rel (%p529) target = $region44
      $region43: #{tpu_custom_call.1} parent=5 // pred_region
        %s532 = ssub.s32 %s15, 2
        // Predicated region
        $region45: #{tpu_custom_call.1} parent=43 // pred_check
          %p533 = pneg %p112
        $region46: #{tpu_custom_call.1} parent=43 // pred_check_branch
          %535 = sbr.rel (%p533) target = $region48
        $region47: #{tpu_custom_call.1} parent=43 // pred_region
          %s536 = sand.u32 %s97, 1
          %s537 = scalar_lea.sflag [#allocation4], %s536
          %s538 = sand.u32 %s97, 1
          %s539 = smul.addr %s538, 176
          %s540 = scalar_lea.vmem [#allocation5], %s539
          %541 = dma.done %s537, 2816
        $region48: #{tpu_custom_call.1} parent=43 // pred_fallthru
          _
      $region44: #{tpu_custom_call.1} parent=5 // pred_fallthru
        _
    $region6: #{tpu_custom_call.1} parent=1 // loop_footer
      %s19 = sadd.s32 1, %s15
    $region7: #{tpu_custom_call.1} parent=1 // loop_footer_branch
      %14 = sbr.rel target = $region3
    $region8: #{tpu_custom_call.1} parent=1 // loop_exit
      _
    %542 = vsyncpa [#allocation3], 1
    %s543 = scalar_lea.sflag [#allocation3], 1
    %544 = vsyncpa %s543, 1
    %545 = vsyncpa [#allocation4], 1
    %s546 = scalar_lea.sflag [#allocation4], 1
    %547 = vsyncpa %s546, 1

// kernel: tpu_custom_call.1
$region0: #{tpu_custom_call.1}
  #allocation0 [shape = 'u32[]', space=smem, size = 0x4, offset = 0x4, fixed_abs, tag = 'smem constant byte address 0x4 - core index']
  #allocation1 [shape = 'u32[144,128]{1,0:T(1,128)}', space=vmem, size = 0x12000, scoped, tag = 'internal scratch']
  %s0 = inlined_call_operand.hbm [shape: f32[8,16,16], index: 0, kind: input, shape index: {}]
  %s1 = inlined_call_operand.vmem [shape: bf16[88,16], index: 1, kind: input, shape index: {}]
  %s2 = inlined_call_operand.vmem [shape: bf16[16,88], index: 2, kind: input, shape index: {}]
  %s3 = inlined_call_operand.hbm [shape: f32[8,88,88], index: 3, kind: output, shape index: {}]
  %s4 = sld [smem:[#allocation0]]
  $region49: #{tpu_custom_call.1} parent=0
    _
  %s6 = ssub.s32 1, %s4
  %s7 = scalar_select 0, %s6, %s4
  $region1: #{tpu_custom_call.1} parent=0
    #allocation2 [shape = 'u8[16384]{0}', space=vmem, size = 0x4000, scoped, tag = 'input window, operand 0']
    #allocation3 [shape = 's32[2]{0}', space=sflag, size = 0x8, scoped, tag = 'scoped memory for tpu_custom_call.1']
    #allocation4 [shape = 's32[2]{0}', space=sflag, size = 0x8, scoped, tag = 'scoped memory for tpu_custom_call.1']
    #allocation5 [shape = 'u8[90112]{0}', space=vmem, size = 0x16000, scoped, tag = 'output window, operand 0']
    %8 = vsyncpa [#allocation3], 0
    %s9 = scalar_lea.sflag [#allocation3], 1
    %10 = vsyncpa %s9, 0
    %11 = vsyncpa [#allocation4], 0
    %s12 = scalar_lea.sflag [#allocation4], 1
    %13 = vsyncpa %s12, 0
    loop: start=0, step=1, limit=10
    $region2: #{tpu_custom_call.1} parent=1 // loop_pre_header
      _
    $region3: #{tpu_custom_call.1} parent=1 // loop_header
      %s15 = sphi 0, %s19
      %p16 = scmp.ge.s32.totalorder %s15, 10
      %s25 = sphi 0, %s27
      %s28 = sphi 0, %s25
      %s29 = sphi 0, %s28
      %s45 = sphi 0, %s29
      %s49 = sphi 0, %s49
      %s51 = sphi 0, %s49
      %s52 = sphi 0, %s51
      %s66 = sphi 0, %s52
      %s70 = sphi 0, %s70
      %s72 = sphi 0, %s70
      %s73 = sphi 0, %s72
      %s87 = sphi 0, %s73
      %s93 = sphi 0, %s95
      %s96 = sphi 0, %s93
      %s97 = sphi 0, %s96
      %s113 = sphi 0, %s97
    $region4: #{tpu_custom_call.1} parent=1 // loop_header_branch
      %18 = sbr.rel (%p16) target = $region8
    $region5: #{tpu_custom_call.1} parent=1 // loop_body
      %s20 = ssub.s32 %s15, 1
      %s21 = ssub.s32 %s15, 2
      %s22 = sadd.s32 %s15, 1
      %s23 = ssub.s32 %s15, %s22
      %p24 = scmp.eq.s32.totalorder %s23, 0
      %s26 = sadd.s32 %s25, 1
      %s27 = scalar_select %p24, %s25, %s26
      %p30 = pneg %p24
      %p31 = scmp.eq.s32.totalorder %s15, 7
      %p32 = por %p30, %p31
      %p33 = scmp.ne.s32.totalorder %s25, %s28
      %p34 = scmp.eq.s32.totalorder %s15, 0
      %p35 = por %p33, %p34
      %p36 = scmp.ne.s32.totalorder %s25, %s28
      %p37 = scmp.eq.s32.totalorder %s20, 7
      %p38 = por %p36, %p37
      %p39 = scmp.ne.s32.totalorder %s28, %s29
      %p40 = scmp.eq.s32.totalorder %s20, 0
      %p41 = por %p39, %p40
      %p42 = scmp.ne.s32.totalorder %s28, %s29
      %p43 = scmp.eq.s32.totalorder %s21, 7
      %p44 = por %p42, %p43
      %p46 = scmp.ne.s32.totalorder %s29, %s45
      %p47 = scmp.eq.s32.totalorder %s21, 0
      %p48 = por %p46, %p47
      %s50 = sadd.s32 %s49, 1
      %p53 = scmp.eq.s32.totalorder %s15, 7
      %p54 = scmp.ne.s32.totalorder %s49, %s51
      %p55 = scmp.eq.s32.totalorder %s15, 0
      %p56 = por %p54, %p55
      %p57 = scmp.ne.s32.totalorder %s49, %s51
      %p58 = scmp.eq.s32.totalorder %s20, 7
      %p59 = por %p57, %p58
      %p60 = scmp.ne.s32.totalorder %s51, %s52
      %p61 = scmp.eq.s32.totalorder %s20, 0
      %p62 = por %p60, %p61
      %p63 = scmp.ne.s32.totalorder %s51, %s52
      %p64 = scmp.eq.s32.totalorder %s21, 7
      %p65 = por %p63, %p64
      %p67 = scmp.ne.s32.totalorder %s52, %s66
      %p68 = scmp.eq.s32.totalorder %s21, 0
      %p69 = por %p67, %p68
      %s71 = sadd.s32 %s70, 1
      %p74 = scmp.eq.s32.totalorder %s15, 7
      %p75 = scmp.ne.s32.totalorder %s70, %s72
      %p76 = scmp.eq.s32.totalorder %s15, 0
      %p77 = por %p75, %p76
      %p78 = scmp.ne.s32.totalorder %s70, %s72
      %p79 = scmp.eq.s32.totalorder %s20, 7
      %p80 = por %p78, %p79
      %p81 = scmp.ne.s32.totalorder %s72, %s73
      %p82 = scmp.eq.s32.totalorder %s20, 0
      %p83 = por %p81, %p82
      %p84 = scmp.ne.s32.totalorder %s72, %s73
      %p85 = scmp.eq.s32.totalorder %s21, 7
      %p86 = por %p84, %p85
      %p88 = scmp.ne.s32.totalorder %s73, %s87
      %p89 = scmp.eq.s32.totalorder %s21, 0
      %p90 = por %p88, %p89
      %s91 = ssub.s32 %s15, %s22
      %p92 = scmp.eq.s32.totalorder %s91, 0
      %s94 = sadd.s32 %s93, 1
      %s95 = scalar_select %p92, %s93, %s94
      %p98 = pneg %p92
      %p99 = scmp.eq.s32.totalorder %s15, 7
      %p100 = por %p98, %p99
      %p101 = scmp.ne.s32.totalorder %s93, %s96
      %p102 = scmp.eq.s32.totalorder %s15, 0
      %p103 = por %p101, %p102
      %p104 = scmp.ne.s32.totalorder %s93, %s96
      %p105 = scmp.eq.s32.totalorder %s20, 7
      %p106 = por %p104, %p105
      %p107 = scmp.ne.s32.totalorder %s96, %s97
      %p108 = scmp.eq.s32.totalorder %s20, 0
      %p109 = por %p107, %p108
      %p110 = scmp.ne.s32.totalorder %s96, %s97
      %p111 = scmp.eq.s32.totalorder %s21, 7
      %p112 = por %p110, %p111
      %p114 = scmp.ne.s32.totalorder %s97, %s113
      %p115 = scmp.eq.s32.totalorder %s21, 0
      %p116 = por %p114, %p115
      %p117 = scmp.le.s32.totalorder 1, %s15
      %p118 = scmp.lt.s32.totalorder %s15, 9
      %p119 = pnand %p117, %p118
      %p120 = pneg %p119
      // Predicated region
      $region9: #{tpu_custom_call.1} parent=5 // pred_check
        _
      $region10: #{tpu_custom_call.1} parent=5 // pred_check_branch
        %122 = sbr.rel (%p119) target = $region12
      $region11: #{tpu_custom_call.1} parent=5 // pred_region
        %s123 = ssub.s32 %s15, 1
        // Predicated region
        $region13: #{tpu_custom_call.1} parent=11 // pred_check
          %p124 = pneg %p62
        $region14: #{tpu_custom_call.1} parent=11 // pred_check_branch
          %126 = sbr.rel (%p124) target = $region16
        $region15: #{tpu_custom_call.1} parent=11 // pred_region
          _
        $region16: #{tpu_custom_call.1} parent=11 // pred_fallthru
          _
        // Predicated region
        $region17: #{tpu_custom_call.1} parent=11 // pred_check
          %p127 = pneg %p83
        $region18: #{tpu_custom_call.1} parent=11 // pred_check_branch
          %129 = sbr.rel (%p127) target = $region20
        $region19: #{tpu_custom_call.1} parent=11 // pred_region
          _
        $region20: #{tpu_custom_call.1} parent=11 // pred_fallthru
          _
      $region12: #{tpu_custom_call.1} parent=5 // pred_fallthru
        _
      %p130 = scmp.lt.s32.totalorder %s15, 8
      // Predicated region
      $region21: #{tpu_custom_call.1} parent=5 // pred_check
        %p131 = pneg %p130
      $region22: #{tpu_custom_call.1} parent=5 // pred_check_branch
        %133 = sbr.rel (%p131) target = $region24
      $region23: #{tpu_custom_call.1} parent=5 // pred_region
        // Predicated region
        $region25: #{tpu_custom_call.1} parent=23 // pred_check
          %p134 = pneg %p35
        $region26: #{tpu_custom_call.1} parent=23 // pred_check_branch
          %136 = sbr.rel (%p134) target = $region28
        $region27: #{tpu_custom_call.1} parent=23 // pred_region
          %s137 = sand.u32 %s25, 1
          %s138 = scalar_lea.sflag [#allocation3], %s137
          %s139 = sand.u32 %s25, 1
          %s140 = smul.addr %s139, 16
          %s141 = scalar_lea.vmem [#allocation2], %s140
          %s143 = ssub.s32 256, 256
          %144 = vsyncadd %s138, %s143
          %s145 = smul.addr %s15, 2
          %s146 = smul.addr %s145, 128
          %s147 = scalar_lea.hbm %s0, %s146
          %s148 = sshll.u32 %s141, 4
          %s149 = int_to_ptr.vmem [resolvable:$true] %s148
          %154 = dma.hbm_to_vmem [thread:$0]  %s147, 256, %s149, %s138, 128, 128, 8
        $region28: #{tpu_custom_call.1} parent=23 // pred_fallthru
          _
      $region24: #{tpu_custom_call.1} parent=5 // pred_fallthru
        _
      %p155 = scmp.le.s32.totalorder 1, %s15
      %p156 = scmp.lt.s32.totalorder %s15, 9
      %p157 = pnand %p155, %p156
      %p158 = pneg %p157
      // Predicated region
      $region29: #{tpu_custom_call.1} parent=5 // pred_check
        _
      $region30: #{tpu_custom_call.1} parent=5 // pred_check_branch
        %160 = sbr.rel (%p157) target = $region32
      $region31: #{tpu_custom_call.1} parent=5 // pred_region
        %s161 = ssub.s32 %s15, 1
        %s162 = sand.u32 %s28, 1
        %s163 = scalar_lea.sflag [#allocation3], %s162
        %s164 = sand.u32 %s28, 1
        %s165 = smul.addr %s164, 16
        %s166 = scalar_lea.vmem [#allocation2], %s165
        // Predicated region
        $region33: #{tpu_custom_call.1} parent=31 // pred_check
          %p167 = pneg %p41
        $region34: #{tpu_custom_call.1} parent=31 // pred_check_branch
          %169 = sbr.rel (%p167) target = $region36
        $region35: #{tpu_custom_call.1} parent=31 // pred_region
          %170 = dma.done %s163, 256
        $region36: #{tpu_custom_call.1} parent=31 // pred_fallthru
          _
        %s171 = sand.u32 %s28, 1
        %s172 = scalar_lea.sflag [#allocation3], %s171
        %s173 = sand.u32 %s28, 1
        %s174 = smul.addr %s173, 16
        %s175 = scalar_lea.vmem [#allocation2], %s174
        %p176 = pneg %p41
        %p177 = pneg %p38
        %p178 = pneg %p62
        %p179 = pneg %p59
        %p180 = pneg %p83
        %p181 = pneg %p80
        %p182 = pneg %p109
        %p183 = pneg %p106
        %s184 = sand.u32 %s96, 1
        %s185 = scalar_lea.sflag [#allocation4], %s184
        %s186 = sand.u32 %s96, 1
        %s187 = smul.addr %s186, 88
        %s188 = scalar_lea.vmem [#allocation5], %s187
        %v190 = vld [vmem:[%s1] sm:$0xf]
        %v191 = vld [vmem:[%s1 + $0x4] sm:$0xf]
        %v192 = vld [vmem:[%s1 + $0x8] sm:$0xf]
        %v193 = vld [vmem:[%s1 + $0xc] sm:$0xf]
        %v194 = vld [vmem:[%s1 + $0x10] sm:$0xf]
        %v195 = vld [vmem:[%s1 + $0x14] sm:$0xf]
        %v196 = vld [vmem:[%s1 + $0x18] sm:$0xf]
        %v197 = vld [vmem:[%s1 + $0x1c] sm:$0xf]
        %v198 = vld [vmem:[%s1 + $0x20] sm:$0xf]
        %v199 = vld [vmem:[%s1 + $0x24] sm:$0xf]
        %v200 = vld [vmem:[%s1 + $0x28] sm:$0xf]
        %v201 = vld [vmem:[%s2] sm:$0xf]
        %v202 = vld [vmem:[%s2 + $0x4] sm:$0xf]
        %v203 = vld [vmem:[%s166] sm:$0xff]
        %v204 = vld [vmem:[%s166 + $0x8] sm:$0xff]
        %v205 = vpack.c.bf16 %v204, %v203
        %v208 = vunpack.c.l.b16 %v201
        %v209 = vunpack.c.l.b16 %v202
        %v210 = vpack.c.b16 %v209, %v208
        %vm212 = vcmask 130048
        %v214 = vsel %vm212, %v205, 0
        %216 = vmatprep.subr.bf16.mxu0 0
        %217 = vmatpush1.bf16.msra.mxu0 %v210
        %218 = vmatprep.subr.bf16.mxu0 0
        %219 = vmatpush1.bf16.msra.mxu0 0
        %220 = vmatprep.subr.bf16.mxu0 0
        %221 = vmatpush1.bf16.msra.mxu0 0
        %222 = vmatprep.subr.bf16.mxu0 0
        %223 = vmatpush1.bf16.msra.mxu0 0
        %224 = vmatprep.subr.bf16.mxu0 0
        %225 = vmatpush1.bf16.msra.mxu0 0
        %226 = vmatprep.subr.bf16.mxu0 0
        %227 = vmatpush1.bf16.msra.mxu0 0
        %228 = vmatprep.subr.bf16.mxu0 0
        %229 = vmatpush1.bf16.msra.mxu0 0
        %230 = vmatprep.subr.bf16.mxu0 0
        %231 = vmatpush1.bf16.msra.mxu0 0
        %232 = vmatprep.subr.bf16.mxu0 0
        %233 = vmatpush1.bf16.msra.mxu0 0
        %234 = vmatprep.subr.bf16.mxu0 0
        %235 = vmatpush1.bf16.msra.mxu0 0
        %236 = vmatprep.subr.bf16.mxu0 0
        %237 = vmatpush1.bf16.msra.mxu0 0
        %238 = vmatprep.subr.bf16.mxu0 0
        %239 = vmatpush1.bf16.msra.mxu0 0
        %240 = vmatprep.subr.bf16.mxu0 0
        %241 = vmatpush1.bf16.msra.mxu0 0
        %242 = vmatprep.subr.bf16.mxu0 0
        %243 = vmatpush1.bf16.msra.mxu0 0
        %244 = vmatprep.subr.bf16.mxu0 0
        %245 = vmatpush1.bf16.msra.mxu0 0
        %246 = vmatprep.subr.bf16.mxu0 0
        %247 = vmatpush1.bf16.msra.mxu0 0
        %248 = vmatprep.mubr.bf16.mxu0 0
        %249 = vmatmul.mubr.bf16.gmra.mrb[0].mxu0 %v214
        %v250 = vpop.f32.mrb[0].mxu0
        %v251 = vadd.f32 0.0, %v250
        %v252 = vpop.f32.mrb[0].mxu0
        %v253 = vpop.f32.mrb[0].mxu0
        %v254 = vadd.f32 0.0, %v253
        %v255 = vpop.f32.mrb[0].mxu0
        %256 = vdwg.mxu0
        %v257 = vpack.c.bf16 %v254, %v251
        %v269 = vunpack.c.l.b16 %v190
        %v270 = vunpack.c.l.b16 %v191
        %v271 = vunpack.c.l.b16 %v192
        %v272 = vunpack.c.l.b16 %v193
        %v273 = vunpack.c.l.b16 %v194
        %v274 = vunpack.c.l.b16 %v195
        %v275 = vunpack.c.l.b16 %v196
        %v276 = vunpack.c.l.b16 %v197
        %v277 = vunpack.c.l.b16 %v198
        %v278 = vunpack.c.l.b16 %v199
        %v279 = vunpack.c.l.b16 %v200
        %v280 = vpack.c.b16 %v270, %v269
        %v281 = vpack.c.b16 %v272, %v271
        %v282 = vpack.c.b16 %v274, %v273
        %v283 = vpack.c.b16 %v276, %v275
        %v284 = vpack.c.b16 %v278, %v277
        %v285 = vpack.c.b16 %v279, %v279
        %v287 = vsel %vm212, %v280, 0
        %v290 = vsel %vm212, %v281, 0
        %v293 = vsel %vm212, %v282, 0
        %v296 = vsel %vm212, %v283, 0
        %v299 = vsel %vm212, %v284, 0
        %v302 = vsel %vm212, %v285, 0
        %304 = vmatprep.subr.bf16.mxu0 0
        %305 = vmatpush1.bf16.msra.mxu0 %v257
        %306 = vmatprep.subr.bf16.mxu0 0
        %307 = vmatpush1.bf16.msra.mxu0 0
        %308 = vmatprep.subr.bf16.mxu0 0
        %309 = vmatpush1.bf16.msra.mxu0 0
        %310 = vmatprep.subr.bf16.mxu0 0
        %311 = vmatpush1.bf16.msra.mxu0 0
        %312 = vmatprep.subr.bf16.mxu0 0
        %313 = vmatpush1.bf16.msra.mxu0 0
        %314 = vmatprep.subr.bf16.mxu0 0
        %315 = vmatpush1.bf16.msra.mxu0 0
        %316 = vmatprep.subr.bf16.mxu0 0
        %317 = vmatpush1.bf16.msra.mxu0 0
        %318 = vmatprep.subr.bf16.mxu0 0
        %319 = vmatpush1.bf16.msra.mxu0 0
        %320 = vmatprep.subr.bf16.mxu0 0
        %321 = vmatpush1.bf16.msra.mxu0 0
        %322 = vmatprep.subr.bf16.mxu0 0
        %323 = vmatpush1.bf16.msra.mxu0 0
        %324 = vmatprep.subr.bf16.mxu0 0
        %325 = vmatpush1.bf16.msra.mxu0 0
        %326 = vmatprep.subr.bf16.mxu0 0
        %327 = vmatpush1.bf16.msra.mxu0 0
        %328 = vmatprep.subr.bf16.mxu0 0
        %329 = vmatpush1.bf16.msra.mxu0 0
        %330 = vmatprep.subr.bf16.mxu0 0
        %331 = vmatpush1.bf16.msra.mxu0 0
        %332 = vmatprep.subr.bf16.mxu0 0
        %333 = vmatpush1.bf16.msra.mxu0 0
        %334 = vmatprep.subr.bf16.mxu0 0
        %335 = vmatpush1.bf16.msra.mxu0 0
        %336 = vmatprep.mubr.bf16.mxu0 0
        %337 = vmatmul.mubr.bf16.gmra.mrb[0].mxu0 %v287
        %v338 = vpop.f32.mrb[0].mxu0
        %v339 = vadd.f32 0.0, %v338
        %v340 = vpop.f32.mrb[0].mxu0
        %v341 = vpop.f32.mrb[0].mxu0
        %v342 = vadd.f32 0.0, %v341
        %v343 = vpop.f32.mrb[0].mxu0
        %344 = vmatprep.mubr.bf16.mxu0 0
        %345 = vmatmul.mubr.bf16.gmra.mrb[0].mxu0 %v290
        %v346 = vpop.f32.mrb[0].mxu0
        %v347 = vadd.f32 0.0, %v346
        %v348 = vpop.f32.mrb[0].mxu0
        %v349 = vpop.f32.mrb[0].mxu0
        %v350 = vadd.f32 0.0, %v349
        %v351 = vpop.f32.mrb[0].mxu0
        %352 = vmatprep.mubr.bf16.mxu0 0
        %353 = vmatmul.mubr.bf16.gmra.mrb[0].mxu0 %v293
        %v354 = vpop.f32.mrb[0].mxu0
        %v355 = vadd.f32 0.0, %v354
        %v356 = vpop.f32.mrb[0].mxu0
        %v357 = vpop.f32.mrb[0].mxu0
        %v358 = vadd.f32 0.0, %v357
        %v359 = vpop.f32.mrb[0].mxu0
        %360 = vmatprep.mubr.bf16.mxu0 0
        %361 = vmatmul.mubr.bf16.gmra.mrb[0].mxu0 %v296
        %v362 = vpop.f32.mrb[0].mxu0
        %v363 = vadd.f32 0.0, %v362
        %v364 = vpop.f32.mrb[0].mxu0
        %v365 = vpop.f32.mrb[0].mxu0
        %v366 = vadd.f32 0.0, %v365
        %v367 = vpop.f32.mrb[0].mxu0
        %368 = vmatprep.mubr.bf16.mxu0 0
        %369 = vmatmul.mubr.bf16.gmra.mrb[0].mxu0 %v299
        %v370 = vpop.f32.mrb[0].mxu0
        %v371 = vadd.f32 0.0, %v370
        %v372 = vpop.f32.mrb[0].mxu0
        %v373 = vpop.f32.mrb[0].mxu0
        %v374 = vadd.f32 0.0, %v373
        %v375 = vpop.f32.mrb[0].mxu0
        %376 = vmatprep.mubr.bf16.mxu0 0
        %377 = vmatmul.mubr.bf16.gmra.mrb[0].mxu0 %v302
        %v378 = vpop.f32.mrb[0].mxu0
        %v379 = vadd.f32 0.0, %v378
        %v380 = vpop.f32.mrb[0].mxu0
        %v381 = vpop.f32.mrb[0].mxu0
        %v382 = vpop.f32.mrb[0].mxu0
        %383 = vdwg.mxu0
        %vm384 = vcmask 719872
        %385 = vst.msk [vmem:[%s188] sm:$0xff] %vm384, %v339
        %386 = vst.msk [vmem:[%s188 + $0x8] sm:$0xff] %vm384, %v342
        %387 = vst.msk [vmem:[%s188 + $0x10] sm:$0xff] %vm384, %v347
        %388 = vst.msk [vmem:[%s188 + $0x18] sm:$0xff] %vm384, %v350
        %389 = vst.msk [vmem:[%s188 + $0x20] sm:$0xff] %vm384, %v355
        %390 = vst.msk [vmem:[%s188 + $0x28] sm:$0xff] %vm384, %v358
        %391 = vst.msk [vmem:[%s188 + $0x30] sm:$0xff] %vm384, %v363
        %392 = vst.msk [vmem:[%s188 + $0x38] sm:$0xff] %vm384, %v366
        %393 = vst.msk [vmem:[%s188 + $0x40] sm:$0xff] %vm384, %v371
        %394 = vst.msk [vmem:[%s188 + $0x48] sm:$0xff] %vm384, %v374
        %395 = vst.msk [vmem:[%s188 + $0x50] sm:$0xff] %vm384, %v379
        %s396 = sand.u32 %s96, 1
        %s397 = scalar_lea.sflag [#allocation4], %s396
        %s398 = sand.u32 %s96, 1
        %s399 = smul.addr %s398, 88
        %s400 = scalar_lea.vmem [#allocation5], %s399
        // Predicated region
        $region37: #{tpu_custom_call.1} parent=31 // pred_check
          %p401 = pneg %p106
        $region38: #{tpu_custom_call.1} parent=31 // pred_check_branch
          %403 = sbr.rel (%p401) target = $region40
        $region39: #{tpu_custom_call.1} parent=31 // pred_region
          %s405 = ssub.s32 1408, 1408
          %406 = vsyncadd %s397, %s405
          %s407 = smul.addr %s20, 11
          %s408 = smul.addr %s407, 128
          %s409 = scalar_lea.hbm %s3, %s408
          %s410 = sshll.u32 %s400, 4
          %s411 = int_to_ptr.vmem [resolvable:$true] %s410
          %416 = dma.vmem_to_hbm [thread:$0]  %s411, 1408, %s409, %s397, 128, 128, 8
        $region40: #{tpu_custom_call.1} parent=31 // pred_fallthru
          _
      $region32: #{tpu_custom_call.1} parent=5 // pred_fallthru
        _
      %p417 = scmp.le.s32.totalorder 2, %s15
      // Predicated region
      $region41: #{tpu_custom_call.1} parent=5 // pred_check
        %p418 = pneg %p417
      $region42: #{tpu_custom_call.1} parent=5 // pred_check_branch
        %420 = sbr.rel (%p418) target = $region44
      $region43: #{tpu_custom_call.1} parent=5 // pred_region
        %s421 = ssub.s32 %s15, 2
        // Predicated region
        $region45: #{tpu_custom_call.1} parent=43 // pred_check
          %p422 = pneg %p112
        $region46: #{tpu_custom_call.1} parent=43 // pred_check_branch
          %424 = sbr.rel (%p422) target = $region48
        $region47: #{tpu_custom_call.1} parent=43 // pred_region
          %s425 = sand.u32 %s97, 1
          %s426 = scalar_lea.sflag [#allocation4], %s425
          %s427 = sand.u32 %s97, 1
          %s428 = smul.addr %s427, 88
          %s429 = scalar_lea.vmem [#allocation5], %s428
          %430 = dma.done %s426, 1408
        $region48: #{tpu_custom_call.1} parent=43 // pred_fallthru
          _
      $region44: #{tpu_custom_call.1} parent=5 // pred_fallthru
        _
    $region6: #{tpu_custom_call.1} parent=1 // loop_footer
      %s19 = sadd.s32 1, %s15
    $region7: #{tpu_custom_call.1} parent=1 // loop_footer_branch
      %14 = sbr.rel target = $region3
    $region8: #{tpu_custom_call.1} parent=1 // loop_exit
      _
    %431 = vsyncpa [#allocation3], 1
    %s432 = scalar_lea.sflag [#allocation3], 1
    %433 = vsyncpa %s432, 1
    %434 = vsyncpa [#allocation4], 1
    %s435 = scalar_lea.sflag [#allocation4], 1
    %436 = vsyncpa %s435, 1

// kernel: tpu_custom_call.1
$region0: #{tpu_custom_call.1}
  #allocation0 [shape = 'u32[]', space=smem, size = 0x4, offset = 0x4, fixed_abs, tag = 'smem constant byte address 0x4 - core index']
  #allocation1 [shape = 'u32[144,128]{1,0:T(1,128)}', space=vmem, size = 0x12000, scoped, tag = 'internal scratch']
  %s0 = inlined_call_operand.hbm [shape: f32[8,16,16], index: 0, kind: input, shape index: {}]
  %s1 = inlined_call_operand.vmem [shape: bf16[88,16], index: 1, kind: input, shape index: {}]
  %s2 = inlined_call_operand.vmem [shape: bf16[16,88], index: 2, kind: input, shape index: {}]
  %s3 = inlined_call_operand.hbm [shape: f32[8,88,88], index: 3, kind: output, shape index: {}]
  %s4 = sld [smem:[#allocation0]]
  $region49: #{tpu_custom_call.1} parent=0
    _
  %s6 = ssub.s32 1, %s4
  %s7 = scalar_select 0, %s6, %s4
  $region1: #{tpu_custom_call.1} parent=0
    #allocation2 [shape = 'u8[16384]{0}', space=vmem, size = 0x4000, scoped, tag = 'input window, operand 0']
    #allocation3 [shape = 's32[2]{0}', space=sflag, size = 0x8, scoped, tag = 'scoped memory for tpu_custom_call.1']
    #allocation4 [shape = 's32[2]{0}', space=sflag, size = 0x8, scoped, tag = 'scoped memory for tpu_custom_call.1']
    #allocation5 [shape = 'u8[90112]{0}', space=vmem, size = 0x16000, scoped, tag = 'output window, operand 0']
    %8 = vsyncpa [#allocation3], 0
    %s9 = scalar_lea.sflag [#allocation3], 1
    %10 = vsyncpa %s9, 0
    %11 = vsyncpa [#allocation4], 0
    %s12 = scalar_lea.sflag [#allocation4], 1
    %13 = vsyncpa %s12, 0
    loop: start=0, step=1, limit=10
    $region2: #{tpu_custom_call.1} parent=1 // loop_pre_header
      _
    $region3: #{tpu_custom_call.1} parent=1 // loop_header
      %s15 = sphi 0, %s19
      %p16 = scmp.ge.s32.totalorder %s15, 10
      %s25 = sphi 0, %s27
      %s28 = sphi 0, %s25
      %s29 = sphi 0, %s28
      %s45 = sphi 0, %s29
      %s49 = sphi 0, %s49
      %s51 = sphi 0, %s49
      %s52 = sphi 0, %s51
      %s66 = sphi 0, %s52
      %s70 = sphi 0, %s70
      %s72 = sphi 0, %s70
      %s73 = sphi 0, %s72
      %s87 = sphi 0, %s73
      %s93 = sphi 0, %s95
      %s96 = sphi 0, %s93
      %s97 = sphi 0, %s96
      %s113 = sphi 0, %s97
    $region4: #{tpu_custom_call.1} parent=1 // loop_header_branch
      %18 = sbr.rel (%p16) target = $region8
    $region5: #{tpu_custom_call.1} parent=1 // loop_body
      %s20 = ssub.s32 %s15, 1
      %s21 = ssub.s32 %s15, 2
      %s22 = sadd.s32 %s15, 1
      %s23 = ssub.s32 %s15, %s22
      %p24 = scmp.eq.s32.totalorder %s23, 0
      %s26 = sadd.s32 %s25, 1
      %s27 = scalar_select %p24, %s25, %s26
      %p30 = pneg %p24
      %p31 = scmp.eq.s32.totalorder %s15, 7
      %p32 = por %p30, %p31
      %p33 = scmp.ne.s32.totalorder %s25, %s28
      %p34 = scmp.eq.s32.totalorder %s15, 0
      %p35 = por %p33, %p34
      %p36 = scmp.ne.s32.totalorder %s25, %s28
      %p37 = scmp.eq.s32.totalorder %s20, 7
      %p38 = por %p36, %p37
      %p39 = scmp.ne.s32.totalorder %s28, %s29
      %p40 = scmp.eq.s32.totalorder %s20, 0
      %p41 = por %p39, %p40
      %p42 = scmp.ne.s32.totalorder %s28, %s29
      %p43 = scmp.eq.s32.totalorder %s21, 7
      %p44 = por %p42, %p43
      %p46 = scmp.ne.s32.totalorder %s29, %s45
      %p47 = scmp.eq.s32.totalorder %s21, 0
      %p48 = por %p46, %p47
      %s50 = sadd.s32 %s49, 1
      %p53 = scmp.eq.s32.totalorder %s15, 7
      %p54 = scmp.ne.s32.totalorder %s49, %s51
      %p55 = scmp.eq.s32.totalorder %s15, 0
      %p56 = por %p54, %p55
      %p57 = scmp.ne.s32.totalorder %s49, %s51
      %p58 = scmp.eq.s32.totalorder %s20, 7
      %p59 = por %p57, %p58
      %p60 = scmp.ne.s32.totalorder %s51, %s52
      %p61 = scmp.eq.s32.totalorder %s20, 0
      %p62 = por %p60, %p61
      %p63 = scmp.ne.s32.totalorder %s51, %s52
      %p64 = scmp.eq.s32.totalorder %s21, 7
      %p65 = por %p63, %p64
      %p67 = scmp.ne.s32.totalorder %s52, %s66
      %p68 = scmp.eq.s32.totalorder %s21, 0
      %p69 = por %p67, %p68
      %s71 = sadd.s32 %s70, 1
      %p74 = scmp.eq.s32.totalorder %s15, 7
      %p75 = scmp.ne.s32.totalorder %s70, %s72
      %p76 = scmp.eq.s32.totalorder %s15, 0
      %p77 = por %p75, %p76
      %p78 = scmp.ne.s32.totalorder %s70, %s72
      %p79 = scmp.eq.s32.totalorder %s20, 7
      %p80 = por %p78, %p79
      %p81 = scmp.ne.s32.totalorder %s72, %s73
      %p82 = scmp.eq.s32.totalorder %s20, 0
      %p83 = por %p81, %p82
      %p84 = scmp.ne.s32.totalorder %s72, %s73
      %p85 = scmp.eq.s32.totalorder %s21, 7
      %p86 = por %p84, %p85
      %p88 = scmp.ne.s32.totalorder %s73, %s87
      %p89 = scmp.eq.s32.totalorder %s21, 0
      %p90 = por %p88, %p89
      %s91 = ssub.s32 %s15, %s22
      %p92 = scmp.eq.s32.totalorder %s91, 0
      %s94 = sadd.s32 %s93, 1
      %s95 = scalar_select %p92, %s93, %s94
      %p98 = pneg %p92
      %p99 = scmp.eq.s32.totalorder %s15, 7
      %p100 = por %p98, %p99
      %p101 = scmp.ne.s32.totalorder %s93, %s96
      %p102 = scmp.eq.s32.totalorder %s15, 0
      %p103 = por %p101, %p102
      %p104 = scmp.ne.s32.totalorder %s93, %s96
      %p105 = scmp.eq.s32.totalorder %s20, 7
      %p106 = por %p104, %p105
      %p107 = scmp.ne.s32.totalorder %s96, %s97
      %p108 = scmp.eq.s32.totalorder %s20, 0
      %p109 = por %p107, %p108
      %p110 = scmp.ne.s32.totalorder %s96, %s97
      %p111 = scmp.eq.s32.totalorder %s21, 7
      %p112 = por %p110, %p111
      %p114 = scmp.ne.s32.totalorder %s97, %s113
      %p115 = scmp.eq.s32.totalorder %s21, 0
      %p116 = por %p114, %p115
      %p117 = scmp.le.s32.totalorder 1, %s15
      %p118 = scmp.lt.s32.totalorder %s15, 9
      %p119 = pnand %p117, %p118
      %p120 = pneg %p119
      // Predicated region
      $region9: #{tpu_custom_call.1} parent=5 // pred_check
        _
      $region10: #{tpu_custom_call.1} parent=5 // pred_check_branch
        %122 = sbr.rel (%p119) target = $region12
      $region11: #{tpu_custom_call.1} parent=5 // pred_region
        %s123 = ssub.s32 %s15, 1
        // Predicated region
        $region13: #{tpu_custom_call.1} parent=11 // pred_check
          %p124 = pneg %p62
        $region14: #{tpu_custom_call.1} parent=11 // pred_check_branch
          %126 = sbr.rel (%p124) target = $region16
        $region15: #{tpu_custom_call.1} parent=11 // pred_region
          _
        $region16: #{tpu_custom_call.1} parent=11 // pred_fallthru
          _
        // Predicated region
        $region17: #{tpu_custom_call.1} parent=11 // pred_check
          %p127 = pneg %p83
        $region18: #{tpu_custom_call.1} parent=11 // pred_check_branch
          %129 = sbr.rel (%p127) target = $region20
        $region19: #{tpu_custom_call.1} parent=11 // pred_region
          _
        $region20: #{tpu_custom_call.1} parent=11 // pred_fallthru
          _
      $region12: #{tpu_custom_call.1} parent=5 // pred_fallthru
        _
      %p130 = scmp.lt.s32.totalorder %s15, 8
      // Predicated region
      $region21: #{tpu_custom_call.1} parent=5 // pred_check
        %p131 = pneg %p130
      $region22: #{tpu_custom_call.1} parent=5 // pred_check_branch
        %133 = sbr.rel (%p131) target = $region24
      $region23: #{tpu_custom_call.1} parent=5 // pred_region
        // Predicated region
        $region25: #{tpu_custom_call.1} parent=23 // pred_check
          %p134 = pneg %p35
        $region26: #{tpu_custom_call.1} parent=23 // pred_check_branch
          %136 = sbr.rel (%p134) target = $region28
        $region27: #{tpu_custom_call.1} parent=23 // pred_region
          %s137 = sand.u32 %s25, 1
          %s138 = scalar_lea.sflag [#allocation3], %s137
          %s139 = sand.u32 %s25, 1
          %s140 = smul.addr %s139, 16
          %s141 = scalar_lea.vmem [#allocation2], %s140
          %s143 = ssub.s32 256, 256
          %144 = vsyncadd %s138, %s143
          %s145 = smul.addr %s15, 2
          %s146 = smul.addr %s145, 128
          %s147 = scalar_lea.hbm %s0, %s146
          %s148 = sshll.u32 %s141, 4
          %s149 = int_to_ptr.vmem [resolvable:$true] %s148
          %154 = dma.hbm_to_vmem [thread:$0]  %s147, 256, %s149, %s138, 128, 128, 8
        $region28: #{tpu_custom_call.1} parent=23 // pred_fallthru
          _
      $region24: #{tpu_custom_call.1} parent=5 // pred_fallthru
        _
      %p155 = scmp.le.s32.totalorder 1, %s15
      %p156 = scmp.lt.s32.totalorder %s15, 9
      %p157 = pnand %p155, %p156
      %p158 = pneg %p157
      // Predicated region
      $region29: #{tpu_custom_call.1} parent=5 // pred_check
        _
      $region30: #{tpu_custom_call.1} parent=5 // pred_check_branch
        %160 = sbr.rel (%p157) target = $region32
      $region31: #{tpu_custom_call.1} parent=5 // pred_region
        %s161 = ssub.s32 %s15, 1
        %s162 = sand.u32 %s28, 1
        %s163 = scalar_lea.sflag [#allocation3], %s162
        %s164 = sand.u32 %s28, 1
        %s165 = smul.addr %s164, 16
        %s166 = scalar_lea.vmem [#allocation2], %s165
        // Predicated region
        $region33: #{tpu_custom_call.1} parent=31 // pred_check
          %p167 = pneg %p41
        $region34: #{tpu_custom_call.1} parent=31 // pred_check_branch
          %169 = sbr.rel (%p167) target = $region36
        $region35: #{tpu_custom_call.1} parent=31 // pred_region
          %170 = dma.done %s163, 256
        $region36: #{tpu_custom_call.1} parent=31 // pred_fallthru
          _
        %s171 = sand.u32 %s28, 1
        %s172 = scalar_lea.sflag [#allocation3], %s171
        %s173 = sand.u32 %s28, 1
        %s174 = smul.addr %s173, 16
        %s175 = scalar_lea.vmem [#allocation2], %s174
        %p176 = pneg %p41
        %p177 = pneg %p38
        %p178 = pneg %p62
        %p179 = pneg %p59
        %p180 = pneg %p83
        %p181 = pneg %p80
        %p182 = pneg %p109
        %p183 = pneg %p106
        %s184 = sand.u32 %s96, 1
        %s185 = scalar_lea.sflag [#allocation4], %s184
        %s186 = sand.u32 %s96, 1
        %s187 = smul.addr %s186, 88
        %s188 = scalar_lea.vmem [#allocation5], %s187
        %v190 = vld [vmem:[%s1] sm:$0xf]
        %v191 = vld [vmem:[%s1 + $0x4] sm:$0xf]
        %v192 = vld [vmem:[%s1 + $0x8] sm:$0xf]
        %v193 = vld [vmem:[%s1 + $0xc] sm:$0xf]
        %v194 = vld [vmem:[%s1 + $0x10] sm:$0xf]
        %v195 = vld [vmem:[%s1 + $0x14] sm:$0xf]
        %v196 = vld [vmem:[%s1 + $0x18] sm:$0xf]
        %v197 = vld [vmem:[%s1 + $0x1c] sm:$0xf]
        %v198 = vld [vmem:[%s1 + $0x20] sm:$0xf]
        %v199 = vld [vmem:[%s1 + $0x24] sm:$0xf]
        %v200 = vld [vmem:[%s1 + $0x28] sm:$0xf]
        %v201 = vld [vmem:[%s2] sm:$0xf]
        %v202 = vld [vmem:[%s2 + $0x4] sm:$0xf]
        %v203 = vld [vmem:[%s166] sm:$0xff]
        %v204 = vld [vmem:[%s166 + $0x8] sm:$0xff]
        %v205 = vpack.c.bf16 %v204, %v203
        %v208 = vunpack.c.l.b16 %v201
        %v209 = vunpack.c.l.b16 %v202
        %v210 = vpack.c.b16 %v209, %v208
        %vm212 = vcmask 130048
        %v214 = vsel %vm212, %v205, 0
        %216 = vmatprep.subr.bf16.mxu0 0
        %217 = vmatpush1.bf16.msra.mxu0 %v210
        %218 = vmatprep.subr.bf16.mxu0 0
        %219 = vmatpush1.bf16.msra.mxu0 0
        %220 = vmatprep.subr.bf16.mxu0 0
        %221 = vmatpush1.bf16.msra.mxu0 0
        %222 = vmatprep.subr.bf16.mxu0 0
        %223 = vmatpush1.bf16.msra.mxu0 0
        %224 = vmatprep.subr.bf16.mxu0 0
        %225 = vmatpush1.bf16.msra.mxu0 0
        %226 = vmatprep.subr.bf16.mxu0 0
        %227 = vmatpush1.bf16.msra.mxu0 0
        %228 = vmatprep.subr.bf16.mxu0 0
        %229 = vmatpush1.bf16.msra.mxu0 0
        %230 = vmatprep.subr.bf16.mxu0 0
        %231 = vmatpush1.bf16.msra.mxu0 0
        %232 = vmatprep.subr.bf16.mxu0 0
        %233 = vmatpush1.bf16.msra.mxu0 0
        %234 = vmatprep.subr.bf16.mxu0 0
        %235 = vmatpush1.bf16.msra.mxu0 0
        %236 = vmatprep.subr.bf16.mxu0 0
        %237 = vmatpush1.bf16.msra.mxu0 0
        %238 = vmatprep.subr.bf16.mxu0 0
        %239 = vmatpush1.bf16.msra.mxu0 0
        %240 = vmatprep.subr.bf16.mxu0 0
        %241 = vmatpush1.bf16.msra.mxu0 0
        %242 = vmatprep.subr.bf16.mxu0 0
        %243 = vmatpush1.bf16.msra.mxu0 0
        %244 = vmatprep.subr.bf16.mxu0 0
        %245 = vmatpush1.bf16.msra.mxu0 0
        %246 = vmatprep.subr.bf16.mxu0 0
        %247 = vmatpush1.bf16.msra.mxu0 0
        %248 = vmatprep.mubr.bf16.mxu0 0
        %249 = vmatmul.mubr.bf16.gmra.mrb[0].mxu0 %v214
        %v250 = vpop.f32.mrb[0].mxu0
        %v251 = vadd.f32 0.0, %v250
        %v252 = vpop.f32.mrb[0].mxu0
        %v253 = vpop.f32.mrb[0].mxu0
        %v254 = vadd.f32 0.0, %v253
        %v255 = vpop.f32.mrb[0].mxu0
        %256 = vdwg.mxu0
        %v257 = vpack.c.bf16 %v254, %v251
        %v269 = vunpack.c.l.b16 %v190
        %v270 = vunpack.c.l.b16 %v191
        %v271 = vunpack.c.l.b16 %v192
        %v272 = vunpack.c.l.b16 %v193
        %v273 = vunpack.c.l.b16 %v194
        %v274 = vunpack.c.l.b16 %v195
        %v275 = vunpack.c.l.b16 %v196
        %v276 = vunpack.c.l.b16 %v197
        %v277 = vunpack.c.l.b16 %v198
        %v278 = vunpack.c.l.b16 %v199
        %v279 = vunpack.c.l.b16 %v200
        %v280 = vpack.c.b16 %v270, %v269
        %v281 = vpack.c.b16 %v272, %v271
        %v282 = vpack.c.b16 %v274, %v273
        %v283 = vpack.c.b16 %v276, %v275
        %v284 = vpack.c.b16 %v278, %v277
        %v285 = vpack.c.b16 %v279, %v279
        %v287 = vsel %vm212, %v280, 0
        %v290 = vsel %vm212, %v281, 0
        %v293 = vsel %vm212, %v282, 0
        %v296 = vsel %vm212, %v283, 0
        %v299 = vsel %vm212, %v284, 0
        %v302 = vsel %vm212, %v285, 0
        %304 = vmatprep.subr.bf16.mxu0 0
        %305 = vmatpush1.bf16.msra.mxu0 %v257
        %306 = vmatprep.subr.bf16.mxu0 0
        %307 = vmatpush1.bf16.msra.mxu0 0
        %308 = vmatprep.subr.bf16.mxu0 0
        %309 = vmatpush1.bf16.msra.mxu0 0
        %310 = vmatprep.subr.bf16.mxu0 0
        %311 = vmatpush1.bf16.msra.mxu0 0
        %312 = vmatprep.subr.bf16.mxu0 0
        %313 = vmatpush1.bf16.msra.mxu0 0
        %314 = vmatprep.subr.bf16.mxu0 0
        %315 = vmatpush1.bf16.msra.mxu0 0
        %316 = vmatprep.subr.bf16.mxu0 0
        %317 = vmatpush1.bf16.msra.mxu0 0
        %318 = vmatprep.subr.bf16.mxu0 0
        %319 = vmatpush1.bf16.msra.mxu0 0
        %320 = vmatprep.subr.bf16.mxu0 0
        %321 = vmatpush1.bf16.msra.mxu0 0
        %322 = vmatprep.subr.bf16.mxu0 0
        %323 = vmatpush1.bf16.msra.mxu0 0
        %324 = vmatprep.subr.bf16.mxu0 0
        %325 = vmatpush1.bf16.msra.mxu0 0
        %326 = vmatprep.subr.bf16.mxu0 0
        %327 = vmatpush1.bf16.msra.mxu0 0
        %328 = vmatprep.subr.bf16.mxu0 0
        %329 = vmatpush1.bf16.msra.mxu0 0
        %330 = vmatprep.subr.bf16.mxu0 0
        %331 = vmatpush1.bf16.msra.mxu0 0
        %332 = vmatprep.subr.bf16.mxu0 0
        %333 = vmatpush1.bf16.msra.mxu0 0
        %334 = vmatprep.subr.bf16.mxu0 0
        %335 = vmatpush1.bf16.msra.mxu0 0
        %336 = vmatprep.mubr.bf16.mxu0 0
        %337 = vmatmul.mubr.bf16.gmra.mrb[0].mxu0 %v287
        %v338 = vpop.f32.mrb[0].mxu0
        %v339 = vadd.f32 0.0, %v338
        %v340 = vpop.f32.mrb[0].mxu0
        %v341 = vpop.f32.mrb[0].mxu0
        %v342 = vadd.f32 0.0, %v341
        %v343 = vpop.f32.mrb[0].mxu0
        %344 = vmatprep.mubr.bf16.mxu0 0
        %345 = vmatmul.mubr.bf16.gmra.mrb[0].mxu0 %v290
        %v346 = vpop.f32.mrb[0].mxu0
        %v347 = vadd.f32 0.0, %v346
        %v348 = vpop.f32.mrb[0].mxu0
        %v349 = vpop.f32.mrb[0].mxu0
        %v350 = vadd.f32 0.0, %v349
        %v351 = vpop.f32.mrb[0].mxu0
        %352 = vmatprep.mubr.bf16.mxu0 0
        %353 = vmatmul.mubr.bf16.gmra.mrb[0].mxu0 %v293
        %v354 = vpop.f32.mrb[0].mxu0
        %v355 = vadd.f32 0.0, %v354
        %v356 = vpop.f32.mrb[0].mxu0
        %v357 = vpop.f32.mrb[0].mxu0
        %v358 = vadd.f32 0.0, %v357
        %v359 = vpop.f32.mrb[0].mxu0
        %360 = vmatprep.mubr.bf16.mxu0 0
        %361 = vmatmul.mubr.bf16.gmra.mrb[0].mxu0 %v296
        %v362 = vpop.f32.mrb[0].mxu0
        %v363 = vadd.f32 0.0, %v362
        %v364 = vpop.f32.mrb[0].mxu0
        %v365 = vpop.f32.mrb[0].mxu0
        %v366 = vadd.f32 0.0, %v365
        %v367 = vpop.f32.mrb[0].mxu0
        %368 = vmatprep.mubr.bf16.mxu0 0
        %369 = vmatmul.mubr.bf16.gmra.mrb[0].mxu0 %v299
        %v370 = vpop.f32.mrb[0].mxu0
        %v371 = vadd.f32 0.0, %v370
        %v372 = vpop.f32.mrb[0].mxu0
        %v373 = vpop.f32.mrb[0].mxu0
        %v374 = vadd.f32 0.0, %v373
        %v375 = vpop.f32.mrb[0].mxu0
        %376 = vmatprep.mubr.bf16.mxu0 0
        %377 = vmatmul.mubr.bf16.gmra.mrb[0].mxu0 %v302
        %v378 = vpop.f32.mrb[0].mxu0
        %v379 = vadd.f32 0.0, %v378
        %v380 = vpop.f32.mrb[0].mxu0
        %v381 = vpop.f32.mrb[0].mxu0
        %v382 = vpop.f32.mrb[0].mxu0
        %383 = vdwg.mxu0
        %vm384 = vcmask 719872
        %385 = vst.msk [vmem:[%s188] sm:$0xff] %vm384, %v339
        %386 = vst.msk [vmem:[%s188 + $0x8] sm:$0xff] %vm384, %v342
        %387 = vst.msk [vmem:[%s188 + $0x10] sm:$0xff] %vm384, %v347
        %388 = vst.msk [vmem:[%s188 + $0x18] sm:$0xff] %vm384, %v350
        %389 = vst.msk [vmem:[%s188 + $0x20] sm:$0xff] %vm384, %v355
        %390 = vst.msk [vmem:[%s188 + $0x28] sm:$0xff] %vm384, %v358
        %391 = vst.msk [vmem:[%s188 + $0x30] sm:$0xff] %vm384, %v363
        %392 = vst.msk [vmem:[%s188 + $0x38] sm:$0xff] %vm384, %v366
        %393 = vst.msk [vmem:[%s188 + $0x40] sm:$0xff] %vm384, %v371
        %394 = vst.msk [vmem:[%s188 + $0x48] sm:$0xff] %vm384, %v374
        %395 = vst.msk [vmem:[%s188 + $0x50] sm:$0xff] %vm384, %v379
        %s396 = sand.u32 %s96, 1
        %s397 = scalar_lea.sflag [#allocation4], %s396
        %s398 = sand.u32 %s96, 1
        %s399 = smul.addr %s398, 88
        %s400 = scalar_lea.vmem [#allocation5], %s399
        // Predicated region
        $region37: #{tpu_custom_call.1} parent=31 // pred_check
          %p401 = pneg %p106
        $region38: #{tpu_custom_call.1} parent=31 // pred_check_branch
          %403 = sbr.rel (%p401) target = $region40
        $region39: #{tpu_custom_call.1} parent=31 // pred_region
          %s405 = ssub.s32 1408, 1408
          %406 = vsyncadd %s397, %s405
          %s407 = smul.addr %s20, 11
          %s408 = smul.addr %s407, 128
          %s409 = scalar_lea.hbm %s3, %s408
          %s410 = sshll.u32 %s400, 4
          %s411 = int_to_ptr.vmem [resolvable:$true] %s410
          %416 = dma.vmem_to_hbm [thread:$0]  %s411, 1408, %s409, %s397, 128, 128, 8
        $region40: #{tpu_custom_call.1} parent=31 // pred_fallthru
          _
      $region32: #{tpu_custom_call.1} parent=5 // pred_fallthru
        _
      %p417 = scmp.le.s32.totalorder 2, %s15
      // Predicated region
      $region41: #{tpu_custom_call.1} parent=5 // pred_check
        %p418 = pneg %p417
      $region42: #{tpu_custom_call.1} parent=5 // pred_check_branch
        %420 = sbr.rel (%p418) target = $region44
      $region43: #{tpu_custom_call.1} parent=5 // pred_region
        %s421 = ssub.s32 %s15, 2
        // Predicated region
        $region45: #{tpu_custom_call.1} parent=43 // pred_check
          %p422 = pneg %p112
        $region46: #{tpu_custom_call.1} parent=43 // pred_check_branch
          %424 = sbr.rel (%p422) target = $region48
        $region47: #{tpu_custom_call.1} parent=43 // pred_region
          %s425 = sand.u32 %s97, 1
          %s426 = scalar_lea.sflag [#allocation4], %s425
          %s427 = sand.u32 %s97, 1
          %s428 = smul.addr %s427, 88
          %s429 = scalar_lea.vmem [#allocation5], %s428
          %430 = dma.done %s426, 1408
        $region48: #{tpu_custom_call.1} parent=43 // pred_fallthru
          _
      $region44: #{tpu_custom_call.1} parent=5 // pred_fallthru
        _
    $region6: #{tpu_custom_call.1} parent=1 // loop_footer
      %s19 = sadd.s32 1, %s15
    $region7: #{tpu_custom_call.1} parent=1 // loop_footer_branch
      %14 = sbr.rel target = $region3
    $region8: #{tpu_custom_call.1} parent=1 // loop_exit
      _
    %431 = vsyncpa [#allocation3], 1
    %s432 = scalar_lea.sflag [#allocation3], 1
    %433 = vsyncpa %s432, 1
    %434 = vsyncpa [#allocation4], 1
    %s435 = scalar_lea.sflag [#allocation4], 1
    %436 = vsyncpa %s435, 1

</llo_original>
